<compile_context>
chip_gen: v6e
topology: v6e:2x2x1
jax: 0.10.0
libtpu: 0.0.40
codegen_flags: <defaults>
</compile_context>

<pallas_src>
import functools

import jax
import jax.numpy as jnp
from jax.experimental import pallas as pl
from jax.experimental.pallas import tpu as pltpu


# ---------------------------------------------------------------------------
# Helpers
# ---------------------------------------------------------------------------

def tokenizer_seq_len(seq_len, cfg):
    t_conv = (seq_len + 2 * cfg["padding"] - cfg["kernel_size"]) // cfg["stride"] + 1
    t_pool = (t_conv + 2 * cfg["pool_pad"] - cfg["pool_k"]) // cfg["pool_s"] + 1
    return t_conv, t_pool


def sinusoidal_embedding(n, dim):
    # TODO(synk): reference builds this with padding_idx=True (prepended zero
    # row); we use the standard length-n sin/cos table matching the token count.
    p = jnp.arange(n, dtype=jnp.float32)[:, None]
    i = jnp.arange(dim, dtype=jnp.float32)[None, :]
    angle = p / jnp.power(10000.0, 2.0 * jnp.floor(i / 2.0) / dim)
    even = (jnp.arange(dim) % 2) == 0
    pe = jnp.where(even[None, :], jnp.sin(angle), jnp.cos(angle))
    return pe[None].astype(jnp.float32)                      # (1, n, dim)


def _mxu(a, w):
    # bf16 operands, f32 accumulation: peak MXU path on v6e/v7x, fine on v5e.
    return jnp.dot(a.astype(jnp.bfloat16), w.astype(jnp.bfloat16),
                   preferred_element_type=jnp.float32)


def _layernorm(x, g, b, eps):
    mu = jnp.mean(x, axis=-1, keepdims=True)
    xc = x - mu
    var = jnp.mean(xc * xc, axis=-1, keepdims=True)
    return xc * jax.lax.rsqrt(var + eps) * g + b


def _softmax_rows(s):
    # Softmax over the last axis; reciprocal goes to the EUP slot.
    s = s - jnp.max(s, axis=-1, keepdims=True)
    p = jnp.exp(s)
    return p * pl.reciprocal(jnp.sum(p, axis=-1, keepdims=True), approx=True)


# ---------------------------------------------------------------------------
# Fused Pallas kernel: one grid step == one batch element, full forward.
# ---------------------------------------------------------------------------

def _text_cct_kernel(
        xp_ref, conv_w_ref, pos_ref,
        ln0_g_ref, ln0_b_ref, w_qkv_ref, w_proj_ref, b_proj_ref,
        ln1_g_ref, ln1_b_ref, w1_ref, b1_ref, w2_ref, b2_ref,
        norm_g_ref, norm_b_ref, pool_w_ref, pool_b_ref, fc_w_ref, fc_b_ref,
        out_ref, *,
        num_layers, num_heads, kernel_size, t_conv, t_pool,
        pool_k, pool_s, pool_pad, eps):
    d = pos_ref.shape[-1]
    dh = d // num_heads
    scale = dh ** -0.5
    ew = xp_ref.shape[-1]

    xp = xp_ref[0]                                           # (S + 2*pad, Ew) f32

    # --- TextTokenizer: Conv2d(1, D, (k, Ew), pad=(p,0), bias=False) + ReLU --
    # k shifted (t_conv, Ew) @ (Ew, D) matmuls: im2col never touches HBM.
    y = _mxu(xp[0:t_conv, :], conv_w_ref[0:ew, :])
    for dk in range(1, kernel_size):
        y = y + _mxu(xp[dk:dk + t_conv, :], conv_w_ref[dk * ew:(dk + 1) * ew, :])
    y = jnp.maximum(y, 0.0)                                  # (t_conv, D), >= 0

    # --- MaxPool2d((pool_k,1), stride (pool_s,1), pad (pool_pad,0)) ----------
    # Vectorized as pool_k row-selection matmuls + full-width maxima.  Taps in
    # the padding select nothing (a zero row), which is exact because y >= 0
    # after ReLU (PyTorch's max-pool padding is effectively -inf).
    rows = jax.lax.broadcasted_iota(jnp.int32, (t_pool, t_conv), 0)
    cols = jax.lax.broadcasted_iota(jnp.int32, (t_pool, t_conv), 1)
    x = None
    for j in range(pool_k):
        sel = (cols == rows * pool_s - pool_pad + j).astype(jnp.float32)
        cand = jnp.dot(sel, y, preferred_element_type=jnp.float32)   # (t_pool, D)
        x = cand if x is None else jnp.maximum(x, cand)

    # --- MaskedTransformerClassifier (seq_pool, sine pos-emb, eval mode) -----
    x = x + pos_ref[0]                                       # (n, D)
    for l in range(num_layers):
        # Pre-norm MHSA; qkv Linear has bias=False.  Heads are static lane
        # slices of the (n, 3D) activation; the output projection is summed
        # per head, so no reshape/transpose relayouts are needed anywhere.
        yln = _layernorm(x, ln0_g_ref[l], ln0_b_ref[l], eps)
        qkv = _mxu(yln, w_qkv_ref[l])                        # (n, 3D) f32
        w_proj = w_proj_ref[l]                               # (D, D) bf16
        attn = None
        for hh in range(num_heads):
            qh = qkv[:, hh * dh:(hh + 1) * dh]
            kh = qkv[:, d + hh * dh:d + (hh + 1) * dh]
            vh = qkv[:, 2 * d + hh * dh:2 * d + (hh + 1) * dh]
            s = jnp.dot(qh, kh.T, preferred_element_type=jnp.float32) * scale
            p = _softmax_rows(s)                             # (n, n) f32
            oh = jnp.dot(p, vh, preferred_element_type=jnp.float32)
            contrib = _mxu(oh, w_proj[hh * dh:(hh + 1) * dh, :])
            attn = contrib if attn is None else attn + contrib
        x = x + attn + b_proj_ref[l]                         # attention residual

        # norm1, then MLP residual around the normed value.
        x = _layernorm(x, ln1_g_ref[l], ln1_b_ref[l], eps)
        # TODO(synk): PyTorch F.gelu is exact (erf); tanh approximation used here.
        hmid = jax.nn.gelu(_mxu(x, w1_ref[l]) + b1_ref[l], approximate=True)
        x = x + _mxu(hmid, w2_ref[l]) + b2_ref[l]

    # --- final LayerNorm + seq-pool + classifier head -------------------------
    xf = _layernorm(x, norm_g_ref[...], norm_b_ref[...], eps)
    logits = jnp.dot(xf, pool_w_ref[...], preferred_element_type=jnp.float32)
    logits = logits + pool_b_ref[...]                        # (n, 1)
    logits = logits - jnp.max(logits, axis=0, keepdims=True)
    pr = jnp.exp(logits)
    pr = pr * pl.reciprocal(jnp.sum(pr, axis=0, keepdims=True), approx=True)
    pooled = jnp.sum(pr * xf, axis=0, keepdims=True)         # (1, D)
    out = _mxu(pooled, fc_w_ref[...]) + fc_b_ref[...]        # (1, NC_pad) lane-dense
    out_ref[0] = out.astype(out_ref.dtype)


_WEIGHT_KEYS = ("conv_w", "pos_emb", "ln0_g", "ln0_b", "w_qkv", "w_proj",
                "b_proj", "ln1_g", "ln1_b", "w1", "b1", "w2", "b2",
                "norm_g", "norm_b", "pool_w", "pool_b", "fc_w", "fc_b")


def text_cct_forward(params, tokens, cfg):
    b, s = tokens.shape
    pad = cfg["padding"]
    t_conv, t_pool = tokenizer_seq_len(s, cfg)
    nc_pad = params["fc_w"].shape[-1]

    # Embedding lookup (gather) + conv zero-padding over time: XLA glue.
    x = jnp.take(params["embed"], tokens, axis=0)            # (B, S, Ew)
    xp = jnp.pad(x, ((0, 0), (pad, pad), (0, 0)))            # (B, S + 2*pad, Ew)

    kernel = functools.partial(
        _text_cct_kernel,
        num_layers=cfg["num_layers"], num_heads=cfg["num_heads"],
        kernel_size=cfg["kernel_size"], t_conv=t_conv, t_pool=t_pool,
        pool_k=cfg["pool_k"], pool_s=cfg["pool_s"], pool_pad=cfg["pool_pad"],
        eps=1e-5)

    weights = [params[k] for k in _WEIGHT_KEYS]

    def resident(a):
        # Full-array block, same block for every grid step -> DMA'd once and
        # resident in VMEM across the whole grid.
        nd = a.ndim
        return pl.BlockSpec(a.shape, lambda i: (0,) * nd)

    out = pl.pallas_call(
        kernel,
        out_shape=jax.ShapeDtypeStruct((b, 1, nc_pad), jnp.float32),
        grid=(b,),
        in_specs=([pl.BlockSpec((1,) + xp.shape[1:], lambda i: (i, 0, 0))]
                  + [resident(w) for w in weights]),
        out_specs=pl.BlockSpec((1, 1, nc_pad), lambda i: (i, 0, 0)),
        compiler_params=pltpu.CompilerParams(
            dimension_semantics=("parallel",)),   # batch across TCs (v7x: 2 cores)
    )(xp, *weights)
    return out[:, 0, :cfg["num_classes"]]


# ---------------------------------------------------------------------------
# Parameter init (weights for MXU GEMMs stored in bf16; biases / LN in f32).
# ---------------------------------------------------------------------------

def init_params(key, cfg):
    d = cfg["embedding_dim"]
    ew = cfg["word_embedding_dim"]
    ff = int(d * cfg["mlp_ratio"])
    k = cfg["kernel_size"]
    L = cfg["num_layers"]
    nc = cfg["num_classes"]
    nc_pad = ((nc + 127) // 128) * 128                       # lane-dense fc output
    keys = iter(jax.random.split(key, 16))

    def nrm(shape, std=0.02, dtype=jnp.float32):
        return (std * jax.random.normal(next(keys), shape, jnp.float32)).astype(dtype)

    embed = jax.random.normal(next(keys), (cfg["vocab_size"], ew), dtype=jnp.float32)
    embed = embed.at[cfg["padding_idx"]].set(0.0)

    fc_w = jnp.pad(nrm((d, nc)), ((0, 0), (0, nc_pad - nc))).astype(jnp.bfloat16)

    return {
        "embed": embed,
        # Conv2d(1, d, (k, ew), bias=False) flattened to (k*ew, d).
        "conv_w": nrm((k * ew, d), std=(2.0 / (k * ew)) ** 0.5, dtype=jnp.bfloat16),
        "pos_emb": sinusoidal_embedding(cfg["n_tokens"], d),
        "ln0_g": jnp.ones((L, d), jnp.float32),
        "ln0_b": jnp.zeros((L, d), jnp.float32),
        "w_qkv": nrm((L, d, 3 * d), dtype=jnp.bfloat16),     # qkv Linear, bias=False
        "w_proj": nrm((L, d, d), dtype=jnp.bfloat16),
        "b_proj": jnp.zeros((L, d), jnp.float32),
        "ln1_g": jnp.ones((L, d), jnp.float32),
        "ln1_b": jnp.zeros((L, d), jnp.float32),
        "w1": nrm((L, d, ff), dtype=jnp.bfloat16),
        "b1": jnp.zeros((L, ff), jnp.float32),
        "w2": nrm((L, ff, d), dtype=jnp.bfloat16),
        "b2": jnp.zeros((L, d), jnp.float32),
        "norm_g": jnp.ones((1, d), jnp.float32),
        "norm_b": jnp.zeros((1, d), jnp.float32),
        "pool_w": nrm((d, 1)),                               # Linear(d,1).weight.T
        "pool_b": jnp.zeros((1, 1), jnp.float32),
        "fc_w": fc_w,                                        # (d, nc_pad), zero-padded
        "fc_b": jnp.zeros((1, nc_pad), jnp.float32),
    }


# ---------------------------------------------------------------------------
# Pure-JAX reference (same approximations except full-precision math); used
# only as a numerical sanity check in __main__.
# ---------------------------------------------------------------------------

def text_cct_reference(params, tokens, cfg):
    d = cfg["embedding_dim"]
    h = cfg["num_heads"]
    dh = d // h
    pad = cfg["padding"]
    k = cfg["kernel_size"]
    t_conv, t_pool = tokenizer_seq_len(tokens.shape[1], cfg)
    f32 = lambda a: a.astype(jnp.float32)

    x = jnp.take(params["embed"], tokens, axis=0)
    xp = jnp.pad(x, ((0, 0), (pad, pad), (0, 0)))
    cw = f32(params["conv_w"])
    ew = x.shape[-1]
    y = sum(jnp.einsum("bte,ec->btc", xp[:, dk:dk + t_conv, :],
                       cw[dk * ew:(dk + 1) * ew]) for dk in range(k))
    y = jnp.maximum(y, 0.0)
    rows = []
    for t in range(t_pool):
        start = t * cfg["pool_s"] - cfg["pool_pad"]
        taps = [j for j in range(start, start + cfg["pool_k"]) if 0 <= j < t_conv]
        r = y[:, taps[0]]
        for j in taps[1:]:
            r = jnp.maximum(r, y[:, j])
        rows.append(r)
    x = jnp.stack(rows, axis=1) + params["pos_emb"]

    def ln(v, g, b):
        mu = v.mean(-1, keepdims=True)
        var = ((v - mu) ** 2).mean(-1, keepdims=True)
        return (v - mu) * jax.lax.rsqrt(var + 1e-5) * g + b

    bsz, n, _ = x.shape
    for l in range(cfg["num_layers"]):
        yln = ln(x, params["ln0_g"][l], params["ln0_b"][l])
        qkv = yln @ f32(params["w_qkv"][l])
        q, kk, v = jnp.split(qkv, 3, axis=-1)
        split_heads = lambda a: a.reshape(bsz, n, h, dh).transpose(0, 2, 1, 3)
        q, kk, v = split_heads(q), split_heads(kk), split_heads(v)
        s = jnp.einsum("bhqd,bhkd->bhqk", q, kk) * dh ** -0.5
        p = jax.nn.softmax(s, axis=-1)
        o = jnp.einsum("bhqk,bhkd->bhqd", p, v).transpose(0, 2, 1, 3).reshape(bsz, n, d)
        x = x + o @ f32(params["w_proj"][l]) + params["b_proj"][l]
        x = ln(x, params["ln1_g"][l], params["ln1_b"][l])
        hmid = jax.nn.gelu(x @ f32(params["w1"][l]) + params["b1"][l],
                           approximate=True)
        x = x + hmid @ f32(params["w2"][l]) + params["b2"][l]

    xf = ln(x, params["norm_g"], params["norm_b"])
    logits = jnp.einsum("bnd,do->bno", xf, params["pool_w"])[..., 0]
    logits = logits + params["pool_b"][0, 0]
    p = jax.nn.softmax(logits, axis=-1)
    pooled = jnp.einsum("bn,bnd->bd", p, xf)
    out = pooled @ f32(params["fc_w"]) + params["fc_b"]
    return out[:, :cfg["num_classes"]]


if __name__ == "__main__":
    cfg = dict(
        vocab_size=100, padding_idx=1,
        seq_len=8, word_embedding_dim=32, embedding_dim=32,
        kernel_size=2, stride=1, padding=1,
        pool_k=2, pool_s=2, pool_pad=1,
        num_layers=2, num_heads=2, mlp_ratio=2.0, num_classes=10,
    )
    assert cfg["stride"] == 1, "shifted-matmul conv assumes stride 1 (module default)"
    _, n_tok = tokenizer_seq_len(cfg["seq_len"], cfg)
    cfg["n_tokens"] = n_tok                                  # tokenizer.seq_len(...)

    key = jax.random.PRNGKey(0)
    kp, kt = jax.random.split(key)
    params = init_params(kp, cfg)
    tokens = jax.random.randint(kt, (2, cfg["seq_len"]), 0, cfg["vocab_size"],
                                dtype=jnp.int32)

    fwd = jax.jit(functools.partial(text_cct_forward, cfg=cfg))
    out = fwd(params, tokens)
    jax.block_until_ready(out)
    assert out.shape == (2, cfg["num_classes"]) and out.dtype == jnp.float32

    ref = text_cct_reference(params, tokens, cfg)
    err = float(jnp.max(jnp.abs(out - ref)))
    assert err < 3e-2, f"kernel vs. reference mismatch: max abs err = {err}"
    print("KERNEL_OK")
</pallas_src>

<mosaic_0001>
module attributes {stable_mosaic.version = 11 : i64} {
  func.func @_text_cct_kernel(%arg0: i32, %arg1: memref<1x10x32xf32, #tpu.memory_space<vmem>>, %arg2: memref<64x32xbf16, #tpu.memory_space<vmem>>, %arg3: memref<1x5x32xf32, #tpu.memory_space<vmem>>, %arg4: memref<2x32xf32, #tpu.memory_space<vmem>>, %arg5: memref<2x32xf32, #tpu.memory_space<vmem>>, %arg6: memref<2x32x96xbf16, #tpu.memory_space<vmem>>, %arg7: memref<2x32x32xbf16, #tpu.memory_space<vmem>>, %arg8: memref<2x32xf32, #tpu.memory_space<vmem>>, %arg9: memref<2x32xf32, #tpu.memory_space<vmem>>, %arg10: memref<2x32xf32, #tpu.memory_space<vmem>>, %arg11: memref<2x32x64xbf16, #tpu.memory_space<vmem>>, %arg12: memref<2x64xf32, #tpu.memory_space<vmem>>, %arg13: memref<2x64x32xbf16, #tpu.memory_space<vmem>>, %arg14: memref<2x32xf32, #tpu.memory_space<vmem>>, %arg15: memref<1x32xf32, #tpu.memory_space<vmem>>, %arg16: memref<1x32xf32, #tpu.memory_space<vmem>>, %arg17: memref<32x1xf32, #tpu.memory_space<vmem>>, %arg18: memref<1x1xf32, #tpu.memory_space<vmem>>, %arg19: memref<32x128xbf16, #tpu.memory_space<vmem>>, %arg20: memref<1x128xf32, #tpu.memory_space<vmem>>, %arg21: memref<1x1x128xf32, #tpu.memory_space<vmem>>) attributes {dimension_semantics = [#tpu.dimension_semantics<parallel>], iteration_bounds = array<i64: 2>, scalar_prefetch = 0 : i64, scratch_operands = 0 : i64, tpu.core_type = #tpu.core_type<tc>, window_params = [{transform_indices = @transform_0, window_bounds = array<i64: 1, 10, 32>}, {pipeline_mode = #tpu.pipeline_mode<synchronous>, transform_indices = @transform_1, window_bounds = array<i64: 64, 32>}, {pipeline_mode = #tpu.pipeline_mode<synchronous>, transform_indices = @transform_2, window_bounds = array<i64: 1, 5, 32>}, {pipeline_mode = #tpu.pipeline_mode<synchronous>, transform_indices = @transform_3, window_bounds = array<i64: 2, 32>}, {pipeline_mode = #tpu.pipeline_mode<synchronous>, transform_indices = @transform_4, window_bounds = array<i64: 2, 32>}, {pipeline_mode = #tpu.pipeline_mode<synchronous>, transform_indices = @transform_5, window_bounds = array<i64: 2, 32, 96>}, {pipeline_mode = #tpu.pipeline_mode<synchronous>, transform_indices = @transform_6, window_bounds = array<i64: 2, 32, 32>}, {pipeline_mode = #tpu.pipeline_mode<synchronous>, transform_indices = @transform_7, window_bounds = array<i64: 2, 32>}, {pipeline_mode = #tpu.pipeline_mode<synchronous>, transform_indices = @transform_8, window_bounds = array<i64: 2, 32>}, {pipeline_mode = #tpu.pipeline_mode<synchronous>, transform_indices = @transform_9, window_bounds = array<i64: 2, 32>}, {pipeline_mode = #tpu.pipeline_mode<synchronous>, transform_indices = @transform_10, window_bounds = array<i64: 2, 32, 64>}, {pipeline_mode = #tpu.pipeline_mode<synchronous>, transform_indices = @transform_11, window_bounds = array<i64: 2, 64>}, {pipeline_mode = #tpu.pipeline_mode<synchronous>, transform_indices = @transform_12, window_bounds = array<i64: 2, 64, 32>}, {pipeline_mode = #tpu.pipeline_mode<synchronous>, transform_indices = @transform_13, window_bounds = array<i64: 2, 32>}, {pipeline_mode = #tpu.pipeline_mode<synchronous>, transform_indices = @transform_14, window_bounds = array<i64: 1, 32>}, {pipeline_mode = #tpu.pipeline_mode<synchronous>, transform_indices = @transform_15, window_bounds = array<i64: 1, 32>}, {pipeline_mode = #tpu.pipeline_mode<synchronous>, transform_indices = @transform_16, window_bounds = array<i64: 32, 1>}, {pipeline_mode = #tpu.pipeline_mode<synchronous>, transform_indices = @transform_17, window_bounds = array<i64: 1, 1>}, {pipeline_mode = #tpu.pipeline_mode<synchronous>, transform_indices = @transform_18, window_bounds = array<i64: 32, 128>}, {pipeline_mode = #tpu.pipeline_mode<synchronous>, transform_indices = @transform_19, window_bounds = array<i64: 1, 128>}, {transform_indices = @transform_20, window_bounds = array<i64: 1, 1, 128>}]} {
    %c0 = arith.constant 0 : index
    %c0_0 = arith.constant 0 : index
    %c0_1 = arith.constant 0 : index
    %0 = vector.load %arg1[%c0, %c0_0, %c0_1] : memref<1x10x32xf32, #tpu.memory_space<vmem>>, vector<1x10x32xf32>
    %1 = vector.shape_cast %0 : vector<1x10x32xf32> to vector<10x32xf32>
    %2 = vector.extract_strided_slice %1 {offsets = [0, 0], sizes = [9, 32], strides = [1, 1]} : vector<10x32xf32> to vector<9x32xf32>
    %c0_2 = arith.constant 0 : index
    %c0_3 = arith.constant 0 : index
    %3 = vector.load %arg2[%c0_2, %c0_3] : memref<64x32xbf16, #tpu.memory_space<vmem>>, vector<32x32xbf16>
    %4 = arith.truncf %2 : vector<9x32xf32> to vector<9x32xbf16>
    %cst = arith.constant dense<0.000000e+00> : vector<9x32xf32>
    %5 = tpu.matmul %4, %3, %cst {dimension_numbers = #tpu.dot_dimension_numbers<[1], [0], [0], [1], [0, 0, 1, 1], [], []>} : vector<9x32xbf16>, vector<32x32xbf16>, vector<9x32xf32> -> vector<9x32xf32>
    %6 = vector.extract_strided_slice %1 {offsets = [1, 0], sizes = [9, 32], strides = [1, 1]} : vector<10x32xf32> to vector<9x32xf32>
    %c32 = arith.constant 32 : index
    %c0_4 = arith.constant 0 : index
    %7 = vector.load %arg2[%c32, %c0_4] : memref<64x32xbf16, #tpu.memory_space<vmem>>, vector<32x32xbf16>
    %8 = arith.truncf %6 : vector<9x32xf32> to vector<9x32xbf16>
    %cst_5 = arith.constant dense<0.000000e+00> : vector<9x32xf32>
    %9 = tpu.matmul %8, %7, %cst_5 {dimension_numbers = #tpu.dot_dimension_numbers<[1], [0], [0], [1], [0, 0, 1, 1], [], []>} : vector<9x32xbf16>, vector<32x32xbf16>, vector<9x32xf32> -> vector<9x32xf32>
    %10 = arith.addf %5, %9 : vector<9x32xf32>
    %cst_6 = arith.constant 0.000000e+00 : f32
    %11 = vector.broadcast %cst_6 : f32 to vector<9x32xf32>
    %12 = arith.maximumf %10, %11 : vector<9x32xf32>
    %13 = tpu.iota {dimensions = array<i32: 0>} : vector<5x9xi32>
    %14 = tpu.iota {dimensions = array<i32: 1>} : vector<5x9xi32>
    %c2_i32 = arith.constant 2 : i32
    %15 = vector.broadcast %c2_i32 : i32 to vector<5x9xi32>
    %16 = arith.muli %13, %15 : vector<5x9xi32>
    %c1_i32 = arith.constant 1 : i32
    %17 = vector.broadcast %c1_i32 : i32 to vector<5x9xi32>
    %18 = arith.subi %16, %17 : vector<5x9xi32>
    %c0_i32 = arith.constant 0 : i32
    %19 = vector.broadcast %c0_i32 : i32 to vector<5x9xi32>
    %20 = arith.addi %18, %19 : vector<5x9xi32>
    %21 = arith.cmpi eq, %14, %20 : vector<5x9xi32>
    %22 = arith.extui %21 : vector<5x9xi1> to vector<5x9xi32>
    %23 = arith.sitofp %22 : vector<5x9xi32> to vector<5x9xf32>
    %cst_7 = arith.constant dense<0.000000e+00> : vector<5x32xf32>
    %24 = tpu.matmul %23, %12, %cst_7 {dimension_numbers = #tpu.dot_dimension_numbers<[1], [0], [0], [1], [0, 0, 1, 1], [], []>} : vector<5x9xf32>, vector<9x32xf32>, vector<5x32xf32> -> vector<5x32xf32>
    %c2_i32_8 = arith.constant 2 : i32
    %25 = vector.broadcast %c2_i32_8 : i32 to vector<5x9xi32>
    %26 = arith.muli %13, %25 : vector<5x9xi32>
    %c1_i32_9 = arith.constant 1 : i32
    %27 = vector.broadcast %c1_i32_9 : i32 to vector<5x9xi32>
    %28 = arith.subi %26, %27 : vector<5x9xi32>
    %c1_i32_10 = arith.constant 1 : i32
    %29 = vector.broadcast %c1_i32_10 : i32 to vector<5x9xi32>
    %30 = arith.addi %28, %29 : vector<5x9xi32>
    %31 = arith.cmpi eq, %14, %30 : vector<5x9xi32>
    %32 = arith.extui %31 : vector<5x9xi1> to vector<5x9xi32>
    %33 = arith.sitofp %32 : vector<5x9xi32> to vector<5x9xf32>
    %cst_11 = arith.constant dense<0.000000e+00> : vector<5x32xf32>
    %34 = tpu.matmul %33, %12, %cst_11 {dimension_numbers = #tpu.dot_dimension_numbers<[1], [0], [0], [1], [0, 0, 1, 1], [], []>} : vector<5x9xf32>, vector<9x32xf32>, vector<5x32xf32> -> vector<5x32xf32>
    %35 = arith.maximumf %24, %34 : vector<5x32xf32>
    %c0_12 = arith.constant 0 : index
    %c0_13 = arith.constant 0 : index
    %c0_14 = arith.constant 0 : index
    %36 = vector.load %arg3[%c0_12, %c0_13, %c0_14] : memref<1x5x32xf32, #tpu.memory_space<vmem>>, vector<1x5x32xf32>
    %37 = vector.shape_cast %36 : vector<1x5x32xf32> to vector<5x32xf32>
    %38 = arith.addf %35, %37 : vector<5x32xf32>
    %c0_15 = arith.constant 0 : index
    %c0_16 = arith.constant 0 : index
    %39 = vector.load %arg4[%c0_15, %c0_16] : memref<2x32xf32, #tpu.memory_space<vmem>>, vector<1x32xf32>
    %40 = vector.shape_cast %39 : vector<1x32xf32> to vector<32xf32>
    %c0_17 = arith.constant 0 : index
    %c0_18 = arith.constant 0 : index
    %41 = vector.load %arg5[%c0_17, %c0_18] : memref<2x32xf32, #tpu.memory_space<vmem>>, vector<1x32xf32>
    %42 = vector.shape_cast %41 : vector<1x32xf32> to vector<32xf32>
    %cst_19 = arith.constant dense<0.000000e+00> : vector<5xf32>
    %43 = vector.multi_reduction <add>, %38, %cst_19 [1] : vector<5x32xf32> to vector<5xf32>
    %44 = vector.shape_cast %43 : vector<5xf32> to vector<5x1xf32>
    %cst_20 = arith.constant 3.200000e+01 : f32
    %45 = vector.broadcast %cst_20 : f32 to vector<5x1xf32>
    %46 = arith.divf %44, %45 : vector<5x1xf32>
    %47 = vector.broadcast %46 : vector<5x1xf32> to vector<5x32xf32>
    %48 = arith.subf %38, %47 : vector<5x32xf32>
    %49 = arith.mulf %48, %48 : vector<5x32xf32>
    %cst_21 = arith.constant dense<0.000000e+00> : vector<5xf32>
    %50 = vector.multi_reduction <add>, %49, %cst_21 [1] : vector<5x32xf32> to vector<5xf32>
    %51 = vector.shape_cast %50 : vector<5xf32> to vector<5x1xf32>
    %cst_22 = arith.constant 3.200000e+01 : f32
    %52 = vector.broadcast %cst_22 : f32 to vector<5x1xf32>
    %53 = arith.divf %51, %52 : vector<5x1xf32>
    %cst_23 = arith.constant 9.99999974E-6 : f32
    %54 = vector.broadcast %cst_23 : f32 to vector<5x1xf32>
    %55 = arith.addf %53, %54 : vector<5x1xf32>
    %56 = math.rsqrt %55 : vector<5x1xf32>
    %57 = vector.broadcast %56 : vector<5x1xf32> to vector<5x32xf32>
    %58 = arith.mulf %48, %57 : vector<5x32xf32>
    %59 = vector.shape_cast %40 : vector<32xf32> to vector<1x32xf32>
    %60 = vector.broadcast %59 : vector<1x32xf32> to vector<5x32xf32>
    %61 = arith.mulf %58, %60 : vector<5x32xf32>
    %62 = vector.shape_cast %42 : vector<32xf32> to vector<1x32xf32>
    %63 = vector.broadcast %62 : vector<1x32xf32> to vector<5x32xf32>
    %64 = arith.addf %61, %63 : vector<5x32xf32>
    %c0_24 = arith.constant 0 : index
    %c0_25 = arith.constant 0 : index
    %c0_26 = arith.constant 0 : index
    %65 = vector.load %arg6[%c0_24, %c0_25, %c0_26] : memref<2x32x96xbf16, #tpu.memory_space<vmem>>, vector<1x32x96xbf16>
    %66 = vector.shape_cast %65 : vector<1x32x96xbf16> to vector<32x96xbf16>
    %67 = arith.truncf %64 : vector<5x32xf32> to vector<5x32xbf16>
    %cst_27 = arith.constant dense<0.000000e+00> : vector<5x96xf32>
    %68 = tpu.matmul %67, %66, %cst_27 {dimension_numbers = #tpu.dot_dimension_numbers<[1], [0], [0], [1], [0, 0, 1, 1], [], []>} : vector<5x32xbf16>, vector<32x96xbf16>, vector<5x96xf32> -> vector<5x96xf32>
    %c0_28 = arith.constant 0 : index
    %c0_29 = arith.constant 0 : index
    %c0_30 = arith.constant 0 : index
    %69 = vector.load %arg7[%c0_28, %c0_29, %c0_30] : memref<2x32x32xbf16, #tpu.memory_space<vmem>>, vector<1x32x32xbf16>
    %70 = vector.shape_cast %69 : vector<1x32x32xbf16> to vector<32x32xbf16>
    %71 = vector.extract_strided_slice %68 {offsets = [0, 0], sizes = [5, 16], strides = [1, 1]} : vector<5x96xf32> to vector<5x16xf32>
    %72 = vector.extract_strided_slice %68 {offsets = [0, 32], sizes = [5, 16], strides = [1, 1]} : vector<5x96xf32> to vector<5x16xf32>
    %73 = vector.extract_strided_slice %68 {offsets = [0, 64], sizes = [5, 16], strides = [1, 1]} : vector<5x96xf32> to vector<5x16xf32>
    %74 = tpu.transpose %72, [1, 0] : vector<5x16xf32> -> vector<16x5xf32>
    %cst_31 = arith.constant dense<0.000000e+00> : vector<5x5xf32>
    %75 = tpu.matmul %71, %74, %cst_31 {dimension_numbers = #tpu.dot_dimension_numbers<[1], [0], [0], [1], [0, 0, 1, 1], [], []>} : vector<5x16xf32>, vector<16x5xf32>, vector<5x5xf32> -> vector<5x5xf32>
    %cst_32 = arith.constant 2.500000e-01 : f32
    %76 = vector.broadcast %cst_32 : f32 to vector<5x5xf32>
    %77 = arith.mulf %75, %76 : vector<5x5xf32>
    %cst_33 = arith.constant dense<0xFF800000> : vector<5xf32>
    %78 = vector.multi_reduction <maximumf>, %77, %cst_33 [1] : vector<5x5xf32> to vector<5xf32>
    %79 = vector.shape_cast %78 : vector<5xf32> to vector<5x1xf32>
    %80 = vector.broadcast %79 : vector<5x1xf32> to vector<5x5xf32>
    %81 = arith.subf %77, %80 : vector<5x5xf32>
    %82 = math.exp %81 : vector<5x5xf32>
    %cst_34 = arith.constant dense<0.000000e+00> : vector<5xf32>
    %83 = vector.multi_reduction <add>, %82, %cst_34 [1] : vector<5x5xf32> to vector<5xf32>
    %84 = vector.shape_cast %83 : vector<5xf32> to vector<5x1xf32>
    %85 = tpu.reciprocal %84 {approx = true} : vector<5x1xf32> -> vector<5x1xf32>
    %86 = vector.broadcast %85 : vector<5x1xf32> to vector<5x5xf32>
    %87 = arith.mulf %82, %86 : vector<5x5xf32>
    %cst_35 = arith.constant dense<0.000000e+00> : vector<5x16xf32>
    %88 = tpu.matmul %87, %73, %cst_35 {dimension_numbers = #tpu.dot_dimension_numbers<[1], [0], [0], [1], [0, 0, 1, 1], [], []>} : vector<5x5xf32>, vector<5x16xf32>, vector<5x16xf32> -> vector<5x16xf32>
    %89 = vector.extract_strided_slice %70 {offsets = [0, 0], sizes = [16, 32], strides = [1, 1]} : vector<32x32xbf16> to vector<16x32xbf16>
    %90 = arith.truncf %88 : vector<5x16xf32> to vector<5x16xbf16>
    %cst_36 = arith.constant dense<0.000000e+00> : vector<5x32xf32>
    %91 = tpu.matmul %90, %89, %cst_36 {dimension_numbers = #tpu.dot_dimension_numbers<[1], [0], [0], [1], [0, 0, 1, 1], [], []>} : vector<5x16xbf16>, vector<16x32xbf16>, vector<5x32xf32> -> vector<5x32xf32>
    %92 = vector.extract_strided_slice %68 {offsets = [0, 16], sizes = [5, 16], strides = [1, 1]} : vector<5x96xf32> to vector<5x16xf32>
    %93 = vector.extract_strided_slice %68 {offsets = [0, 48], sizes = [5, 16], strides = [1, 1]} : vector<5x96xf32> to vector<5x16xf32>
    %94 = vector.extract_strided_slice %68 {offsets = [0, 80], sizes = [5, 16], strides = [1, 1]} : vector<5x96xf32> to vector<5x16xf32>
    %95 = tpu.transpose %93, [1, 0] : vector<5x16xf32> -> vector<16x5xf32>
    %cst_37 = arith.constant dense<0.000000e+00> : vector<5x5xf32>
    %96 = tpu.matmul %92, %95, %cst_37 {dimension_numbers = #tpu.dot_dimension_numbers<[1], [0], [0], [1], [0, 0, 1, 1], [], []>} : vector<5x16xf32>, vector<16x5xf32>, vector<5x5xf32> -> vector<5x5xf32>
    %cst_38 = arith.constant 2.500000e-01 : f32
    %97 = vector.broadcast %cst_38 : f32 to vector<5x5xf32>
    %98 = arith.mulf %96, %97 : vector<5x5xf32>
    %cst_39 = arith.constant dense<0xFF800000> : vector<5xf32>
    %99 = vector.multi_reduction <maximumf>, %98, %cst_39 [1] : vector<5x5xf32> to vector<5xf32>
    %100 = vector.shape_cast %99 : vector<5xf32> to vector<5x1xf32>
    %101 = vector.broadcast %100 : vector<5x1xf32> to vector<5x5xf32>
    %102 = arith.subf %98, %101 : vector<5x5xf32>
    %103 = math.exp %102 : vector<5x5xf32>
    %cst_40 = arith.constant dense<0.000000e+00> : vector<5xf32>
    %104 = vector.multi_reduction <add>, %103, %cst_40 [1] : vector<5x5xf32> to vector<5xf32>
    %105 = vector.shape_cast %104 : vector<5xf32> to vector<5x1xf32>
    %106 = tpu.reciprocal %105 {approx = true} : vector<5x1xf32> -> vector<5x1xf32>
    %107 = vector.broadcast %106 : vector<5x1xf32> to vector<5x5xf32>
    %108 = arith.mulf %103, %107 : vector<5x5xf32>
    %cst_41 = arith.constant dense<0.000000e+00> : vector<5x16xf32>
    %109 = tpu.matmul %108, %94, %cst_41 {dimension_numbers = #tpu.dot_dimension_numbers<[1], [0], [0], [1], [0, 0, 1, 1], [], []>} : vector<5x5xf32>, vector<5x16xf32>, vector<5x16xf32> -> vector<5x16xf32>
    %110 = vector.extract_strided_slice %70 {offsets = [16, 0], sizes = [16, 32], strides = [1, 1]} : vector<32x32xbf16> to vector<16x32xbf16>
    %111 = arith.truncf %109 : vector<5x16xf32> to vector<5x16xbf16>
    %cst_42 = arith.constant dense<0.000000e+00> : vector<5x32xf32>
    %112 = tpu.matmul %111, %110, %cst_42 {dimension_numbers = #tpu.dot_dimension_numbers<[1], [0], [0], [1], [0, 0, 1, 1], [], []>} : vector<5x16xbf16>, vector<16x32xbf16>, vector<5x32xf32> -> vector<5x32xf32>
    %113 = arith.addf %91, %112 : vector<5x32xf32>
    %114 = arith.addf %38, %113 : vector<5x32xf32>
    %c0_43 = arith.constant 0 : index
    %c0_44 = arith.constant 0 : index
    %115 = vector.load %arg8[%c0_43, %c0_44] : memref<2x32xf32, #tpu.memory_space<vmem>>, vector<1x32xf32>
    %116 = vector.shape_cast %115 : vector<1x32xf32> to vector<32xf32>
    %117 = vector.shape_cast %116 : vector<32xf32> to vector<1x32xf32>
    %118 = vector.broadcast %117 : vector<1x32xf32> to vector<5x32xf32>
    %119 = arith.addf %114, %118 : vector<5x32xf32>
    %c0_45 = arith.constant 0 : index
    %c0_46 = arith.constant 0 : index
    %120 = vector.load %arg9[%c0_45, %c0_46] : memref<2x32xf32, #tpu.memory_space<vmem>>, vector<1x32xf32>
    %121 = vector.shape_cast %120 : vector<1x32xf32> to vector<32xf32>
    %c0_47 = arith.constant 0 : index
    %c0_48 = arith.constant 0 : index
    %122 = vector.load %arg10[%c0_47, %c0_48] : memref<2x32xf32, #tpu.memory_space<vmem>>, vector<1x32xf32>
    %123 = vector.shape_cast %122 : vector<1x32xf32> to vector<32xf32>
    %cst_49 = arith.constant dense<0.000000e+00> : vector<5xf32>
    %124 = vector.multi_reduction <add>, %119, %cst_49 [1] : vector<5x32xf32> to vector<5xf32>
    %125 = vector.shape_cast %124 : vector<5xf32> to vector<5x1xf32>
    %cst_50 = arith.constant 3.200000e+01 : f32
    %126 = vector.broadcast %cst_50 : f32 to vector<5x1xf32>
    %127 = arith.divf %125, %126 : vector<5x1xf32>
    %128 = vector.broadcast %127 : vector<5x1xf32> to vector<5x32xf32>
    %129 = arith.subf %119, %128 : vector<5x32xf32>
    %130 = arith.mulf %129, %129 : vector<5x32xf32>
    %cst_51 = arith.constant dense<0.000000e+00> : vector<5xf32>
    %131 = vector.multi_reduction <add>, %130, %cst_51 [1] : vector<5x32xf32> to vector<5xf32>
    %132 = vector.shape_cast %131 : vector<5xf32> to vector<5x1xf32>
    %cst_52 = arith.constant 3.200000e+01 : f32
    %133 = vector.broadcast %cst_52 : f32 to vector<5x1xf32>
    %134 = arith.divf %132, %133 : vector<5x1xf32>
    %cst_53 = arith.constant 9.99999974E-6 : f32
    %135 = vector.broadcast %cst_53 : f32 to vector<5x1xf32>
    %136 = arith.addf %134, %135 : vector<5x1xf32>
    %137 = math.rsqrt %136 : vector<5x1xf32>
    %138 = vector.broadcast %137 : vector<5x1xf32> to vector<5x32xf32>
    %139 = arith.mulf %129, %138 : vector<5x32xf32>
    %140 = vector.shape_cast %121 : vector<32xf32> to vector<1x32xf32>
    %141 = vector.broadcast %140 : vector<1x32xf32> to vector<5x32xf32>
    %142 = arith.mulf %139, %141 : vector<5x32xf32>
    %143 = vector.shape_cast %123 : vector<32xf32> to vector<1x32xf32>
    %144 = vector.broadcast %143 : vector<1x32xf32> to vector<5x32xf32>
    %145 = arith.addf %142, %144 : vector<5x32xf32>
    %c0_54 = arith.constant 0 : index
    %c0_55 = arith.constant 0 : index
    %c0_56 = arith.constant 0 : index
    %146 = vector.load %arg11[%c0_54, %c0_55, %c0_56] : memref<2x32x64xbf16, #tpu.memory_space<vmem>>, vector<1x32x64xbf16>
    %147 = vector.shape_cast %146 : vector<1x32x64xbf16> to vector<32x64xbf16>
    %148 = arith.truncf %145 : vector<5x32xf32> to vector<5x32xbf16>
    %cst_57 = arith.constant dense<0.000000e+00> : vector<5x64xf32>
    %149 = tpu.matmul %148, %147, %cst_57 {dimension_numbers = #tpu.dot_dimension_numbers<[1], [0], [0], [1], [0, 0, 1, 1], [], []>} : vector<5x32xbf16>, vector<32x64xbf16>, vector<5x64xf32> -> vector<5x64xf32>
    %c0_58 = arith.constant 0 : index
    %c0_59 = arith.constant 0 : index
    %150 = vector.load %arg12[%c0_58, %c0_59] : memref<2x64xf32, #tpu.memory_space<vmem>>, vector<1x64xf32>
    %151 = vector.shape_cast %150 : vector<1x64xf32> to vector<64xf32>
    %152 = vector.shape_cast %151 : vector<64xf32> to vector<1x64xf32>
    %153 = vector.broadcast %152 : vector<1x64xf32> to vector<5x64xf32>
    %154 = arith.addf %149, %153 : vector<5x64xf32>
    %155 = arith.mulf %154, %154 : vector<5x64xf32>
    %156 = arith.mulf %154, %155 : vector<5x64xf32>
    %cst_60 = arith.constant 4.471500e-02 : f32
    %157 = vector.broadcast %cst_60 : f32 to vector<5x64xf32>
    %158 = arith.mulf %157, %156 : vector<5x64xf32>
    %159 = arith.addf %154, %158 : vector<5x64xf32>
    %cst_61 = arith.constant 0.797884583 : f32
    %160 = vector.broadcast %cst_61 : f32 to vector<5x64xf32>
    %161 = arith.mulf %160, %159 : vector<5x64xf32>
    %162 = math.tanh %161 : vector<5x64xf32>
    %cst_62 = arith.constant 1.000000e+00 : f32
    %163 = vector.broadcast %cst_62 : f32 to vector<5x64xf32>
    %164 = arith.addf %163, %162 : vector<5x64xf32>
    %cst_63 = arith.constant 5.000000e-01 : f32
    %165 = vector.broadcast %cst_63 : f32 to vector<5x64xf32>
    %166 = arith.mulf %165, %164 : vector<5x64xf32>
    %167 = arith.mulf %154, %166 : vector<5x64xf32>
    %c0_64 = arith.constant 0 : index
    %c0_65 = arith.constant 0 : index
    %c0_66 = arith.constant 0 : index
    %168 = vector.load %arg13[%c0_64, %c0_65, %c0_66] : memref<2x64x32xbf16, #tpu.memory_space<vmem>>, vector<1x64x32xbf16>
    %169 = vector.shape_cast %168 : vector<1x64x32xbf16> to vector<64x32xbf16>
    %170 = arith.truncf %167 : vector<5x64xf32> to vector<5x64xbf16>
    %cst_67 = arith.constant dense<0.000000e+00> : vector<5x32xf32>
    %171 = tpu.matmul %170, %169, %cst_67 {dimension_numbers = #tpu.dot_dimension_numbers<[1], [0], [0], [1], [0, 0, 1, 1], [], []>} : vector<5x64xbf16>, vector<64x32xbf16>, vector<5x32xf32> -> vector<5x32xf32>
    %172 = arith.addf %145, %171 : vector<5x32xf32>
    %c0_68 = arith.constant 0 : index
    %c0_69 = arith.constant 0 : index
    %173 = vector.load %arg14[%c0_68, %c0_69] : memref<2x32xf32, #tpu.memory_space<vmem>>, vector<1x32xf32>
    %174 = vector.shape_cast %173 : vector<1x32xf32> to vector<32xf32>
    %175 = vector.shape_cast %174 : vector<32xf32> to vector<1x32xf32>
    %176 = vector.broadcast %175 : vector<1x32xf32> to vector<5x32xf32>
    %177 = arith.addf %172, %176 : vector<5x32xf32>
    %c1 = arith.constant 1 : index
    %c0_70 = arith.constant 0 : index
    %178 = vector.load %arg4[%c1, %c0_70] : memref<2x32xf32, #tpu.memory_space<vmem>>, vector<1x32xf32>
    %179 = vector.shape_cast %178 : vector<1x32xf32> to vector<32xf32>
    %c1_71 = arith.constant 1 : index
    %c0_72 = arith.constant 0 : index
    %180 = vector.load %arg5[%c1_71, %c0_72] : memref<2x32xf32, #tpu.memory_space<vmem>>, vector<1x32xf32>
    %181 = vector.shape_cast %180 : vector<1x32xf32> to vector<32xf32>
    %cst_73 = arith.constant dense<0.000000e+00> : vector<5xf32>
    %182 = vector.multi_reduction <add>, %177, %cst_73 [1] : vector<5x32xf32> to vector<5xf32>
    %183 = vector.shape_cast %182 : vector<5xf32> to vector<5x1xf32>
    %cst_74 = arith.constant 3.200000e+01 : f32
    %184 = vector.broadcast %cst_74 : f32 to vector<5x1xf32>
    %185 = arith.divf %183, %184 : vector<5x1xf32>
    %186 = vector.broadcast %185 : vector<5x1xf32> to vector<5x32xf32>
    %187 = arith.subf %177, %186 : vector<5x32xf32>
    %188 = arith.mulf %187, %187 : vector<5x32xf32>
    %cst_75 = arith.constant dense<0.000000e+00> : vector<5xf32>
    %189 = vector.multi_reduction <add>, %188, %cst_75 [1] : vector<5x32xf32> to vector<5xf32>
    %190 = vector.shape_cast %189 : vector<5xf32> to vector<5x1xf32>
    %cst_76 = arith.constant 3.200000e+01 : f32
    %191 = vector.broadcast %cst_76 : f32 to vector<5x1xf32>
    %192 = arith.divf %190, %191 : vector<5x1xf32>
    %cst_77 = arith.constant 9.99999974E-6 : f32
    %193 = vector.broadcast %cst_77 : f32 to vector<5x1xf32>
    %194 = arith.addf %192, %193 : vector<5x1xf32>
    %195 = math.rsqrt %194 : vector<5x1xf32>
    %196 = vector.broadcast %195 : vector<5x1xf32> to vector<5x32xf32>
    %197 = arith.mulf %187, %196 : vector<5x32xf32>
    %198 = vector.shape_cast %179 : vector<32xf32> to vector<1x32xf32>
    %199 = vector.broadcast %198 : vector<1x32xf32> to vector<5x32xf32>
    %200 = arith.mulf %197, %199 : vector<5x32xf32>
    %201 = vector.shape_cast %181 : vector<32xf32> to vector<1x32xf32>
    %202 = vector.broadcast %201 : vector<1x32xf32> to vector<5x32xf32>
    %203 = arith.addf %200, %202 : vector<5x32xf32>
    %c1_78 = arith.constant 1 : index
    %c0_79 = arith.constant 0 : index
    %c0_80 = arith.constant 0 : index
    %204 = vector.load %arg6[%c1_78, %c0_79, %c0_80] : memref<2x32x96xbf16, #tpu.memory_space<vmem>>, vector<1x32x96xbf16>
    %205 = vector.shape_cast %204 : vector<1x32x96xbf16> to vector<32x96xbf16>
    %206 = arith.truncf %203 : vector<5x32xf32> to vector<5x32xbf16>
    %cst_81 = arith.constant dense<0.000000e+00> : vector<5x96xf32>
    %207 = tpu.matmul %206, %205, %cst_81 {dimension_numbers = #tpu.dot_dimension_numbers<[1], [0], [0], [1], [0, 0, 1, 1], [], []>} : vector<5x32xbf16>, vector<32x96xbf16>, vector<5x96xf32> -> vector<5x96xf32>
    %c1_82 = arith.constant 1 : index
    %c0_83 = arith.constant 0 : index
    %c0_84 = arith.constant 0 : index
    %208 = vector.load %arg7[%c1_82, %c0_83, %c0_84] : memref<2x32x32xbf16, #tpu.memory_space<vmem>>, vector<1x32x32xbf16>
    %209 = vector.shape_cast %208 : vector<1x32x32xbf16> to vector<32x32xbf16>
    %210 = vector.extract_strided_slice %207 {offsets = [0, 0], sizes = [5, 16], strides = [1, 1]} : vector<5x96xf32> to vector<5x16xf32>
    %211 = vector.extract_strided_slice %207 {offsets = [0, 32], sizes = [5, 16], strides = [1, 1]} : vector<5x96xf32> to vector<5x16xf32>
    %212 = vector.extract_strided_slice %207 {offsets = [0, 64], sizes = [5, 16], strides = [1, 1]} : vector<5x96xf32> to vector<5x16xf32>
    %213 = tpu.transpose %211, [1, 0] : vector<5x16xf32> -> vector<16x5xf32>
    %cst_85 = arith.constant dense<0.000000e+00> : vector<5x5xf32>
    %214 = tpu.matmul %210, %213, %cst_85 {dimension_numbers = #tpu.dot_dimension_numbers<[1], [0], [0], [1], [0, 0, 1, 1], [], []>} : vector<5x16xf32>, vector<16x5xf32>, vector<5x5xf32> -> vector<5x5xf32>
    %cst_86 = arith.constant 2.500000e-01 : f32
    %215 = vector.broadcast %cst_86 : f32 to vector<5x5xf32>
    %216 = arith.mulf %214, %215 : vector<5x5xf32>
    %cst_87 = arith.constant dense<0xFF800000> : vector<5xf32>
    %217 = vector.multi_reduction <maximumf>, %216, %cst_87 [1] : vector<5x5xf32> to vector<5xf32>
    %218 = vector.shape_cast %217 : vector<5xf32> to vector<5x1xf32>
    %219 = vector.broadcast %218 : vector<5x1xf32> to vector<5x5xf32>
    %220 = arith.subf %216, %219 : vector<5x5xf32>
    %221 = math.exp %220 : vector<5x5xf32>
    %cst_88 = arith.constant dense<0.000000e+00> : vector<5xf32>
    %222 = vector.multi_reduction <add>, %221, %cst_88 [1] : vector<5x5xf32> to vector<5xf32>
    %223 = vector.shape_cast %222 : vector<5xf32> to vector<5x1xf32>
    %224 = tpu.reciprocal %223 {approx = true} : vector<5x1xf32> -> vector<5x1xf32>
    %225 = vector.broadcast %224 : vector<5x1xf32> to vector<5x5xf32>
    %226 = arith.mulf %221, %225 : vector<5x5xf32>
    %cst_89 = arith.constant dense<0.000000e+00> : vector<5x16xf32>
    %227 = tpu.matmul %226, %212, %cst_89 {dimension_numbers = #tpu.dot_dimension_numbers<[1], [0], [0], [1], [0, 0, 1, 1], [], []>} : vector<5x5xf32>, vector<5x16xf32>, vector<5x16xf32> -> vector<5x16xf32>
    %228 = vector.extract_strided_slice %209 {offsets = [0, 0], sizes = [16, 32], strides = [1, 1]} : vector<32x32xbf16> to vector<16x32xbf16>
    %229 = arith.truncf %227 : vector<5x16xf32> to vector<5x16xbf16>
    %cst_90 = arith.constant dense<0.000000e+00> : vector<5x32xf32>
    %230 = tpu.matmul %229, %228, %cst_90 {dimension_numbers = #tpu.dot_dimension_numbers<[1], [0], [0], [1], [0, 0, 1, 1], [], []>} : vector<5x16xbf16>, vector<16x32xbf16>, vector<5x32xf32> -> vector<5x32xf32>
    %231 = vector.extract_strided_slice %207 {offsets = [0, 16], sizes = [5, 16], strides = [1, 1]} : vector<5x96xf32> to vector<5x16xf32>
    %232 = vector.extract_strided_slice %207 {offsets = [0, 48], sizes = [5, 16], strides = [1, 1]} : vector<5x96xf32> to vector<5x16xf32>
    %233 = vector.extract_strided_slice %207 {offsets = [0, 80], sizes = [5, 16], strides = [1, 1]} : vector<5x96xf32> to vector<5x16xf32>
    %234 = tpu.transpose %232, [1, 0] : vector<5x16xf32> -> vector<16x5xf32>
    %cst_91 = arith.constant dense<0.000000e+00> : vector<5x5xf32>
    %235 = tpu.matmul %231, %234, %cst_91 {dimension_numbers = #tpu.dot_dimension_numbers<[1], [0], [0], [1], [0, 0, 1, 1], [], []>} : vector<5x16xf32>, vector<16x5xf32>, vector<5x5xf32> -> vector<5x5xf32>
    %cst_92 = arith.constant 2.500000e-01 : f32
    %236 = vector.broadcast %cst_92 : f32 to vector<5x5xf32>
    %237 = arith.mulf %235, %236 : vector<5x5xf32>
    %cst_93 = arith.constant dense<0xFF800000> : vector<5xf32>
    %238 = vector.multi_reduction <maximumf>, %237, %cst_93 [1] : vector<5x5xf32> to vector<5xf32>
    %239 = vector.shape_cast %238 : vector<5xf32> to vector<5x1xf32>
    %240 = vector.broadcast %239 : vector<5x1xf32> to vector<5x5xf32>
    %241 = arith.subf %237, %240 : vector<5x5xf32>
    %242 = math.exp %241 : vector<5x5xf32>
    %cst_94 = arith.constant dense<0.000000e+00> : vector<5xf32>
    %243 = vector.multi_reduction <add>, %242, %cst_94 [1] : vector<5x5xf32> to vector<5xf32>
    %244 = vector.shape_cast %243 : vector<5xf32> to vector<5x1xf32>
    %245 = tpu.reciprocal %244 {approx = true} : vector<5x1xf32> -> vector<5x1xf32>
    %246 = vector.broadcast %245 : vector<5x1xf32> to vector<5x5xf32>
    %247 = arith.mulf %242, %246 : vector<5x5xf32>
    %cst_95 = arith.constant dense<0.000000e+00> : vector<5x16xf32>
    %248 = tpu.matmul %247, %233, %cst_95 {dimension_numbers = #tpu.dot_dimension_numbers<[1], [0], [0], [1], [0, 0, 1, 1], [], []>} : vector<5x5xf32>, vector<5x16xf32>, vector<5x16xf32> -> vector<5x16xf32>
    %249 = vector.extract_strided_slice %209 {offsets = [16, 0], sizes = [16, 32], strides = [1, 1]} : vector<32x32xbf16> to vector<16x32xbf16>
    %250 = arith.truncf %248 : vector<5x16xf32> to vector<5x16xbf16>
    %cst_96 = arith.constant dense<0.000000e+00> : vector<5x32xf32>
    %251 = tpu.matmul %250, %249, %cst_96 {dimension_numbers = #tpu.dot_dimension_numbers<[1], [0], [0], [1], [0, 0, 1, 1], [], []>} : vector<5x16xbf16>, vector<16x32xbf16>, vector<5x32xf32> -> vector<5x32xf32>
    %252 = arith.addf %230, %251 : vector<5x32xf32>
    %253 = arith.addf %177, %252 : vector<5x32xf32>
    %c1_97 = arith.constant 1 : index
    %c0_98 = arith.constant 0 : index
    %254 = vector.load %arg8[%c1_97, %c0_98] : memref<2x32xf32, #tpu.memory_space<vmem>>, vector<1x32xf32>
    %255 = vector.shape_cast %254 : vector<1x32xf32> to vector<32xf32>
    %256 = vector.shape_cast %255 : vector<32xf32> to vector<1x32xf32>
    %257 = vector.broadcast %256 : vector<1x32xf32> to vector<5x32xf32>
    %258 = arith.addf %253, %257 : vector<5x32xf32>
    %c1_99 = arith.constant 1 : index
    %c0_100 = arith.constant 0 : index
    %259 = vector.load %arg9[%c1_99, %c0_100] : memref<2x32xf32, #tpu.memory_space<vmem>>, vector<1x32xf32>
    %260 = vector.shape_cast %259 : vector<1x32xf32> to vector<32xf32>
    %c1_101 = arith.constant 1 : index
    %c0_102 = arith.constant 0 : index
    %261 = vector.load %arg10[%c1_101, %c0_102] : memref<2x32xf32, #tpu.memory_space<vmem>>, vector<1x32xf32>
    %262 = vector.shape_cast %261 : vector<1x32xf32> to vector<32xf32>
    %cst_103 = arith.constant dense<0.000000e+00> : vector<5xf32>
    %263 = vector.multi_reduction <add>, %258, %cst_103 [1] : vector<5x32xf32> to vector<5xf32>
    %264 = vector.shape_cast %263 : vector<5xf32> to vector<5x1xf32>
    %cst_104 = arith.constant 3.200000e+01 : f32
    %265 = vector.broadcast %cst_104 : f32 to vector<5x1xf32>
    %266 = arith.divf %264, %265 : vector<5x1xf32>
    %267 = vector.broadcast %266 : vector<5x1xf32> to vector<5x32xf32>
    %268 = arith.subf %258, %267 : vector<5x32xf32>
    %269 = arith.mulf %268, %268 : vector<5x32xf32>
    %cst_105 = arith.constant dense<0.000000e+00> : vector<5xf32>
    %270 = vector.multi_reduction <add>, %269, %cst_105 [1] : vector<5x32xf32> to vector<5xf32>
    %271 = vector.shape_cast %270 : vector<5xf32> to vector<5x1xf32>
    %cst_106 = arith.constant 3.200000e+01 : f32
    %272 = vector.broadcast %cst_106 : f32 to vector<5x1xf32>
    %273 = arith.divf %271, %272 : vector<5x1xf32>
    %cst_107 = arith.constant 9.99999974E-6 : f32
    %274 = vector.broadcast %cst_107 : f32 to vector<5x1xf32>
    %275 = arith.addf %273, %274 : vector<5x1xf32>
    %276 = math.rsqrt %275 : vector<5x1xf32>
    %277 = vector.broadcast %276 : vector<5x1xf32> to vector<5x32xf32>
    %278 = arith.mulf %268, %277 : vector<5x32xf32>
    %279 = vector.shape_cast %260 : vector<32xf32> to vector<1x32xf32>
    %280 = vector.broadcast %279 : vector<1x32xf32> to vector<5x32xf32>
    %281 = arith.mulf %278, %280 : vector<5x32xf32>
    %282 = vector.shape_cast %262 : vector<32xf32> to vector<1x32xf32>
    %283 = vector.broadcast %282 : vector<1x32xf32> to vector<5x32xf32>
    %284 = arith.addf %281, %283 : vector<5x32xf32>
    %c1_108 = arith.constant 1 : index
    %c0_109 = arith.constant 0 : index
    %c0_110 = arith.constant 0 : index
    %285 = vector.load %arg11[%c1_108, %c0_109, %c0_110] : memref<2x32x64xbf16, #tpu.memory_space<vmem>>, vector<1x32x64xbf16>
    %286 = vector.shape_cast %285 : vector<1x32x64xbf16> to vector<32x64xbf16>
    %287 = arith.truncf %284 : vector<5x32xf32> to vector<5x32xbf16>
    %cst_111 = arith.constant dense<0.000000e+00> : vector<5x64xf32>
    %288 = tpu.matmul %287, %286, %cst_111 {dimension_numbers = #tpu.dot_dimension_numbers<[1], [0], [0], [1], [0, 0, 1, 1], [], []>} : vector<5x32xbf16>, vector<32x64xbf16>, vector<5x64xf32> -> vector<5x64xf32>
    %c1_112 = arith.constant 1 : index
    %c0_113 = arith.constant 0 : index
    %289 = vector.load %arg12[%c1_112, %c0_113] : memref<2x64xf32, #tpu.memory_space<vmem>>, vector<1x64xf32>
    %290 = vector.shape_cast %289 : vector<1x64xf32> to vector<64xf32>
    %291 = vector.shape_cast %290 : vector<64xf32> to vector<1x64xf32>
    %292 = vector.broadcast %291 : vector<1x64xf32> to vector<5x64xf32>
    %293 = arith.addf %288, %292 : vector<5x64xf32>
    %294 = arith.mulf %293, %293 : vector<5x64xf32>
    %295 = arith.mulf %293, %294 : vector<5x64xf32>
    %cst_114 = arith.constant 4.471500e-02 : f32
    %296 = vector.broadcast %cst_114 : f32 to vector<5x64xf32>
    %297 = arith.mulf %296, %295 : vector<5x64xf32>
    %298 = arith.addf %293, %297 : vector<5x64xf32>
    %cst_115 = arith.constant 0.797884583 : f32
    %299 = vector.broadcast %cst_115 : f32 to vector<5x64xf32>
    %300 = arith.mulf %299, %298 : vector<5x64xf32>
    %301 = math.tanh %300 : vector<5x64xf32>
    %cst_116 = arith.constant 1.000000e+00 : f32
    %302 = vector.broadcast %cst_116 : f32 to vector<5x64xf32>
    %303 = arith.addf %302, %301 : vector<5x64xf32>
    %cst_117 = arith.constant 5.000000e-01 : f32
    %304 = vector.broadcast %cst_117 : f32 to vector<5x64xf32>
    %305 = arith.mulf %304, %303 : vector<5x64xf32>
    %306 = arith.mulf %293, %305 : vector<5x64xf32>
    %c1_118 = arith.constant 1 : index
    %c0_119 = arith.constant 0 : index
    %c0_120 = arith.constant 0 : index
    %307 = vector.load %arg13[%c1_118, %c0_119, %c0_120] : memref<2x64x32xbf16, #tpu.memory_space<vmem>>, vector<1x64x32xbf16>
    %308 = vector.shape_cast %307 : vector<1x64x32xbf16> to vector<64x32xbf16>
    %309 = arith.truncf %306 : vector<5x64xf32> to vector<5x64xbf16>
    %cst_121 = arith.constant dense<0.000000e+00> : vector<5x32xf32>
    %310 = tpu.matmul %309, %308, %cst_121 {dimension_numbers = #tpu.dot_dimension_numbers<[1], [0], [0], [1], [0, 0, 1, 1], [], []>} : vector<5x64xbf16>, vector<64x32xbf16>, vector<5x32xf32> -> vector<5x32xf32>
    %311 = arith.addf %284, %310 : vector<5x32xf32>
    %c1_122 = arith.constant 1 : index
    %c0_123 = arith.constant 0 : index
    %312 = vector.load %arg14[%c1_122, %c0_123] : memref<2x32xf32, #tpu.memory_space<vmem>>, vector<1x32xf32>
    %313 = vector.shape_cast %312 : vector<1x32xf32> to vector<32xf32>
    %314 = vector.shape_cast %313 : vector<32xf32> to vector<1x32xf32>
    %315 = vector.broadcast %314 : vector<1x32xf32> to vector<5x32xf32>
    %316 = arith.addf %311, %315 : vector<5x32xf32>
    %c0_124 = arith.constant 0 : index
    %c0_125 = arith.constant 0 : index
    %317 = vector.load %arg15[%c0_124, %c0_125] : memref<1x32xf32, #tpu.memory_space<vmem>>, vector<1x32xf32>
    %c0_126 = arith.constant 0 : index
    %c0_127 = arith.constant 0 : index
    %318 = vector.load %arg16[%c0_126, %c0_127] : memref<1x32xf32, #tpu.memory_space<vmem>>, vector<1x32xf32>
    %cst_128 = arith.constant dense<0.000000e+00> : vector<5xf32>
    %319 = vector.multi_reduction <add>, %316, %cst_128 [1] : vector<5x32xf32> to vector<5xf32>
    %320 = vector.shape_cast %319 : vector<5xf32> to vector<5x1xf32>
    %cst_129 = arith.constant 3.200000e+01 : f32
    %321 = vector.broadcast %cst_129 : f32 to vector<5x1xf32>
    %322 = arith.divf %320, %321 : vector<5x1xf32>
    %323 = vector.broadcast %322 : vector<5x1xf32> to vector<5x32xf32>
    %324 = arith.subf %316, %323 : vector<5x32xf32>
    %325 = arith.mulf %324, %324 : vector<5x32xf32>
    %cst_130 = arith.constant dense<0.000000e+00> : vector<5xf32>
    %326 = vector.multi_reduction <add>, %325, %cst_130 [1] : vector<5x32xf32> to vector<5xf32>
    %327 = vector.shape_cast %326 : vector<5xf32> to vector<5x1xf32>
    %cst_131 = arith.constant 3.200000e+01 : f32
    %328 = vector.broadcast %cst_131 : f32 to vector<5x1xf32>
    %329 = arith.divf %327, %328 : vector<5x1xf32>
    %cst_132 = arith.constant 9.99999974E-6 : f32
    %330 = vector.broadcast %cst_132 : f32 to vector<5x1xf32>
    %331 = arith.addf %329, %330 : vector<5x1xf32>
    %332 = math.rsqrt %331 : vector<5x1xf32>
    %333 = vector.broadcast %332 : vector<5x1xf32> to vector<5x32xf32>
    %334 = arith.mulf %324, %333 : vector<5x32xf32>
    %335 = vector.broadcast %317 : vector<1x32xf32> to vector<5x32xf32>
    %336 = arith.mulf %334, %335 : vector<5x32xf32>
    %337 = vector.broadcast %318 : vector<1x32xf32> to vector<5x32xf32>
    %338 = arith.addf %336, %337 : vector<5x32xf32>
    %c0_133 = arith.constant 0 : index
    %c0_134 = arith.constant 0 : index
    %339 = vector.load %arg17[%c0_133, %c0_134] : memref<32x1xf32, #tpu.memory_space<vmem>>, vector<32x1xf32>
    %cst_135 = arith.constant dense<0.000000e+00> : vector<5x1xf32>
    %340 = tpu.matmul %338, %339, %cst_135 {dimension_numbers = #tpu.dot_dimension_numbers<[1], [0], [0], [1], [0, 0, 1, 1], [], []>} : vector<5x32xf32>, vector<32x1xf32>, vector<5x1xf32> -> vector<5x1xf32>
    %c0_136 = arith.constant 0 : index
    %c0_137 = arith.constant 0 : index
    %341 = vector.load %arg18[%c0_136, %c0_137] : memref<1x1xf32, #tpu.memory_space<vmem>>, vector<1x1xf32>
    %342 = vector.broadcast %341 : vector<1x1xf32> to vector<5x1xf32>
    %343 = arith.addf %340, %342 : vector<5x1xf32>
    %cst_138 = arith.constant dense<0xFF800000> : vector<1xf32>
    %344 = vector.multi_reduction <maximumf>, %343, %cst_138 [0] : vector<5x1xf32> to vector<1xf32>
    %345 = vector.shape_cast %344 : vector<1xf32> to vector<1x1xf32>
    %346 = vector.broadcast %345 : vector<1x1xf32> to vector<5x1xf32>
    %347 = arith.subf %343, %346 : vector<5x1xf32>
    %348 = math.exp %347 : vector<5x1xf32>
    %cst_139 = arith.constant dense<0.000000e+00> : vector<1xf32>
    %349 = vector.multi_reduction <add>, %348, %cst_139 [0] : vector<5x1xf32> to vector<1xf32>
    %350 = vector.shape_cast %349 : vector<1xf32> to vector<1x1xf32>
    %351 = tpu.reciprocal %350 {approx = true} : vector<1x1xf32> -> vector<1x1xf32>
    %352 = vector.broadcast %351 : vector<1x1xf32> to vector<5x1xf32>
    %353 = arith.mulf %348, %352 : vector<5x1xf32>
    %354 = vector.broadcast %353 : vector<5x1xf32> to vector<5x32xf32>
    %355 = arith.mulf %354, %338 : vector<5x32xf32>
    %cst_140 = arith.constant dense<0.000000e+00> : vector<32xf32>
    %356 = vector.multi_reduction <add>, %355, %cst_140 [0] : vector<5x32xf32> to vector<32xf32>
    %357 = vector.shape_cast %356 : vector<32xf32> to vector<1x32xf32>
    %c0_141 = arith.constant 0 : index
    %c0_142 = arith.constant 0 : index
    %358 = vector.load %arg19[%c0_141, %c0_142] : memref<32x128xbf16, #tpu.memory_space<vmem>>, vector<32x128xbf16>
    %359 = arith.truncf %357 : vector<1x32xf32> to vector<1x32xbf16>
    %cst_143 = arith.constant dense<0.000000e+00> : vector<1x128xf32>
    %360 = tpu.matmul %359, %358, %cst_143 {dimension_numbers = #tpu.dot_dimension_numbers<[1], [0], [0], [1], [0, 0, 1, 1], [], []>} : vector<1x32xbf16>, vector<32x128xbf16>, vector<1x128xf32> -> vector<1x128xf32>
    %c0_144 = arith.constant 0 : index
    %c0_145 = arith.constant 0 : index
    %361 = vector.load %arg20[%c0_144, %c0_145] : memref<1x128xf32, #tpu.memory_space<vmem>>, vector<1x128xf32>
    %362 = arith.addf %360, %361 : vector<1x128xf32>
    %c0_146 = arith.constant 0 : index
    %c0_147 = arith.constant 0 : index
    %c0_148 = arith.constant 0 : index
    %363 = vector.load %arg21[%c0_146, %c0_147, %c0_148] : memref<1x1x128xf32, #tpu.memory_space<vmem>>, vector<1x1x128xf32>
    %364 = vector.shape_cast %363 : vector<1x1x128xf32> to vector<1x128xf32>
    %365 = vector.shape_cast %362 : vector<1x128xf32> to vector<1x1x128xf32>
    tpu.vector_store %arg21[%c0_146, %c0_147, %c0_148], %365 {strides = array<i32>} : memref<1x1x128xf32, #tpu.memory_space<vmem>>, vector<1x1x128xf32>,
    return
  }
  func.func @transform_0(%arg0: i32) -> (i32, i32, i32) {
    %c0_i32 = arith.constant 0 : i32
    %c0_i32_0 = arith.constant 0 : i32
    %c0_i32_1 = arith.constant 0 : i32
    return %arg0, %c0_i32, %c0_i32_0 : i32, i32, i32
  }
  func.func @transform_1(%arg0: i32) -> (i32, i32) {
    %c0_i32 = arith.constant 0 : i32
    %c0_i32_0 = arith.constant 0 : i32
    %c0_i32_1 = arith.constant 0 : i32
    return %c0_i32, %c0_i32_0 : i32, i32
  }
  func.func @transform_2(%arg0: i32) -> (i32, i32, i32) {
    %c0_i32 = arith.constant 0 : i32
    %c0_i32_0 = arith.constant 0 : i32
    %c0_i32_1 = arith.constant 0 : i32
    %c0_i32_2 = arith.constant 0 : i32
    return %c0_i32, %c0_i32_0, %c0_i32_1 : i32, i32, i32
  }
  func.func @transform_3(%arg0: i32) -> (i32, i32) {
    %c0_i32 = arith.constant 0 : i32
    %c0_i32_0 = arith.constant 0 : i32
    %c0_i32_1 = arith.constant 0 : i32
    return %c0_i32, %c0_i32_0 : i32, i32
  }
  func.func @transform_4(%arg0: i32) -> (i32, i32) {
    %c0_i32 = arith.constant 0 : i32
    %c0_i32_0 = arith.constant 0 : i32
    %c0_i32_1 = arith.constant 0 : i32
    return %c0_i32, %c0_i32_0 : i32, i32
  }
  func.func @transform_5(%arg0: i32) -> (i32, i32, i32) {
    %c0_i32 = arith.constant 0 : i32
    %c0_i32_0 = arith.constant 0 : i32
    %c0_i32_1 = arith.constant 0 : i32
    %c0_i32_2 = arith.constant 0 : i32
    return %c0_i32, %c0_i32_0, %c0_i32_1 : i32, i32, i32
  }
  func.func @transform_6(%arg0: i32) -> (i32, i32, i32) {
    %c0_i32 = arith.constant 0 : i32
    %c0_i32_0 = arith.constant 0 : i32
    %c0_i32_1 = arith.constant 0 : i32
    %c0_i32_2 = arith.constant 0 : i32
    return %c0_i32, %c0_i32_0, %c0_i32_1 : i32, i32, i32
  }
  func.func @transform_7(%arg0: i32) -> (i32, i32) {
    %c0_i32 = arith.constant 0 : i32
    %c0_i32_0 = arith.constant 0 : i32
    %c0_i32_1 = arith.constant 0 : i32
    return %c0_i32, %c0_i32_0 : i32, i32
  }
  func.func @transform_8(%arg0: i32) -> (i32, i32) {
    %c0_i32 = arith.constant 0 : i32
    %c0_i32_0 = arith.constant 0 : i32
    %c0_i32_1 = arith.constant 0 : i32
    return %c0_i32, %c0_i32_0 : i32, i32
  }
  func.func @transform_9(%arg0: i32) -> (i32, i32) {
    %c0_i32 = arith.constant 0 : i32
    %c0_i32_0 = arith.constant 0 : i32
    %c0_i32_1 = arith.constant 0 : i32
    return %c0_i32, %c0_i32_0 : i32, i32
  }
  func.func @transform_10(%arg0: i32) -> (i32, i32, i32) {
    %c0_i32 = arith.constant 0 : i32
    %c0_i32_0 = arith.constant 0 : i32
    %c0_i32_1 = arith.constant 0 : i32
    %c0_i32_2 = arith.constant 0 : i32
    return %c0_i32, %c0_i32_0, %c0_i32_1 : i32, i32, i32
  }
  func.func @transform_11(%arg0: i32) -> (i32, i32) {
    %c0_i32 = arith.constant 0 : i32
    %c0_i32_0 = arith.constant 0 : i32
    %c0_i32_1 = arith.constant 0 : i32
    return %c0_i32, %c0_i32_0 : i32, i32
  }
  func.func @transform_12(%arg0: i32) -> (i32, i32, i32) {
    %c0_i32 = arith.constant 0 : i32
    %c0_i32_0 = arith.constant 0 : i32
    %c0_i32_1 = arith.constant 0 : i32
    %c0_i32_2 = arith.constant 0 : i32
    return %c0_i32, %c0_i32_0, %c0_i32_1 : i32, i32, i32
  }
  func.func @transform_13(%arg0: i32) -> (i32, i32) {
    %c0_i32 = arith.constant 0 : i32
    %c0_i32_0 = arith.constant 0 : i32
    %c0_i32_1 = arith.constant 0 : i32
    return %c0_i32, %c0_i32_0 : i32, i32
  }
  func.func @transform_14(%arg0: i32) -> (i32, i32) {
    %c0_i32 = arith.constant 0 : i32
    %c0_i32_0 = arith.constant 0 : i32
    %c0_i32_1 = arith.constant 0 : i32
    return %c0_i32, %c0_i32_0 : i32, i32
  }
  func.func @transform_15(%arg0: i32) -> (i32, i32) {
    %c0_i32 = arith.constant 0 : i32
    %c0_i32_0 = arith.constant 0 : i32
    %c0_i32_1 = arith.constant 0 : i32
    return %c0_i32, %c0_i32_0 : i32, i32
  }
  func.func @transform_16(%arg0: i32) -> (i32, i32) {
    %c0_i32 = arith.constant 0 : i32
    %c0_i32_0 = arith.constant 0 : i32
    %c0_i32_1 = arith.constant 0 : i32
    return %c0_i32, %c0_i32_0 : i32, i32
  }
  func.func @transform_17(%arg0: i32) -> (i32, i32) {
    %c0_i32 = arith.constant 0 : i32
    %c0_i32_0 = arith.constant 0 : i32
    %c0_i32_1 = arith.constant 0 : i32
    return %c0_i32, %c0_i32_0 : i32, i32
  }
  func.func @transform_18(%arg0: i32) -> (i32, i32) {
    %c0_i32 = arith.constant 0 : i32
    %c0_i32_0 = arith.constant 0 : i32
    %c0_i32_1 = arith.constant 0 : i32
    return %c0_i32, %c0_i32_0 : i32, i32
  }
  func.func @transform_19(%arg0: i32) -> (i32, i32) {
    %c0_i32 = arith.constant 0 : i32
    %c0_i32_0 = arith.constant 0 : i32
    %c0_i32_1 = arith.constant 0 : i32
    return %c0_i32, %c0_i32_0 : i32, i32
  }
  func.func @transform_20(%arg0: i32) -> (i32, i32, i32) {
    %c0_i32 = arith.constant 0 : i32
    %c0_i32_0 = arith.constant 0 : i32
    %c0_i32_1 = arith.constant 0 : i32
    return %arg0, %c0_i32, %c0_i32_0 : i32, i32, i32
  }
}

</mosaic_0001>

<llo_original>
// kernel: text_cct_forward.1
$region0: #{text_cct_forward.1}
  #allocation0 [shape = 'u32[]', space=smem, size = 0x4, offset = 0x4, fixed_abs, tag = 'smem constant byte address 0x4 - core index']
  #allocation1 [shape = 'u32[144,128]{1,0:T(1,128)}', space=vmem, size = 0x12000, scoped, tag = 'internal scratch']
  #allocation2 [shape = 'f32[1,1]{1,0:T(1,128)S(1)}', space=vmem, size = 0x200, scoped, tag = 'scoped memory for text_cct_forward.1']
  %s0 = inlined_call_operand.vmem [shape: f32[2,10,32], index: 0, kind: input, shape index: {}]
  %s1 = inlined_call_operand.vmem [shape: bf16[64,32], index: 1, kind: input, shape index: {}]
  %s2 = inlined_call_operand.vmem [shape: f32[1,5,32], index: 2, kind: input, shape index: {}]
  %s3 = inlined_call_operand.vmem [shape: f32[2,32], index: 3, kind: input, shape index: {}]
  %s4 = inlined_call_operand.vmem [shape: f32[2,32], index: 4, kind: input, shape index: {}]
  %s5 = inlined_call_operand.vmem [shape: bf16[2,32,96], index: 5, kind: input, shape index: {}]
  %s6 = inlined_call_operand.vmem [shape: bf16[2,32,32], index: 6, kind: input, shape index: {}]
  %s7 = inlined_call_operand.vmem [shape: f32[2,32], index: 7, kind: input, shape index: {}]
  %s8 = inlined_call_operand.vmem [shape: f32[2,32], index: 8, kind: input, shape index: {}]
  %s9 = inlined_call_operand.vmem [shape: f32[2,32], index: 9, kind: input, shape index: {}]
  %s10 = inlined_call_operand.vmem [shape: bf16[2,32,64], index: 10, kind: input, shape index: {}]
  %s11 = inlined_call_operand.vmem [shape: f32[2,64], index: 11, kind: input, shape index: {}]
  %s12 = inlined_call_operand.vmem [shape: bf16[2,64,32], index: 12, kind: input, shape index: {}]
  %s13 = inlined_call_operand.vmem [shape: f32[2,32], index: 13, kind: input, shape index: {}]
  %s14 = inlined_call_operand.vmem [shape: f32[1,32], index: 14, kind: input, shape index: {}]
  %s15 = inlined_call_operand.vmem [shape: f32[1,32], index: 15, kind: input, shape index: {}]
  %s16 = inlined_call_operand.vmem [shape: f32[32,1], index: 16, kind: input, shape index: {}]
  %s17 = inlined_call_operand.<no memory space> [shape: f32[1,1], index: 17, kind: input, shape index: {}]
  %s18 = inlined_call_operand.vmem [shape: bf16[32,128], index: 18, kind: input, shape index: {}]
  %s19 = inlined_call_operand.vmem [shape: f32[1,128], index: 19, kind: input, shape index: {}]
  %s20 = inlined_call_operand.hbm [shape: f32[2,1,128], index: 20, kind: output, shape index: {}]
  %s21 = sld [smem:[#allocation0]]
  $region113: #{text_cct_forward.1} parent=0
    _
  %s23 = ssub.s32 1, %s21
  %s24 = scalar_select 0, %s23, %s21
  %v25 = vstv %s17
  %26 = vst [vmem:[#allocation2] sm:$0x1] %v25
  $region1: #{text_cct_forward.1} parent=0
    #allocation3 [shape = 'u8[1024]{0}', space=vmem, size = 0x400, scoped, tag = 'output window, operand 0']
    #allocation4 [shape = 's32[2]{0}', space=sflag, size = 0x8, scoped, tag = 'scoped memory for text_cct_forward.1']
    %27 = vsyncpa [#allocation4], 0
    %s28 = scalar_lea.sflag [#allocation4], 1
    %29 = vsyncpa %s28, 0
    loop: start=0, step=1, limit=4
    $region2: #{text_cct_forward.1} parent=1 // loop_pre_header
      _
    $region3: #{text_cct_forward.1} parent=1 // loop_header
      %s31 = sphi 0, %s35
      %p32 = scmp.ge.s32.totalorder %s31, 4
      %s41 = sphi 0, %s43
      %s44 = sphi 0, %s41
      %s45 = sphi 0, %s44
      %s61 = sphi 0, %s45
      %s65 = sphi 0, %s65
      %s67 = sphi 0, %s65
      %s68 = sphi 0, %s67
      %s82 = sphi 0, %s68
      %s86 = sphi 0, %s86
      %s88 = sphi 0, %s86
      %s89 = sphi 0, %s88
      %s103 = sphi 0, %s89
      %s107 = sphi 0, %s107
      %s109 = sphi 0, %s107
      %s110 = sphi 0, %s109
      %s124 = sphi 0, %s110
      %s128 = sphi 0, %s128
      %s130 = sphi 0, %s128
      %s131 = sphi 0, %s130
      %s145 = sphi 0, %s131
      %s149 = sphi 0, %s149
      %s151 = sphi 0, %s149
      %s152 = sphi 0, %s151
      %s166 = sphi 0, %s152
      %s170 = sphi 0, %s170
      %s172 = sphi 0, %s170
      %s173 = sphi 0, %s172
      %s187 = sphi 0, %s173
      %s191 = sphi 0, %s191
      %s193 = sphi 0, %s191
      %s194 = sphi 0, %s193
      %s208 = sphi 0, %s194
      %s212 = sphi 0, %s212
      %s214 = sphi 0, %s212
      %s215 = sphi 0, %s214
      %s229 = sphi 0, %s215
      %s233 = sphi 0, %s233
      %s235 = sphi 0, %s233
      %s236 = sphi 0, %s235
      %s250 = sphi 0, %s236
      %s254 = sphi 0, %s254
      %s256 = sphi 0, %s254
      %s257 = sphi 0, %s256
      %s271 = sphi 0, %s257
      %s275 = sphi 0, %s275
      %s277 = sphi 0, %s275
      %s278 = sphi 0, %s277
      %s292 = sphi 0, %s278
      %s296 = sphi 0, %s296
      %s298 = sphi 0, %s296
      %s299 = sphi 0, %s298
      %s313 = sphi 0, %s299
      %s317 = sphi 0, %s317
      %s319 = sphi 0, %s317
      %s320 = sphi 0, %s319
      %s334 = sphi 0, %s320
      %s338 = sphi 0, %s338
      %s340 = sphi 0, %s338
      %s341 = sphi 0, %s340
      %s355 = sphi 0, %s341
      %s359 = sphi 0, %s359
      %s361 = sphi 0, %s359
      %s362 = sphi 0, %s361
      %s376 = sphi 0, %s362
      %s380 = sphi 0, %s380
      %s382 = sphi 0, %s380
      %s383 = sphi 0, %s382
      %s397 = sphi 0, %s383
      %s401 = sphi 0, %s401
      %s403 = sphi 0, %s401
      %s404 = sphi 0, %s403
      %s418 = sphi 0, %s404
      %s422 = sphi 0, %s422
      %s424 = sphi 0, %s422
      %s425 = sphi 0, %s424
      %s439 = sphi 0, %s425
      %s443 = sphi 0, %s443
      %s445 = sphi 0, %s443
      %s446 = sphi 0, %s445
      %s460 = sphi 0, %s446
      %s466 = sphi 0, %s468
      %s469 = sphi 0, %s466
      %s470 = sphi 0, %s469
      %s486 = sphi 0, %s470
    $region4: #{text_cct_forward.1} parent=1 // loop_header_branch
      %34 = sbr.rel (%p32) target = $region8
    $region5: #{text_cct_forward.1} parent=1 // loop_body
      %s36 = ssub.s32 %s31, 1
      %s37 = ssub.s32 %s31, 2
      %s38 = sadd.s32 %s31, 1
      %s39 = ssub.s32 %s31, %s38
      %p40 = scmp.eq.s32.totalorder %s39, 0
      %s42 = sadd.s32 %s41, 1
      %s43 = scalar_select %p40, %s41, %s42
      %p46 = pneg %p40
      %p47 = scmp.eq.s32.totalorder %s31, 1
      %p48 = por %p46, %p47
      %p49 = scmp.ne.s32.totalorder %s41, %s44
      %p50 = scmp.eq.s32.totalorder %s31, 0
      %p51 = por %p49, %p50
      %p52 = scmp.ne.s32.totalorder %s41, %s44
      %p53 = scmp.eq.s32.totalorder %s36, 1
      %p54 = por %p52, %p53
      %p55 = scmp.ne.s32.totalorder %s44, %s45
      %p56 = scmp.eq.s32.totalorder %s36, 0
      %p57 = por %p55, %p56
      %p58 = scmp.ne.s32.totalorder %s44, %s45
      %p59 = scmp.eq.s32.totalorder %s37, 1
      %p60 = por %p58, %p59
      %p62 = scmp.ne.s32.totalorder %s45, %s61
      %p63 = scmp.eq.s32.totalorder %s37, 0
      %p64 = por %p62, %p63
      %s66 = sadd.s32 %s65, 1
      %p69 = scmp.eq.s32.totalorder %s31, 1
      %p70 = scmp.ne.s32.totalorder %s65, %s67
      %p71 = scmp.eq.s32.totalorder %s31, 0
      %p72 = por %p70, %p71
      %p73 = scmp.ne.s32.totalorder %s65, %s67
      %p74 = scmp.eq.s32.totalorder %s36, 1
      %p75 = por %p73, %p74
      %p76 = scmp.ne.s32.totalorder %s67, %s68
      %p77 = scmp.eq.s32.totalorder %s36, 0
      %p78 = por %p76, %p77
      %p79 = scmp.ne.s32.totalorder %s67, %s68
      %p80 = scmp.eq.s32.totalorder %s37, 1
      %p81 = por %p79, %p80
      %p83 = scmp.ne.s32.totalorder %s68, %s82
      %p84 = scmp.eq.s32.totalorder %s37, 0
      %p85 = por %p83, %p84
      %s87 = sadd.s32 %s86, 1
      %p90 = scmp.eq.s32.totalorder %s31, 1
      %p91 = scmp.ne.s32.totalorder %s86, %s88
      %p92 = scmp.eq.s32.totalorder %s31, 0
      %p93 = por %p91, %p92
      %p94 = scmp.ne.s32.totalorder %s86, %s88
      %p95 = scmp.eq.s32.totalorder %s36, 1
      %p96 = por %p94, %p95
      %p97 = scmp.ne.s32.totalorder %s88, %s89
      %p98 = scmp.eq.s32.totalorder %s36, 0
      %p99 = por %p97, %p98
      %p100 = scmp.ne.s32.totalorder %s88, %s89
      %p101 = scmp.eq.s32.totalorder %s37, 1
      %p102 = por %p100, %p101
      %p104 = scmp.ne.s32.totalorder %s89, %s103
      %p105 = scmp.eq.s32.totalorder %s37, 0
      %p106 = por %p104, %p105
      %s108 = sadd.s32 %s107, 1
      %p111 = scmp.eq.s32.totalorder %s31, 1
      %p112 = scmp.ne.s32.totalorder %s107, %s109
      %p113 = scmp.eq.s32.totalorder %s31, 0
      %p114 = por %p112, %p113
      %p115 = scmp.ne.s32.totalorder %s107, %s109
      %p116 = scmp.eq.s32.totalorder %s36, 1
      %p117 = por %p115, %p116
      %p118 = scmp.ne.s32.totalorder %s109, %s110
      %p119 = scmp.eq.s32.totalorder %s36, 0
      %p120 = por %p118, %p119
      %p121 = scmp.ne.s32.totalorder %s109, %s110
      %p122 = scmp.eq.s32.totalorder %s37, 1
      %p123 = por %p121, %p122
      %p125 = scmp.ne.s32.totalorder %s110, %s124
      %p126 = scmp.eq.s32.totalorder %s37, 0
      %p127 = por %p125, %p126
      %s129 = sadd.s32 %s128, 1
      %p132 = scmp.eq.s32.totalorder %s31, 1
      %p133 = scmp.ne.s32.totalorder %s128, %s130
      %p134 = scmp.eq.s32.totalorder %s31, 0
      %p135 = por %p133, %p134
      %p136 = scmp.ne.s32.totalorder %s128, %s130
      %p137 = scmp.eq.s32.totalorder %s36, 1
      %p138 = por %p136, %p137
      %p139 = scmp.ne.s32.totalorder %s130, %s131
      %p140 = scmp.eq.s32.totalorder %s36, 0
      %p141 = por %p139, %p140
      %p142 = scmp.ne.s32.totalorder %s130, %s131
      %p143 = scmp.eq.s32.totalorder %s37, 1
      %p144 = por %p142, %p143
      %p146 = scmp.ne.s32.totalorder %s131, %s145
      %p147 = scmp.eq.s32.totalorder %s37, 0
      %p148 = por %p146, %p147
      %s150 = sadd.s32 %s149, 1
      %p153 = scmp.eq.s32.totalorder %s31, 1
      %p154 = scmp.ne.s32.totalorder %s149, %s151
      %p155 = scmp.eq.s32.totalorder %s31, 0
      %p156 = por %p154, %p155
      %p157 = scmp.ne.s32.totalorder %s149, %s151
      %p158 = scmp.eq.s32.totalorder %s36, 1
      %p159 = por %p157, %p158
      %p160 = scmp.ne.s32.totalorder %s151, %s152
      %p161 = scmp.eq.s32.totalorder %s36, 0
      %p162 = por %p160, %p161
      %p163 = scmp.ne.s32.totalorder %s151, %s152
      %p164 = scmp.eq.s32.totalorder %s37, 1
      %p165 = por %p163, %p164
      %p167 = scmp.ne.s32.totalorder %s152, %s166
      %p168 = scmp.eq.s32.totalorder %s37, 0
      %p169 = por %p167, %p168
      %s171 = sadd.s32 %s170, 1
      %p174 = scmp.eq.s32.totalorder %s31, 1
      %p175 = scmp.ne.s32.totalorder %s170, %s172
      %p176 = scmp.eq.s32.totalorder %s31, 0
      %p177 = por %p175, %p176
      %p178 = scmp.ne.s32.totalorder %s170, %s172
      %p179 = scmp.eq.s32.totalorder %s36, 1
      %p180 = por %p178, %p179
      %p181 = scmp.ne.s32.totalorder %s172, %s173
      %p182 = scmp.eq.s32.totalorder %s36, 0
      %p183 = por %p181, %p182
      %p184 = scmp.ne.s32.totalorder %s172, %s173
      %p185 = scmp.eq.s32.totalorder %s37, 1
      %p186 = por %p184, %p185
      %p188 = scmp.ne.s32.totalorder %s173, %s187
      %p189 = scmp.eq.s32.totalorder %s37, 0
      %p190 = por %p188, %p189
      %s192 = sadd.s32 %s191, 1
      %p195 = scmp.eq.s32.totalorder %s31, 1
      %p196 = scmp.ne.s32.totalorder %s191, %s193
      %p197 = scmp.eq.s32.totalorder %s31, 0
      %p198 = por %p196, %p197
      %p199 = scmp.ne.s32.totalorder %s191, %s193
      %p200 = scmp.eq.s32.totalorder %s36, 1
      %p201 = por %p199, %p200
      %p202 = scmp.ne.s32.totalorder %s193, %s194
      %p203 = scmp.eq.s32.totalorder %s36, 0
      %p204 = por %p202, %p203
      %p205 = scmp.ne.s32.totalorder %s193, %s194
      %p206 = scmp.eq.s32.totalorder %s37, 1
      %p207 = por %p205, %p206
      %p209 = scmp.ne.s32.totalorder %s194, %s208
      %p210 = scmp.eq.s32.totalorder %s37, 0
      %p211 = por %p209, %p210
      %s213 = sadd.s32 %s212, 1
      %p216 = scmp.eq.s32.totalorder %s31, 1
      %p217 = scmp.ne.s32.totalorder %s212, %s214
      %p218 = scmp.eq.s32.totalorder %s31, 0
      %p219 = por %p217, %p218
      %p220 = scmp.ne.s32.totalorder %s212, %s214
      %p221 = scmp.eq.s32.totalorder %s36, 1
      %p222 = por %p220, %p221
      %p223 = scmp.ne.s32.totalorder %s214, %s215
      %p224 = scmp.eq.s32.totalorder %s36, 0
      %p225 = por %p223, %p224
      %p226 = scmp.ne.s32.totalorder %s214, %s215
      %p227 = scmp.eq.s32.totalorder %s37, 1
      %p228 = por %p226, %p227
      %p230 = scmp.ne.s32.totalorder %s215, %s229
      %p231 = scmp.eq.s32.totalorder %s37, 0
      %p232 = por %p230, %p231
      %s234 = sadd.s32 %s233, 1
      %p237 = scmp.eq.s32.totalorder %s31, 1
      %p238 = scmp.ne.s32.totalorder %s233, %s235
      %p239 = scmp.eq.s32.totalorder %s31, 0
      %p240 = por %p238, %p239
      %p241 = scmp.ne.s32.totalorder %s233, %s235
      %p242 = scmp.eq.s32.totalorder %s36, 1
      %p243 = por %p241, %p242
      %p244 = scmp.ne.s32.totalorder %s235, %s236
      %p245 = scmp.eq.s32.totalorder %s36, 0
      %p246 = por %p244, %p245
      %p247 = scmp.ne.s32.totalorder %s235, %s236
      %p248 = scmp.eq.s32.totalorder %s37, 1
      %p249 = por %p247, %p248
      %p251 = scmp.ne.s32.totalorder %s236, %s250
      %p252 = scmp.eq.s32.totalorder %s37, 0
      %p253 = por %p251, %p252
      %s255 = sadd.s32 %s254, 1
      %p258 = scmp.eq.s32.totalorder %s31, 1
      %p259 = scmp.ne.s32.totalorder %s254, %s256
      %p260 = scmp.eq.s32.totalorder %s31, 0
      %p261 = por %p259, %p260
      %p262 = scmp.ne.s32.totalorder %s254, %s256
      %p263 = scmp.eq.s32.totalorder %s36, 1
      %p264 = por %p262, %p263
      %p265 = scmp.ne.s32.totalorder %s256, %s257
      %p266 = scmp.eq.s32.totalorder %s36, 0
      %p267 = por %p265, %p266
      %p268 = scmp.ne.s32.totalorder %s256, %s257
      %p269 = scmp.eq.s32.totalorder %s37, 1
      %p270 = por %p268, %p269
      %p272 = scmp.ne.s32.totalorder %s257, %s271
      %p273 = scmp.eq.s32.totalorder %s37, 0
      %p274 = por %p272, %p273
      %s276 = sadd.s32 %s275, 1
      %p279 = scmp.eq.s32.totalorder %s31, 1
      %p280 = scmp.ne.s32.totalorder %s275, %s277
      %p281 = scmp.eq.s32.totalorder %s31, 0
      %p282 = por %p280, %p281
      %p283 = scmp.ne.s32.totalorder %s275, %s277
      %p284 = scmp.eq.s32.totalorder %s36, 1
      %p285 = por %p283, %p284
      %p286 = scmp.ne.s32.totalorder %s277, %s278
      %p287 = scmp.eq.s32.totalorder %s36, 0
      %p288 = por %p286, %p287
      %p289 = scmp.ne.s32.totalorder %s277, %s278
      %p290 = scmp.eq.s32.totalorder %s37, 1
      %p291 = por %p289, %p290
      %p293 = scmp.ne.s32.totalorder %s278, %s292
      %p294 = scmp.eq.s32.totalorder %s37, 0
      %p295 = por %p293, %p294
      %s297 = sadd.s32 %s296, 1
      %p300 = scmp.eq.s32.totalorder %s31, 1
      %p301 = scmp.ne.s32.totalorder %s296, %s298
      %p302 = scmp.eq.s32.totalorder %s31, 0
      %p303 = por %p301, %p302
      %p304 = scmp.ne.s32.totalorder %s296, %s298
      %p305 = scmp.eq.s32.totalorder %s36, 1
      %p306 = por %p304, %p305
      %p307 = scmp.ne.s32.totalorder %s298, %s299
      %p308 = scmp.eq.s32.totalorder %s36, 0
      %p309 = por %p307, %p308
      %p310 = scmp.ne.s32.totalorder %s298, %s299
      %p311 = scmp.eq.s32.totalorder %s37, 1
      %p312 = por %p310, %p311
      %p314 = scmp.ne.s32.totalorder %s299, %s313
      %p315 = scmp.eq.s32.totalorder %s37, 0
      %p316 = por %p314, %p315
      %s318 = sadd.s32 %s317, 1
      %p321 = scmp.eq.s32.totalorder %s31, 1
      %p322 = scmp.ne.s32.totalorder %s317, %s319
      %p323 = scmp.eq.s32.totalorder %s31, 0
      %p324 = por %p322, %p323
      %p325 = scmp.ne.s32.totalorder %s317, %s319
      %p326 = scmp.eq.s32.totalorder %s36, 1
      %p327 = por %p325, %p326
      %p328 = scmp.ne.s32.totalorder %s319, %s320
      %p329 = scmp.eq.s32.totalorder %s36, 0
      %p330 = por %p328, %p329
      %p331 = scmp.ne.s32.totalorder %s319, %s320
      %p332 = scmp.eq.s32.totalorder %s37, 1
      %p333 = por %p331, %p332
      %p335 = scmp.ne.s32.totalorder %s320, %s334
      %p336 = scmp.eq.s32.totalorder %s37, 0
      %p337 = por %p335, %p336
      %s339 = sadd.s32 %s338, 1
      %p342 = scmp.eq.s32.totalorder %s31, 1
      %p343 = scmp.ne.s32.totalorder %s338, %s340
      %p344 = scmp.eq.s32.totalorder %s31, 0
      %p345 = por %p343, %p344
      %p346 = scmp.ne.s32.totalorder %s338, %s340
      %p347 = scmp.eq.s32.totalorder %s36, 1
      %p348 = por %p346, %p347
      %p349 = scmp.ne.s32.totalorder %s340, %s341
      %p350 = scmp.eq.s32.totalorder %s36, 0
      %p351 = por %p349, %p350
      %p352 = scmp.ne.s32.totalorder %s340, %s341
      %p353 = scmp.eq.s32.totalorder %s37, 1
      %p354 = por %p352, %p353
      %p356 = scmp.ne.s32.totalorder %s341, %s355
      %p357 = scmp.eq.s32.totalorder %s37, 0
      %p358 = por %p356, %p357
      %s360 = sadd.s32 %s359, 1
      %p363 = scmp.eq.s32.totalorder %s31, 1
      %p364 = scmp.ne.s32.totalorder %s359, %s361
      %p365 = scmp.eq.s32.totalorder %s31, 0
      %p366 = por %p364, %p365
      %p367 = scmp.ne.s32.totalorder %s359, %s361
      %p368 = scmp.eq.s32.totalorder %s36, 1
      %p369 = por %p367, %p368
      %p370 = scmp.ne.s32.totalorder %s361, %s362
      %p371 = scmp.eq.s32.totalorder %s36, 0
      %p372 = por %p370, %p371
      %p373 = scmp.ne.s32.totalorder %s361, %s362
      %p374 = scmp.eq.s32.totalorder %s37, 1
      %p375 = por %p373, %p374
      %p377 = scmp.ne.s32.totalorder %s362, %s376
      %p378 = scmp.eq.s32.totalorder %s37, 0
      %p379 = por %p377, %p378
      %s381 = sadd.s32 %s380, 1
      %p384 = scmp.eq.s32.totalorder %s31, 1
      %p385 = scmp.ne.s32.totalorder %s380, %s382
      %p386 = scmp.eq.s32.totalorder %s31, 0
      %p387 = por %p385, %p386
      %p388 = scmp.ne.s32.totalorder %s380, %s382
      %p389 = scmp.eq.s32.totalorder %s36, 1
      %p390 = por %p388, %p389
      %p391 = scmp.ne.s32.totalorder %s382, %s383
      %p392 = scmp.eq.s32.totalorder %s36, 0
      %p393 = por %p391, %p392
      %p394 = scmp.ne.s32.totalorder %s382, %s383
      %p395 = scmp.eq.s32.totalorder %s37, 1
      %p396 = por %p394, %p395
      %p398 = scmp.ne.s32.totalorder %s383, %s397
      %p399 = scmp.eq.s32.totalorder %s37, 0
      %p400 = por %p398, %p399
      %s402 = sadd.s32 %s401, 1
      %p405 = scmp.eq.s32.totalorder %s31, 1
      %p406 = scmp.ne.s32.totalorder %s401, %s403
      %p407 = scmp.eq.s32.totalorder %s31, 0
      %p408 = por %p406, %p407
      %p409 = scmp.ne.s32.totalorder %s401, %s403
      %p410 = scmp.eq.s32.totalorder %s36, 1
      %p411 = por %p409, %p410
      %p412 = scmp.ne.s32.totalorder %s403, %s404
      %p413 = scmp.eq.s32.totalorder %s36, 0
      %p414 = por %p412, %p413
      %p415 = scmp.ne.s32.totalorder %s403, %s404
      %p416 = scmp.eq.s32.totalorder %s37, 1
      %p417 = por %p415, %p416
      %p419 = scmp.ne.s32.totalorder %s404, %s418
      %p420 = scmp.eq.s32.totalorder %s37, 0
      %p421 = por %p419, %p420
      %s423 = sadd.s32 %s422, 1
      %p426 = scmp.eq.s32.totalorder %s31, 1
      %p427 = scmp.ne.s32.totalorder %s422, %s424
      %p428 = scmp.eq.s32.totalorder %s31, 0
      %p429 = por %p427, %p428
      %p430 = scmp.ne.s32.totalorder %s422, %s424
      %p431 = scmp.eq.s32.totalorder %s36, 1
      %p432 = por %p430, %p431
      %p433 = scmp.ne.s32.totalorder %s424, %s425
      %p434 = scmp.eq.s32.totalorder %s36, 0
      %p435 = por %p433, %p434
      %p436 = scmp.ne.s32.totalorder %s424, %s425
      %p437 = scmp.eq.s32.totalorder %s37, 1
      %p438 = por %p436, %p437
      %p440 = scmp.ne.s32.totalorder %s425, %s439
      %p441 = scmp.eq.s32.totalorder %s37, 0
      %p442 = por %p440, %p441
      %s444 = sadd.s32 %s443, 1
      %p447 = scmp.eq.s32.totalorder %s31, 1
      %p448 = scmp.ne.s32.totalorder %s443, %s445
      %p449 = scmp.eq.s32.totalorder %s31, 0
      %p450 = por %p448, %p449
      %p451 = scmp.ne.s32.totalorder %s443, %s445
      %p452 = scmp.eq.s32.totalorder %s36, 1
      %p453 = por %p451, %p452
      %p454 = scmp.ne.s32.totalorder %s445, %s446
      %p455 = scmp.eq.s32.totalorder %s36, 0
      %p456 = por %p454, %p455
      %p457 = scmp.ne.s32.totalorder %s445, %s446
      %p458 = scmp.eq.s32.totalorder %s37, 1
      %p459 = por %p457, %p458
      %p461 = scmp.ne.s32.totalorder %s446, %s460
      %p462 = scmp.eq.s32.totalorder %s37, 0
      %p463 = por %p461, %p462
      %s464 = ssub.s32 %s31, %s38
      %p465 = scmp.eq.s32.totalorder %s464, 0
      %s467 = sadd.s32 %s466, 1
      %s468 = scalar_select %p465, %s466, %s467
      %p471 = pneg %p465
      %p472 = scmp.eq.s32.totalorder %s31, 1
      %p473 = por %p471, %p472
      %p474 = scmp.ne.s32.totalorder %s466, %s469
      %p475 = scmp.eq.s32.totalorder %s31, 0
      %p476 = por %p474, %p475
      %p477 = scmp.ne.s32.totalorder %s466, %s469
      %p478 = scmp.eq.s32.totalorder %s36, 1
      %p479 = por %p477, %p478
      %p480 = scmp.ne.s32.totalorder %s469, %s470
      %p481 = scmp.eq.s32.totalorder %s36, 0
      %p482 = por %p480, %p481
      %p483 = scmp.ne.s32.totalorder %s469, %s470
      %p484 = scmp.eq.s32.totalorder %s37, 1
      %p485 = por %p483, %p484
      %p487 = scmp.ne.s32.totalorder %s470, %s486
      %p488 = scmp.eq.s32.totalorder %s37, 0
      %p489 = por %p487, %p488
      %p490 = scmp.le.s32.totalorder 1, %s31
      %p491 = scmp.lt.s32.totalorder %s31, 3
      %p492 = pnand %p490, %p491
      %p493 = pneg %p492
      // Predicated region
      $region9: #{text_cct_forward.1} parent=5 // pred_check
        _
      $region10: #{text_cct_forward.1} parent=5 // pred_check_branch
        %495 = sbr.rel (%p492) target = $region12
      $region11: #{text_cct_forward.1} parent=5 // pred_region
        %s496 = ssub.s32 %s31, 1
        // Predicated region
        $region13: #{text_cct_forward.1} parent=11 // pred_check
          %p497 = pneg %p78
        $region14: #{text_cct_forward.1} parent=11 // pred_check_branch
          %499 = sbr.rel (%p497) target = $region16
        $region15: #{text_cct_forward.1} parent=11 // pred_region
          _
        $region16: #{text_cct_forward.1} parent=11 // pred_fallthru
          _
        // Predicated region
        $region17: #{text_cct_forward.1} parent=11 // pred_check
          %p500 = pneg %p99
        $region18: #{text_cct_forward.1} parent=11 // pred_check_branch
          %502 = sbr.rel (%p500) target = $region20
        $region19: #{text_cct_forward.1} parent=11 // pred_region
          _
        $region20: #{text_cct_forward.1} parent=11 // pred_fallthru
          _
        // Predicated region
        $region21: #{text_cct_forward.1} parent=11 // pred_check
          %p503 = pneg %p120
        $region22: #{text_cct_forward.1} parent=11 // pred_check_branch
          %505 = sbr.rel (%p503) target = $region24
        $region23: #{text_cct_forward.1} parent=11 // pred_region
          _
        $region24: #{text_cct_forward.1} parent=11 // pred_fallthru
          _
        // Predicated region
        $region25: #{text_cct_forward.1} parent=11 // pred_check
          %p506 = pneg %p141
        $region26: #{text_cct_forward.1} parent=11 // pred_check_branch
          %508 = sbr.rel (%p506) target = $region28
        $region27: #{text_cct_forward.1} parent=11 // pred_region
          _
        $region28: #{text_cct_forward.1} parent=11 // pred_fallthru
          _
        // Predicated region
        $region29: #{text_cct_forward.1} parent=11 // pred_check
          %p509 = pneg %p162
        $region30: #{text_cct_forward.1} parent=11 // pred_check_branch
          %511 = sbr.rel (%p509) target = $region32
        $region31: #{text_cct_forward.1} parent=11 // pred_region
          _
        $region32: #{text_cct_forward.1} parent=11 // pred_fallthru
          _
        // Predicated region
        $region33: #{text_cct_forward.1} parent=11 // pred_check
          %p512 = pneg %p183
        $region34: #{text_cct_forward.1} parent=11 // pred_check_branch
          %514 = sbr.rel (%p512) target = $region36
        $region35: #{text_cct_forward.1} parent=11 // pred_region
          _
        $region36: #{text_cct_forward.1} parent=11 // pred_fallthru
          _
        // Predicated region
        $region37: #{text_cct_forward.1} parent=11 // pred_check
          %p515 = pneg %p204
        $region38: #{text_cct_forward.1} parent=11 // pred_check_branch
          %517 = sbr.rel (%p515) target = $region40
        $region39: #{text_cct_forward.1} parent=11 // pred_region
          _
        $region40: #{text_cct_forward.1} parent=11 // pred_fallthru
          _
        // Predicated region
        $region41: #{text_cct_forward.1} parent=11 // pred_check
          %p518 = pneg %p225
        $region42: #{text_cct_forward.1} parent=11 // pred_check_branch
          %520 = sbr.rel (%p518) target = $region44
        $region43: #{text_cct_forward.1} parent=11 // pred_region
          _
        $region44: #{text_cct_forward.1} parent=11 // pred_fallthru
          _
        // Predicated region
        $region45: #{text_cct_forward.1} parent=11 // pred_check
          %p521 = pneg %p246
        $region46: #{text_cct_forward.1} parent=11 // pred_check_branch
          %523 = sbr.rel (%p521) target = $region48
        $region47: #{text_cct_forward.1} parent=11 // pred_region
          _
        $region48: #{text_cct_forward.1} parent=11 // pred_fallthru
          _
        // Predicated region
        $region49: #{text_cct_forward.1} parent=11 // pred_check
          %p524 = pneg %p267
        $region50: #{text_cct_forward.1} parent=11 // pred_check_branch
          %526 = sbr.rel (%p524) target = $region52
        $region51: #{text_cct_forward.1} parent=11 // pred_region
          _
        $region52: #{text_cct_forward.1} parent=11 // pred_fallthru
          _
        // Predicated region
        $region53: #{text_cct_forward.1} parent=11 // pred_check
          %p527 = pneg %p288
        $region54: #{text_cct_forward.1} parent=11 // pred_check_branch
          %529 = sbr.rel (%p527) target = $region56
        $region55: #{text_cct_forward.1} parent=11 // pred_region
          _
        $region56: #{text_cct_forward.1} parent=11 // pred_fallthru
          _
        // Predicated region
        $region57: #{text_cct_forward.1} parent=11 // pred_check
          %p530 = pneg %p309
        $region58: #{text_cct_forward.1} parent=11 // pred_check_branch
          %532 = sbr.rel (%p530) target = $region60
        $region59: #{text_cct_forward.1} parent=11 // pred_region
          _
        $region60: #{text_cct_forward.1} parent=11 // pred_fallthru
          _
        // Predicated region
        $region61: #{text_cct_forward.1} parent=11 // pred_check
          %p533 = pneg %p330
        $region62: #{text_cct_forward.1} parent=11 // pred_check_branch
          %535 = sbr.rel (%p533) target = $region64
        $region63: #{text_cct_forward.1} parent=11 // pred_region
          _
        $region64: #{text_cct_forward.1} parent=11 // pred_fallthru
          _
        // Predicated region
        $region65: #{text_cct_forward.1} parent=11 // pred_check
          %p536 = pneg %p351
        $region66: #{text_cct_forward.1} parent=11 // pred_check_branch
          %538 = sbr.rel (%p536) target = $region68
        $region67: #{text_cct_forward.1} parent=11 // pred_region
          _
        $region68: #{text_cct_forward.1} parent=11 // pred_fallthru
          _
        // Predicated region
        $region69: #{text_cct_forward.1} parent=11 // pred_check
          %p539 = pneg %p372
        $region70: #{text_cct_forward.1} parent=11 // pred_check_branch
          %541 = sbr.rel (%p539) target = $region72
        $region71: #{text_cct_forward.1} parent=11 // pred_region
          _
        $region72: #{text_cct_forward.1} parent=11 // pred_fallthru
          _
        // Predicated region
        $region73: #{text_cct_forward.1} parent=11 // pred_check
          %p542 = pneg %p393
        $region74: #{text_cct_forward.1} parent=11 // pred_check_branch
          %544 = sbr.rel (%p542) target = $region76
        $region75: #{text_cct_forward.1} parent=11 // pred_region
          _
        $region76: #{text_cct_forward.1} parent=11 // pred_fallthru
          _
        // Predicated region
        $region77: #{text_cct_forward.1} parent=11 // pred_check
          %p545 = pneg %p414
        $region78: #{text_cct_forward.1} parent=11 // pred_check_branch
          %547 = sbr.rel (%p545) target = $region80
        $region79: #{text_cct_forward.1} parent=11 // pred_region
          _
        $region80: #{text_cct_forward.1} parent=11 // pred_fallthru
          _
        // Predicated region
        $region81: #{text_cct_forward.1} parent=11 // pred_check
          %p548 = pneg %p435
        $region82: #{text_cct_forward.1} parent=11 // pred_check_branch
          %550 = sbr.rel (%p548) target = $region84
        $region83: #{text_cct_forward.1} parent=11 // pred_region
          _
        $region84: #{text_cct_forward.1} parent=11 // pred_fallthru
          _
        // Predicated region
        $region85: #{text_cct_forward.1} parent=11 // pred_check
          %p551 = pneg %p456
        $region86: #{text_cct_forward.1} parent=11 // pred_check_branch
          %553 = sbr.rel (%p551) target = $region88
        $region87: #{text_cct_forward.1} parent=11 // pred_region
          _
        $region88: #{text_cct_forward.1} parent=11 // pred_fallthru
          _
      $region12: #{text_cct_forward.1} parent=5 // pred_fallthru
        _
      %p554 = scmp.lt.s32.totalorder %s31, 2
      // Predicated region
      $region89: #{text_cct_forward.1} parent=5 // pred_check
        %p555 = pneg %p554
      $region90: #{text_cct_forward.1} parent=5 // pred_check_branch
        %557 = sbr.rel (%p555) target = $region92
      $region91: #{text_cct_forward.1} parent=5 // pred_region
        // Predicated region
        $region93: #{text_cct_forward.1} parent=91 // pred_check
          %p558 = pneg %p51
        $region94: #{text_cct_forward.1} parent=91 // pred_check_branch
          %560 = sbr.rel (%p558) target = $region96
        $region95: #{text_cct_forward.1} parent=91 // pred_region
          %p561 = scmp.lt.s32.totalorder %s31, 1
          %s562 = scalar_select %p561, %s31, 1
          %s563 = smul.addr %s562, 2
          %s564 = smul.addr %s563, 8
          %s565 = scalar_lea.vmem %s0, %s564
        $region96: #{text_cct_forward.1} parent=91 // pred_fallthru
          _
      $region92: #{text_cct_forward.1} parent=5 // pred_fallthru
        _
      %p566 = scmp.le.s32.totalorder 1, %s31
      %p567 = scmp.lt.s32.totalorder %s31, 3
      %p568 = pnand %p566, %p567
      %p569 = pneg %p568
      // Predicated region
      $region97: #{text_cct_forward.1} parent=5 // pred_check
        _
      $region98: #{text_cct_forward.1} parent=5 // pred_check_branch
        %571 = sbr.rel (%p568) target = $region100
      $region99: #{text_cct_forward.1} parent=5 // pred_region
        %s572 = ssub.s32 %s31, 1
        %p573 = scmp.lt.s32.totalorder %s36, 1
        %s574 = scalar_select %p573, %s36, 1
        %s575 = smul.addr %s574, 2
        %s576 = smul.addr %s575, 8
        %s577 = scalar_lea.vmem %s0, %s576
        %p578 = pneg %p57
        %p579 = pneg %p54
        %p580 = pneg %p78
        %p581 = pneg %p75
        %p582 = pneg %p99
        %p583 = pneg %p96
        %p584 = pneg %p120
        %p585 = pneg %p117
        %p586 = pneg %p141
        %p587 = pneg %p138
        %p588 = pneg %p162
        %p589 = pneg %p159
        %p590 = pneg %p183
        %p591 = pneg %p180
        %p592 = pneg %p204
        %p593 = pneg %p201
        %p594 = pneg %p225
        %p595 = pneg %p222
        %p596 = pneg %p246
        %p597 = pneg %p243
        %p598 = pneg %p267
        %p599 = pneg %p264
        %p600 = pneg %p288
        %p601 = pneg %p285
        %p602 = pneg %p309
        %p603 = pneg %p306
        %p604 = pneg %p330
        %p605 = pneg %p327
        %p606 = pneg %p351
        %p607 = pneg %p348
        %p608 = pneg %p372
        %p609 = pneg %p369
        %p610 = pneg %p393
        %p611 = pneg %p390
        %p612 = pneg %p414
        %p613 = pneg %p411
        %p614 = pneg %p435
        %p615 = pneg %p432
        %p616 = pneg %p456
        %p617 = pneg %p453
        %p618 = pneg %p482
        %p619 = pneg %p479
        %s620 = sand.u32 %s469, 1
        %s621 = scalar_lea.sflag [#allocation4], %s620
        %s622 = sand.u32 %s469, 1
        %s623 = scalar_lea.vmem [#allocation3], %s622
        %p624 = scmp.lt.s32.totalorder %s36, 1
        %s625 = scalar_select %p624, %s36, 1
        %s626 = smul.addr %s625, 2
        %s627 = smul.addr %s626, 8
        %s628 = scalar_lea.vmem %s0, %s627
        %v630 = vld [vmem:[%s628] sm:$0xff]
        %v631 = vld [vmem:[%s628 + $0x8] sm:$0x3]
        %v632 = vld [vmem:[%s1] sm:$0xf]
        %v633 = vld [vmem:[%s1 + $0x4] sm:$0xf]
        %v634 = vld [vmem:[%s1 + $0x8] sm:$0xf]
        %v635 = vld [vmem:[%s1 + $0xc] sm:$0xf]
        %v636 = vpack.c.bf16 %v631, %v630
        %v637 = vld [vmem:[%s1 + $0x10] sm:$0xf]
        %v638 = vld [vmem:[%s1 + $0x14] sm:$0xf]
        %v639 = vld [vmem:[%s1 + $0x18] sm:$0xf]
        %v640 = vld [vmem:[%s1 + $0x1c] sm:$0xf]
        %v642 = vshrl.u32 %v636, 16
        %v644 = vshll.u32 %v636, 16
        %v646 = vrot.slane %v644, 1
        %v647 = vor.u32 %v642, %v646
        %v652 = vunpack.c.l.b16 %v637
        %v653 = vunpack.c.l.b16 %v638
        %v654 = vunpack.c.l.b16 %v639
        %v655 = vunpack.c.l.b16 %v640
        %v656 = vpack.c.b16 %v653, %v652
        %v657 = vpack.c.b16 %v655, %v654
        %vm660 = vcmask 261120
        %v662 = vsel %vm660, %v647, 0
        %664 = vmatprep.subr.bf16.mxu0 0
        %665 = vmatpush1.bf16.msra.mxu0 0
        %666 = vmatprep.subr.bf16.mxu0 0
        %667 = vmatpush1.bf16.msra.mxu0 0
        %668 = vmatprep.subr.bf16.mxu0 0
        %669 = vmatpush1.bf16.msra.mxu0 0
        %670 = vmatprep.subr.bf16.mxu0 0
        %671 = vmatpush1.bf16.msra.mxu0 0
        %672 = vmatprep.subr.bf16.mxu0 0
        %673 = vmatpush1.bf16.msra.mxu0 0
        %674 = vmatprep.subr.bf16.mxu0 0
        %675 = vmatpush1.bf16.msra.mxu0 0
        %676 = vmatprep.subr.bf16.mxu0 0
        %677 = vmatpush1.bf16.msra.mxu0 %v657
        %678 = vmatprep.subr.bf16.mxu0 0
        %679 = vmatpush1.bf16.msra.mxu0 %v656
        %680 = vmatprep.subr.bf16.mxu0 0
        %681 = vmatpush2.bf16.msra.mxu0 0
        %682 = vmatprep.subr.bf16.mxu0 0
        %683 = vmatpush2.bf16.msra.mxu0 0
        %684 = vmatprep.subr.bf16.mxu0 0
        %685 = vmatpush2.bf16.msra.mxu0 0
        %686 = vmatprep.subr.bf16.mxu0 0
        %687 = vmatpush2.bf16.msra.mxu0 0
        %688 = vmatprep.subr.bf16.mxu0 0
        %689 = vmatpush2.bf16.msra.mxu0 0
        %690 = vmatprep.subr.bf16.mxu0 0
        %691 = vmatpush2.bf16.msra.mxu0 0
        %692 = vmatprep.subr.bf16.mxu0 0
        %693 = vmatpush2.bf16.msra.mxu0 0
        %694 = vmatprep.subr.bf16.mxu0 0
        %695 = vmatpush2.bf16.msra.mxu0 0
        %696 = vmatprep.mubr.bf16.mxu0 0
        %697 = vmatmul.mubr.bf16.gmra.mxu0 %v662
        %v698 = vpop.f32.mrf.mxu0
        %v699 = vadd.f32 0.0, %v698
        %v700 = vpop.f32.mrf.mxu0
        %v701 = vpop.f32.mrf.mxu0
        %v702 = vadd.f32 0.0, %v701
        %v703 = vpop.f32.mrf.mxu0
        %704 = vdwg.mxu0
        %v709 = vunpack.c.l.b16 %v632
        %v710 = vunpack.c.l.b16 %v633
        %v711 = vunpack.c.l.b16 %v634
        %v712 = vunpack.c.l.b16 %v635
        %v713 = vpack.c.b16 %v710, %v709
        %v714 = vpack.c.b16 %v712, %v711
        %v717 = vsel %vm660, %v636, 0
        %719 = vmatprep.subr.bf16.mxu0 0
        %720 = vmatpush1.bf16.msra.mxu0 0
        %721 = vmatprep.subr.bf16.mxu0 0
        %722 = vmatpush1.bf16.msra.mxu0 0
        %723 = vmatprep.subr.bf16.mxu0 0
        %724 = vmatpush1.bf16.msra.mxu0 0
        %725 = vmatprep.subr.bf16.mxu0 0
        %726 = vmatpush1.bf16.msra.mxu0 0
        %727 = vmatprep.subr.bf16.mxu0 0
        %728 = vmatpush1.bf16.msra.mxu0 0
        %729 = vmatprep.subr.bf16.mxu0 0
        %730 = vmatpush1.bf16.msra.mxu0 0
        %731 = vmatprep.subr.bf16.mxu0 0
        %732 = vmatpush1.bf16.msra.mxu0 %v714
        %733 = vmatprep.subr.bf16.mxu0 0
        %734 = vmatpush1.bf16.msra.mxu0 %v713
        %735 = vmatprep.subr.bf16.mxu0 0
        %736 = vmatpush2.bf16.msra.mxu0 0
        %737 = vmatprep.subr.bf16.mxu0 0
        %738 = vmatpush2.bf16.msra.mxu0 0
        %739 = vmatprep.subr.bf16.mxu0 0
        %740 = vmatpush2.bf16.msra.mxu0 0
        %741 = vmatprep.subr.bf16.mxu0 0
        %742 = vmatpush2.bf16.msra.mxu0 0
        %743 = vmatprep.subr.bf16.mxu0 0
        %744 = vmatpush2.bf16.msra.mxu0 0
        %745 = vmatprep.subr.bf16.mxu0 0
        %746 = vmatpush2.bf16.msra.mxu0 0
        %747 = vmatprep.subr.bf16.mxu0 0
        %748 = vmatpush2.bf16.msra.mxu0 0
        %749 = vmatprep.subr.bf16.mxu0 0
        %750 = vmatpush2.bf16.msra.mxu0 0
        %751 = vmatprep.mubr.bf16.mxu0 0
        %752 = vmatmul.mubr.bf16.gmra.mxu0 %v717
        %v753 = vpop.f32.mrf.mxu0
        %v754 = vadd.f32 %v699, %v753
        %v755 = vpop.f32.mrf.mxu0
        %v756 = vpop.f32.mrf.mxu0
        %v757 = vadd.f32 %v702, %v756
        %v758 = vpop.f32.mrf.mxu0
        %759 = vdwg.mxu0
        %v760 = vmax.f32 %v754, 0.0
        %v761 = vmax.f32 %v757, 0.0
        %v762 = vlaneseq
        %v763 = vshrl.u32 %v762, 7
        %v764 = vlaneseq
        %v765 = vand.u32 %v764, 127
        %v766 = vmul.u32 %v763, 2
        %v767 = vsub.s32 %v766, 1
        %vm768 = vcmp.eq.s32.totalorder %v765, %v767
        %v769 = vsel %vm768, 1, 0
        %v770 = vcvt.s32.f32 %v769
        %vm771 = vcmask 72704
        %v773 = vsel %vm771, %v770, 0
        %vm775 = vcmask 1040384
        %v777 = vsel %vm775, %v761, 0
        %779 = vmatprep.subr.mxu0 0.0
        %780 = vmatpush1.msra.mxu0 0.0
        %781 = vmatprep.subr.mxu0 0.0
        %782 = vmatpush1.msra.mxu0 0.0
        %783 = vmatprep.subr.mxu0 0.0
        %784 = vmatpush1.msra.mxu0 0.0
        %785 = vmatprep.subr.mxu0 0.0
        %786 = vmatpush1.msra.mxu0 0.0
        %787 = vmatprep.subr.mxu0 0.0
        %788 = vmatpush1.msra.mxu0 0.0
        %789 = vmatprep.subr.mxu0 0.0
        %790 = vmatpush1.msra.mxu0 0.0
        %791 = vmatprep.subr.mxu0 0.0
        %792 = vmatpush1.msra.mxu0 0.0
        %793 = vmatprep.subr.mxu0 0.0
        %794 = vmatpush1.msra.mxu0 0.0
        %795 = vmatprep.subr.mxu0 0.0
        %796 = vmatpush1.msra.mxu0 0.0
        %797 = vmatprep.subr.mxu0 0.0
        %798 = vmatpush1.msra.mxu0 0.0
        %799 = vmatprep.subr.mxu0 0.0
        %800 = vmatpush1.msra.mxu0 0.0
        %801 = vmatprep.subr.mxu0 0.0
        %802 = vmatpush1.msra.mxu0 0.0
        %803 = vmatprep.subr.mxu0 0.0
        %804 = vmatpush1.msra.mxu0 0.0
        %805 = vmatprep.subr.mxu0 0.0
        %806 = vmatpush1.msra.mxu0 0.0
        %807 = vmatprep.subr.mxu0 0.0
        %808 = vmatpush1.msra.mxu0 %v777
        %809 = vmatprep.subr.mxu0 0.0
        %810 = vmatpush1.msra.mxu0 %v760
        %811 = vmatprep.subr.mxu0 0.0
        %812 = vmatpush2.msra.mxu0 0.0
        %813 = vmatprep.subr.mxu0 0.0
        %814 = vmatpush2.msra.mxu0 0.0
        %815 = vmatprep.subr.mxu0 0.0
        %816 = vmatpush2.msra.mxu0 0.0
        %817 = vmatprep.subr.mxu0 0.0
        %818 = vmatpush2.msra.mxu0 0.0
        %819 = vmatprep.subr.mxu0 0.0
        %820 = vmatpush2.msra.mxu0 0.0
        %821 = vmatprep.subr.mxu0 0.0
        %822 = vmatpush2.msra.mxu0 0.0
        %823 = vmatprep.subr.mxu0 0.0
        %824 = vmatpush2.msra.mxu0 0.0
        %825 = vmatprep.subr.mxu0 0.0
        %826 = vmatpush2.msra.mxu0 0.0
        %827 = vmatprep.subr.mxu0 0.0
        %828 = vmatpush2.msra.mxu0 0.0
        %829 = vmatprep.subr.mxu0 0.0
        %830 = vmatpush2.msra.mxu0 0.0
        %831 = vmatprep.subr.mxu0 0.0
        %832 = vmatpush2.msra.mxu0 0.0
        %833 = vmatprep.subr.mxu0 0.0
        %834 = vmatpush2.msra.mxu0 0.0
        %835 = vmatprep.subr.mxu0 0.0
        %836 = vmatpush2.msra.mxu0 0.0
        %837 = vmatprep.subr.mxu0 0.0
        %838 = vmatpush2.msra.mxu0 0.0
        %839 = vmatprep.subr.mxu0 0.0
        %840 = vmatpush2.msra.mxu0 0.0
        %841 = vmatprep.subr.mxu0 0.0
        %842 = vmatpush2.msra.mxu0 0.0
        %843 = vmatprep.mubr.f32.mxu0 0.0
        %844 = vmatmul.mubr.f32.gmra.mxu0 %v773
        %v845 = vpop.f32.mrf.mxu0
        %v846 = vadd.f32 0.0, %v845
        %v847 = vpop.f32.mrf.mxu0
        %848 = vdwg.mxu0
        %vm849 = vcmp.eq.s32.totalorder %v765, %v766
        %v850 = vsel %vm849, 1, 0
        %v851 = vcvt.s32.f32 %v850
        %v853 = vsel %vm771, %v851, 0
        %855 = vmatprep.subr.mxu0 0.0
        %856 = vmatpush1.msra.mxu0 0.0
        %857 = vmatprep.subr.mxu0 0.0
        %858 = vmatpush1.msra.mxu0 0.0
        %859 = vmatprep.subr.mxu0 0.0
        %860 = vmatpush1.msra.mxu0 0.0
        %861 = vmatprep.subr.mxu0 0.0
        %862 = vmatpush1.msra.mxu0 0.0
        %863 = vmatprep.subr.mxu0 0.0
        %864 = vmatpush1.msra.mxu0 0.0
        %865 = vmatprep.subr.mxu0 0.0
        %866 = vmatpush1.msra.mxu0 0.0
        %867 = vmatprep.subr.mxu0 0.0
        %868 = vmatpush1.msra.mxu0 0.0
        %869 = vmatprep.subr.mxu0 0.0
        %870 = vmatpush1.msra.mxu0 0.0
        %871 = vmatprep.subr.mxu0 0.0
        %872 = vmatpush1.msra.mxu0 0.0
        %873 = vmatprep.subr.mxu0 0.0
        %874 = vmatpush1.msra.mxu0 0.0
        %875 = vmatprep.subr.mxu0 0.0
        %876 = vmatpush1.msra.mxu0 0.0
        %877 = vmatprep.subr.mxu0 0.0
        %878 = vmatpush1.msra.mxu0 0.0
        %879 = vmatprep.subr.mxu0 0.0
        %880 = vmatpush1.msra.mxu0 0.0
        %881 = vmatprep.subr.mxu0 0.0
        %882 = vmatpush1.msra.mxu0 0.0
        %883 = vmatprep.subr.mxu0 0.0
        %884 = vmatpush1.msra.mxu0 %v777
        %885 = vmatprep.subr.mxu0 0.0
        %886 = vmatpush1.msra.mxu0 %v760
        %887 = vmatprep.subr.mxu0 0.0
        %888 = vmatpush2.msra.mxu0 0.0
        %889 = vmatprep.subr.mxu0 0.0
        %890 = vmatpush2.msra.mxu0 0.0
        %891 = vmatprep.subr.mxu0 0.0
        %892 = vmatpush2.msra.mxu0 0.0
        %893 = vmatprep.subr.mxu0 0.0
        %894 = vmatpush2.msra.mxu0 0.0
        %895 = vmatprep.subr.mxu0 0.0
        %896 = vmatpush2.msra.mxu0 0.0
        %897 = vmatprep.subr.mxu0 0.0
        %898 = vmatpush2.msra.mxu0 0.0
        %899 = vmatprep.subr.mxu0 0.0
        %900 = vmatpush2.msra.mxu0 0.0
        %901 = vmatprep.subr.mxu0 0.0
        %902 = vmatpush2.msra.mxu0 0.0
        %903 = vmatprep.subr.mxu0 0.0
        %904 = vmatpush2.msra.mxu0 0.0
        %905 = vmatprep.subr.mxu0 0.0
        %906 = vmatpush2.msra.mxu0 0.0
        %907 = vmatprep.subr.mxu0 0.0
        %908 = vmatpush2.msra.mxu0 0.0
        %909 = vmatprep.subr.mxu0 0.0
        %910 = vmatpush2.msra.mxu0 0.0
        %911 = vmatprep.subr.mxu0 0.0
        %912 = vmatpush2.msra.mxu0 0.0
        %913 = vmatprep.subr.mxu0 0.0
        %914 = vmatpush2.msra.mxu0 0.0
        %915 = vmatprep.subr.mxu0 0.0
        %916 = vmatpush2.msra.mxu0 0.0
        %917 = vmatprep.subr.mxu0 0.0
        %918 = vmatpush2.msra.mxu0 0.0
        %919 = vmatprep.mubr.f32.mxu0 0.0
        %920 = vmatmul.mubr.f32.gmra.mxu0 %v853
        %v921 = vpop.f32.mrf.mxu0
        %v922 = vadd.f32 0.0, %v921
        %v923 = vpop.f32.mrf.mxu0
        %924 = vdwg.mxu0
        %v925 = vmax.f32 %v846, %v922
        %v926 = vld [vmem:[%s2] sm:$0x1f]
        %v927 = vadd.f32 %v925, %v926
        %v928 = vld [vmem:[%s3] sm:$0x1]
        %v929 = vld [vmem:[%s4] sm:$0x1]
        %vm930 = vcmask 258048
        %v931 = vsel %vm930, %v927, 0.0
        %932 = vadd.xlane.f32.xlu0 %v931
        %v933 = vpop.xlane.xlu0 %932
        %v934 = vrcp.pop 32.0
        %v935 = vmul.f32 %v933, %v934
        %v936 = vsub.f32 %v927, %v935
        %v937 = vmul.f32 %v936, %v936
        %v938 = vsel %vm930, %v937, 0.0
        %939 = vadd.xlane.f32.xlu0 %v938
        %v940 = vpop.xlane.xlu0 %939
        %v941 = vmul.f32 %v940, %v934
        %v942 = vadd.f32 %v941, 1e-05
        %v943 = vrsqrt.pop %v942
        %v944 = vmul.f32 %v936, %v943
        %v945 = vlaneseq
        %v946 = vshrl.u32 %v945, 7
        %v947 = vsub.s32 0, %v946
        %v948 = vrot.slane %v928, %v947
        %v949 = vmul.f32 %v944, %v948
        %v950 = vlaneseq
        %v951 = vshrl.u32 %v950, 7
        %v952 = vsub.s32 0, %v951
        %v953 = vrot.slane %v929, %v952
        %v954 = vadd.f32 %v949, %v953
        %v955 = vld [vmem:[%s5] sm:$0xf]
        %v956 = vld [vmem:[%s5 + $0x4] sm:$0xf]
        %v957 = vld [vmem:[%s5 + $0x8] sm:$0xf]
        %v958 = vld [vmem:[%s5 + $0xc] sm:$0xf]
        %v959 = vpack.c.bf16 %v954, %v954
        %v964 = vunpack.c.l.b16 %v955
        %v965 = vunpack.c.l.b16 %v956
        %v966 = vunpack.c.l.b16 %v957
        %v967 = vunpack.c.l.b16 %v958
        %v968 = vpack.c.b16 %v965, %v964
        %v969 = vpack.c.b16 %v967, %v966
        %v973 = vsel %vm660, %v959, 0
        %975 = vmatprep.subr.bf16.mxu0 0
        %976 = vmatpush1.bf16.msra.mxu0 0
        %977 = vmatprep.subr.bf16.mxu0 0
        %978 = vmatpush1.bf16.msra.mxu0 0
        %979 = vmatprep.subr.bf16.mxu0 0
        %980 = vmatpush1.bf16.msra.mxu0 0
        %981 = vmatprep.subr.bf16.mxu0 0
        %982 = vmatpush1.bf16.msra.mxu0 0
        %983 = vmatprep.subr.bf16.mxu0 0
        %984 = vmatpush1.bf16.msra.mxu0 0
        %985 = vmatprep.subr.bf16.mxu0 0
        %986 = vmatpush1.bf16.msra.mxu0 0
        %987 = vmatprep.subr.bf16.mxu0 0
        %988 = vmatpush1.bf16.msra.mxu0 %v969
        %989 = vmatprep.subr.bf16.mxu0 0
        %990 = vmatpush1.bf16.msra.mxu0 %v968
        %991 = vmatprep.subr.bf16.mxu0 0
        %992 = vmatpush2.bf16.msra.mxu0 0
        %993 = vmatprep.subr.bf16.mxu0 0
        %994 = vmatpush2.bf16.msra.mxu0 0
        %995 = vmatprep.subr.bf16.mxu0 0
        %996 = vmatpush2.bf16.msra.mxu0 0
        %997 = vmatprep.subr.bf16.mxu0 0
        %998 = vmatpush2.bf16.msra.mxu0 0
        %999 = vmatprep.subr.bf16.mxu0 0
        %1000 = vmatpush2.bf16.msra.mxu0 0
        %1001 = vmatprep.subr.bf16.mxu0 0
        %1002 = vmatpush2.bf16.msra.mxu0 0
        %1003 = vmatprep.subr.bf16.mxu0 0
        %1004 = vmatpush2.bf16.msra.mxu0 0
        %1005 = vmatprep.subr.bf16.mxu0 0
        %1006 = vmatpush2.bf16.msra.mxu0 0
        %1007 = vmatprep.mubr.bf16.mxu0 0
        %1008 = vmatmul.mubr.bf16.gmra.mxu0 %v973
        %v1009 = vpop.f32.mrf.mxu0
        %v1010 = vadd.f32 0.0, %v1009
        %v1011 = vpop.f32.mrf.mxu0
        %v1012 = vpop.f32.mrf.mxu0
        %v1013 = vpop.f32.mrf.mxu0
        %1014 = vdwg.mxu0
        %v1015 = vld [vmem:[%s6] sm:$0xf]
        %v1016 = vld [vmem:[%s6 + $0x4] sm:$0xf]
        %v1017 = vld [vmem:[%s6 + $0x8] sm:$0xf]
        %v1018 = vld [vmem:[%s6 + $0xc] sm:$0xf]
        %1020 = vrot.lane.b32.xlu0 %v1010, 96
        %v1021 = vpop.permute.xlu0 %1020
        %vm1022 = vcmask 130048
        %v1023 = vsel %vm1022, %v1010, 0
        %v1025 = vsel %vm1022, %v1021, 0
        %1027 = vmatprep.subr.mxu0 0.0
        %1028 = vmatpush1.xpose.msra.mxu0 0.0
        %1029 = vmatprep.subr.mxu0 0.0
        %1030 = vmatpush1.xpose.msra.mxu0 0.0
        %1031 = vmatprep.subr.mxu0 0.0
        %1032 = vmatpush1.xpose.msra.mxu0 0.0
        %1033 = vmatprep.subr.mxu0 0.0
        %1034 = vmatpush1.xpose.msra.mxu0 0.0
        %1035 = vmatprep.subr.mxu0 0.0
        %1036 = vmatpush1.xpose.msra.mxu0 0.0
        %1037 = vmatprep.subr.mxu0 0.0
        %1038 = vmatpush1.xpose.msra.mxu0 0.0
        %1039 = vmatprep.subr.mxu0 0.0
        %1040 = vmatpush1.xpose.msra.mxu0 0.0
        %1041 = vmatprep.subr.mxu0 0.0
        %1042 = vmatpush1.xpose.msra.mxu0 0.0
        %1043 = vmatprep.subr.mxu0 0.0
        %1044 = vmatpush1.xpose.msra.mxu0 0.0
        %1045 = vmatprep.subr.mxu0 0.0
        %1046 = vmatpush1.xpose.msra.mxu0 0.0
        %1047 = vmatprep.subr.mxu0 0.0
        %1048 = vmatpush1.xpose.msra.mxu0 0.0
        %1049 = vmatprep.subr.mxu0 0.0
        %1050 = vmatpush1.xpose.msra.mxu0 0.0
        %1051 = vmatprep.subr.mxu0 0.0
        %1052 = vmatpush1.xpose.msra.mxu0 0.0
        %1053 = vmatprep.subr.mxu0 0.0
        %1054 = vmatpush1.xpose.msra.mxu0 0.0
        %1055 = vmatprep.subr.mxu0 0.0
        %1056 = vmatpush1.xpose.msra.mxu0 0.0
        %1057 = vmatprep.subr.mxu0 0.0
        %1058 = vmatpush1.xpose.msra.mxu0 %v1025
        %1059 = vmatprep.subr.mxu0 0.0
        %1060 = vmatpush2.xpose.msra.mxu0 0.0
        %1061 = vmatprep.subr.mxu0 0.0
        %1062 = vmatpush2.xpose.msra.mxu0 0.0
        %1063 = vmatprep.subr.mxu0 0.0
        %1064 = vmatpush2.xpose.msra.mxu0 0.0
        %1065 = vmatprep.subr.mxu0 0.0
        %1066 = vmatpush2.xpose.msra.mxu0 0.0
        %1067 = vmatprep.subr.mxu0 0.0
        %1068 = vmatpush2.xpose.msra.mxu0 0.0
        %1069 = vmatprep.subr.mxu0 0.0
        %1070 = vmatpush2.xpose.msra.mxu0 0.0
        %1071 = vmatprep.subr.mxu0 0.0
        %1072 = vmatpush2.xpose.msra.mxu0 0.0
        %1073 = vmatprep.subr.mxu0 0.0
        %1074 = vmatpush2.xpose.msra.mxu0 0.0
        %1075 = vmatprep.subr.mxu0 0.0
        %1076 = vmatpush2.xpose.msra.mxu0 0.0
        %1077 = vmatprep.subr.mxu0 0.0
        %1078 = vmatpush2.xpose.msra.mxu0 0.0
        %1079 = vmatprep.subr.mxu0 0.0
        %1080 = vmatpush2.xpose.msra.mxu0 0.0
        %1081 = vmatprep.subr.mxu0 0.0
        %1082 = vmatpush2.xpose.msra.mxu0 0.0
        %1083 = vmatprep.subr.mxu0 0.0
        %1084 = vmatpush2.xpose.msra.mxu0 0.0
        %1085 = vmatprep.subr.mxu0 0.0
        %1086 = vmatpush2.xpose.msra.mxu0 0.0
        %1087 = vmatprep.subr.mxu0 0.0
        %1088 = vmatpush2.xpose.msra.mxu0 0.0
        %1089 = vmatprep.subr.mxu0 0.0
        %1090 = vmatpush2.xpose.msra.mxu0 0.0
        %1091 = vmatprep.mubr.f32.mxu0 0.0
        %1092 = vmatmul.mubr.f32.gmra.mxu0 %v1023
        %v1093 = vpop.f32.mrf.mxu0
        %v1094 = vadd.f32 0.0, %v1093
        %v1095 = vpop.f32.mrf.mxu0
        %1096 = vdwg.mxu0
        %v1097 = vmul.f32 %v1094, 0.25
        %vm1098 = vcmask 36864
        %v1099 = vsel %vm1098, %v1097, -inf
        %1100 = vmax.xlane.f32.xlu0 %v1099
        %v1101 = vpop.xlane.xlu0 %1100
        %v1102 = vsub.f32 %v1097, %v1101
        %v1103 = vmul.f32 %v1102, 1.442695
        %v1104 = vpow.pop %v1103
        %v1105 = vsel %vm1098, %v1104, 0.0
        %1106 = vadd.xlane.f32.xlu0 %v1105
        %v1107 = vpop.xlane.xlu0 %1106
        %v1108 = vrcp.pop %v1107
        %v1109 = vmul.f32 %v1104, %v1108
        %1110 = vrot.lane.b32.xlu0 %v1010, 64
        %v1111 = vpop.permute.xlu0 %1110
        %vm1112 = vcmask 39936
        %v1114 = vsel %vm1112, %v1109, 0
        %vm1116 = vcmask 1044480
        %v1117 = vsel %vm1116, %v1111, 0
        %1119 = vmatprep.subr.mxu0 0.0
        %1120 = vmatpush1.msra.mxu0 0.0
        %1121 = vmatprep.subr.mxu0 0.0
        %1122 = vmatpush1.msra.mxu0 0.0
        %1123 = vmatprep.subr.mxu0 0.0
        %1124 = vmatpush1.msra.mxu0 0.0
        %1125 = vmatprep.subr.mxu0 0.0
        %1126 = vmatpush1.msra.mxu0 0.0
        %1127 = vmatprep.subr.mxu0 0.0
        %1128 = vmatpush1.msra.mxu0 0.0
        %1129 = vmatprep.subr.mxu0 0.0
        %1130 = vmatpush1.msra.mxu0 0.0
        %1131 = vmatprep.subr.mxu0 0.0
        %1132 = vmatpush1.msra.mxu0 0.0
        %1133 = vmatprep.subr.mxu0 0.0
        %1134 = vmatpush1.msra.mxu0 0.0
        %1135 = vmatprep.subr.mxu0 0.0
        %1136 = vmatpush1.msra.mxu0 0.0
        %1137 = vmatprep.subr.mxu0 0.0
        %1138 = vmatpush1.msra.mxu0 0.0
        %1139 = vmatprep.subr.mxu0 0.0
        %1140 = vmatpush1.msra.mxu0 0.0
        %1141 = vmatprep.subr.mxu0 0.0
        %1142 = vmatpush1.msra.mxu0 0.0
        %1143 = vmatprep.subr.mxu0 0.0
        %1144 = vmatpush1.msra.mxu0 0.0
        %1145 = vmatprep.subr.mxu0 0.0
        %1146 = vmatpush1.msra.mxu0 0.0
        %1147 = vmatprep.subr.mxu0 0.0
        %1148 = vmatpush1.msra.mxu0 0.0
        %1149 = vmatprep.subr.mxu0 0.0
        %1150 = vmatpush1.msra.mxu0 %v1117
        %1151 = vmatprep.subr.mxu0 0.0
        %1152 = vmatpush2.msra.mxu0 0.0
        %1153 = vmatprep.subr.mxu0 0.0
        %1154 = vmatpush2.msra.mxu0 0.0
        %1155 = vmatprep.subr.mxu0 0.0
        %1156 = vmatpush2.msra.mxu0 0.0
        %1157 = vmatprep.subr.mxu0 0.0
        %1158 = vmatpush2.msra.mxu0 0.0
        %1159 = vmatprep.subr.mxu0 0.0
        %1160 = vmatpush2.msra.mxu0 0.0
        %1161 = vmatprep.subr.mxu0 0.0
        %1162 = vmatpush2.msra.mxu0 0.0
        %1163 = vmatprep.subr.mxu0 0.0
        %1164 = vmatpush2.msra.mxu0 0.0
        %1165 = vmatprep.subr.mxu0 0.0
        %1166 = vmatpush2.msra.mxu0 0.0
        %1167 = vmatprep.subr.mxu0 0.0
        %1168 = vmatpush2.msra.mxu0 0.0
        %1169 = vmatprep.subr.mxu0 0.0
        %1170 = vmatpush2.msra.mxu0 0.0
        %1171 = vmatprep.subr.mxu0 0.0
        %1172 = vmatpush2.msra.mxu0 0.0
        %1173 = vmatprep.subr.mxu0 0.0
        %1174 = vmatpush2.msra.mxu0 0.0
        %1175 = vmatprep.subr.mxu0 0.0
        %1176 = vmatpush2.msra.mxu0 0.0
        %1177 = vmatprep.subr.mxu0 0.0
        %1178 = vmatpush2.msra.mxu0 0.0
        %1179 = vmatprep.subr.mxu0 0.0
        %1180 = vmatpush2.msra.mxu0 0.0
        %1181 = vmatprep.subr.mxu0 0.0
        %1182 = vmatpush2.msra.mxu0 0.0
        %1183 = vmatprep.mubr.f32.mxu0 0.0
        %1184 = vmatmul.mubr.f32.gmra.mxu0 %v1114
        %v1185 = vpop.f32.mrf.mxu0
        %v1186 = vadd.f32 0.0, %v1185
        %v1187 = vpop.f32.mrf.mxu0
        %1188 = vdwg.mxu0
        %v1189 = vpack.c.bf16 %v1186, %v1186
        %1190 = vrot.lane.b32.xlu0 %v1010, 112
        %v1191 = vpop.permute.xlu0 %1190
        %1192 = vrot.lane.b32.xlu0 %v1010, 80
        %v1193 = vpop.permute.xlu0 %1192
        %v1194 = vsel %vm1022, %v1191, 0
        %v1196 = vsel %vm1022, %v1193, 0
        %1198 = vmatprep.subr.mxu0 0.0
        %1199 = vmatpush1.xpose.msra.mxu0 0.0
        %1200 = vmatprep.subr.mxu0 0.0
        %1201 = vmatpush1.xpose.msra.mxu0 0.0
        %1202 = vmatprep.subr.mxu0 0.0
        %1203 = vmatpush1.xpose.msra.mxu0 0.0
        %1204 = vmatprep.subr.mxu0 0.0
        %1205 = vmatpush1.xpose.msra.mxu0 0.0
        %1206 = vmatprep.subr.mxu0 0.0
        %1207 = vmatpush1.xpose.msra.mxu0 0.0
        %1208 = vmatprep.subr.mxu0 0.0
        %1209 = vmatpush1.xpose.msra.mxu0 0.0
        %1210 = vmatprep.subr.mxu0 0.0
        %1211 = vmatpush1.xpose.msra.mxu0 0.0
        %1212 = vmatprep.subr.mxu0 0.0
        %1213 = vmatpush1.xpose.msra.mxu0 0.0
        %1214 = vmatprep.subr.mxu0 0.0
        %1215 = vmatpush1.xpose.msra.mxu0 0.0
        %1216 = vmatprep.subr.mxu0 0.0
        %1217 = vmatpush1.xpose.msra.mxu0 0.0
        %1218 = vmatprep.subr.mxu0 0.0
        %1219 = vmatpush1.xpose.msra.mxu0 0.0
        %1220 = vmatprep.subr.mxu0 0.0
        %1221 = vmatpush1.xpose.msra.mxu0 0.0
        %1222 = vmatprep.subr.mxu0 0.0
        %1223 = vmatpush1.xpose.msra.mxu0 0.0
        %1224 = vmatprep.subr.mxu0 0.0
        %1225 = vmatpush1.xpose.msra.mxu0 0.0
        %1226 = vmatprep.subr.mxu0 0.0
        %1227 = vmatpush1.xpose.msra.mxu0 0.0
        %1228 = vmatprep.subr.mxu0 0.0
        %1229 = vmatpush1.xpose.msra.mxu0 %v1196
        %1230 = vmatprep.subr.mxu0 0.0
        %1231 = vmatpush2.xpose.msra.mxu0 0.0
        %1232 = vmatprep.subr.mxu0 0.0
        %1233 = vmatpush2.xpose.msra.mxu0 0.0
        %1234 = vmatprep.subr.mxu0 0.0
        %1235 = vmatpush2.xpose.msra.mxu0 0.0
        %1236 = vmatprep.subr.mxu0 0.0
        %1237 = vmatpush2.xpose.msra.mxu0 0.0
        %1238 = vmatprep.subr.mxu0 0.0
        %1239 = vmatpush2.xpose.msra.mxu0 0.0
        %1240 = vmatprep.subr.mxu0 0.0
        %1241 = vmatpush2.xpose.msra.mxu0 0.0
        %1242 = vmatprep.subr.mxu0 0.0
        %1243 = vmatpush2.xpose.msra.mxu0 0.0
        %1244 = vmatprep.subr.mxu0 0.0
        %1245 = vmatpush2.xpose.msra.mxu0 0.0
        %1246 = vmatprep.subr.mxu0 0.0
        %1247 = vmatpush2.xpose.msra.mxu0 0.0
        %1248 = vmatprep.subr.mxu0 0.0
        %1249 = vmatpush2.xpose.msra.mxu0 0.0
        %1250 = vmatprep.subr.mxu0 0.0
        %1251 = vmatpush2.xpose.msra.mxu0 0.0
        %1252 = vmatprep.subr.mxu0 0.0
        %1253 = vmatpush2.xpose.msra.mxu0 0.0
        %1254 = vmatprep.subr.mxu0 0.0
        %1255 = vmatpush2.xpose.msra.mxu0 0.0
        %1256 = vmatprep.subr.mxu0 0.0
        %1257 = vmatpush2.xpose.msra.mxu0 0.0
        %1258 = vmatprep.subr.mxu0 0.0
        %1259 = vmatpush2.xpose.msra.mxu0 0.0
        %1260 = vmatprep.subr.mxu0 0.0
        %1261 = vmatpush2.xpose.msra.mxu0 0.0
        %1262 = vmatprep.mubr.f32.mxu0 0.0
        %1263 = vmatmul.mubr.f32.gmra.mxu0 %v1194
        %v1264 = vpop.f32.mrf.mxu0
        %v1265 = vadd.f32 0.0, %v1264
        %v1266 = vpop.f32.mrf.mxu0
        %1267 = vdwg.mxu0
        %v1268 = vmul.f32 %v1265, 0.25
        %v1269 = vsel %vm1098, %v1268, -inf
        %1270 = vmax.xlane.f32.xlu0 %v1269
        %v1271 = vpop.xlane.xlu0 %1270
        %v1272 = vsub.f32 %v1268, %v1271
        %v1273 = vmul.f32 %v1272, 1.442695
        %v1274 = vpow.pop %v1273
        %v1275 = vsel %vm1098, %v1274, 0.0
        %1276 = vadd.xlane.f32.xlu0 %v1275
        %v1277 = vpop.xlane.xlu0 %1276
        %v1278 = vrcp.pop %v1277
        %v1279 = vmul.f32 %v1274, %v1278
        %1280 = vrot.lane.b32.xlu0 %v1010, 48
        %v1281 = vpop.permute.xlu0 %1280
        %v1283 = vsel %vm1112, %v1279, 0
        %v1285 = vsel %vm1116, %v1281, 0
        %1287 = vmatprep.subr.mxu0 0.0
        %1288 = vmatpush1.msra.mxu0 0.0
        %1289 = vmatprep.subr.mxu0 0.0
        %1290 = vmatpush1.msra.mxu0 0.0
        %1291 = vmatprep.subr.mxu0 0.0
        %1292 = vmatpush1.msra.mxu0 0.0
        %1293 = vmatprep.subr.mxu0 0.0
        %1294 = vmatpush1.msra.mxu0 0.0
        %1295 = vmatprep.subr.mxu0 0.0
        %1296 = vmatpush1.msra.mxu0 0.0
        %1297 = vmatprep.subr.mxu0 0.0
        %1298 = vmatpush1.msra.mxu0 0.0
        %1299 = vmatprep.subr.mxu0 0.0
        %1300 = vmatpush1.msra.mxu0 0.0
        %1301 = vmatprep.subr.mxu0 0.0
        %1302 = vmatpush1.msra.mxu0 0.0
        %1303 = vmatprep.subr.mxu0 0.0
        %1304 = vmatpush1.msra.mxu0 0.0
        %1305 = vmatprep.subr.mxu0 0.0
        %1306 = vmatpush1.msra.mxu0 0.0
        %1307 = vmatprep.subr.mxu0 0.0
        %1308 = vmatpush1.msra.mxu0 0.0
        %1309 = vmatprep.subr.mxu0 0.0
        %1310 = vmatpush1.msra.mxu0 0.0
        %1311 = vmatprep.subr.mxu0 0.0
        %1312 = vmatpush1.msra.mxu0 0.0
        %1313 = vmatprep.subr.mxu0 0.0
        %1314 = vmatpush1.msra.mxu0 0.0
        %1315 = vmatprep.subr.mxu0 0.0
        %1316 = vmatpush1.msra.mxu0 0.0
        %1317 = vmatprep.subr.mxu0 0.0
        %1318 = vmatpush1.msra.mxu0 %v1285
        %1319 = vmatprep.subr.mxu0 0.0
        %1320 = vmatpush2.msra.mxu0 0.0
        %1321 = vmatprep.subr.mxu0 0.0
        %1322 = vmatpush2.msra.mxu0 0.0
        %1323 = vmatprep.subr.mxu0 0.0
        %1324 = vmatpush2.msra.mxu0 0.0
        %1325 = vmatprep.subr.mxu0 0.0
        %1326 = vmatpush2.msra.mxu0 0.0
        %1327 = vmatprep.subr.mxu0 0.0
        %1328 = vmatpush2.msra.mxu0 0.0
        %1329 = vmatprep.subr.mxu0 0.0
        %1330 = vmatpush2.msra.mxu0 0.0
        %1331 = vmatprep.subr.mxu0 0.0
        %1332 = vmatpush2.msra.mxu0 0.0
        %1333 = vmatprep.subr.mxu0 0.0
        %1334 = vmatpush2.msra.mxu0 0.0
        %1335 = vmatprep.subr.mxu0 0.0
        %1336 = vmatpush2.msra.mxu0 0.0
        %1337 = vmatprep.subr.mxu0 0.0
        %1338 = vmatpush2.msra.mxu0 0.0
        %1339 = vmatprep.subr.mxu0 0.0
        %1340 = vmatpush2.msra.mxu0 0.0
        %1341 = vmatprep.subr.mxu0 0.0
        %1342 = vmatpush2.msra.mxu0 0.0
        %1343 = vmatprep.subr.mxu0 0.0
        %1344 = vmatpush2.msra.mxu0 0.0
        %1345 = vmatprep.subr.mxu0 0.0
        %1346 = vmatpush2.msra.mxu0 0.0
        %1347 = vmatprep.subr.mxu0 0.0
        %1348 = vmatpush2.msra.mxu0 0.0
        %1349 = vmatprep.subr.mxu0 0.0
        %1350 = vmatpush2.msra.mxu0 0.0
        %1351 = vmatprep.mubr.f32.mxu0 0.0
        %1352 = vmatmul.mubr.f32.gmra.mxu0 %v1283
        %v1353 = vpop.f32.mrf.mxu0
        %v1354 = vadd.f32 0.0, %v1353
        %v1355 = vpop.f32.mrf.mxu0
        %1356 = vdwg.mxu0
        %v1357 = vpack.c.bf16 %v1354, %v1354
        %v1360 = vunpack.c.l.b16 %v1017
        %v1361 = vunpack.c.l.b16 %v1018
        %v1362 = vpack.c.b16 %v1361, %v1360
        %v1365 = vsel %vm1022, %v1357, 0
        %1367 = vmatprep.subr.bf16.mxu0 0
        %1368 = vmatpush1.bf16.msra.mxu0 0
        %1369 = vmatprep.subr.bf16.mxu0 0
        %1370 = vmatpush1.bf16.msra.mxu0 0
        %1371 = vmatprep.subr.bf16.mxu0 0
        %1372 = vmatpush1.bf16.msra.mxu0 0
        %1373 = vmatprep.subr.bf16.mxu0 0
        %1374 = vmatpush1.bf16.msra.mxu0 0
        %1375 = vmatprep.subr.bf16.mxu0 0
        %1376 = vmatpush1.bf16.msra.mxu0 0
        %1377 = vmatprep.subr.bf16.mxu0 0
        %1378 = vmatpush1.bf16.msra.mxu0 0
        %1379 = vmatprep.subr.bf16.mxu0 0
        %1380 = vmatpush1.bf16.msra.mxu0 0
        %1381 = vmatprep.subr.bf16.mxu0 0
        %1382 = vmatpush1.bf16.msra.mxu0 %v1362
        %1383 = vmatprep.subr.bf16.mxu0 0
        %1384 = vmatpush2.bf16.msra.mxu0 0
        %1385 = vmatprep.subr.bf16.mxu0 0
        %1386 = vmatpush2.bf16.msra.mxu0 0
        %1387 = vmatprep.subr.bf16.mxu0 0
        %1388 = vmatpush2.bf16.msra.mxu0 0
        %1389 = vmatprep.subr.bf16.mxu0 0
        %1390 = vmatpush2.bf16.msra.mxu0 0
        %1391 = vmatprep.subr.bf16.mxu0 0
        %1392 = vmatpush2.bf16.msra.mxu0 0
        %1393 = vmatprep.subr.bf16.mxu0 0
        %1394 = vmatpush2.bf16.msra.mxu0 0
        %1395 = vmatprep.subr.bf16.mxu0 0
        %1396 = vmatpush2.bf16.msra.mxu0 0
        %1397 = vmatprep.subr.bf16.mxu0 0
        %1398 = vmatpush2.bf16.msra.mxu0 0
        %1399 = vmatprep.mubr.bf16.mxu0 0
        %1400 = vmatmul.mubr.bf16.gmra.mxu0 %v1365
        %v1401 = vpop.f32.mrf.mxu0
        %v1402 = vadd.f32 0.0, %v1401
        %v1403 = vpop.f32.mrf.mxu0
        %v1404 = vpop.f32.mrf.mxu0
        %v1405 = vpop.f32.mrf.mxu0
        %1406 = vdwg.mxu0
        %v1409 = vunpack.c.l.b16 %v1015
        %v1410 = vunpack.c.l.b16 %v1016
        %v1411 = vpack.c.b16 %v1410, %v1409
        %v1414 = vsel %vm1022, %v1189, 0
        %1416 = vmatprep.subr.bf16.mxu0 0
        %1417 = vmatpush1.bf16.msra.mxu0 0
        %1418 = vmatprep.subr.bf16.mxu0 0
        %1419 = vmatpush1.bf16.msra.mxu0 0
        %1420 = vmatprep.subr.bf16.mxu0 0
        %1421 = vmatpush1.bf16.msra.mxu0 0
        %1422 = vmatprep.subr.bf16.mxu0 0
        %1423 = vmatpush1.bf16.msra.mxu0 0
        %1424 = vmatprep.subr.bf16.mxu0 0
        %1425 = vmatpush1.bf16.msra.mxu0 0
        %1426 = vmatprep.subr.bf16.mxu0 0
        %1427 = vmatpush1.bf16.msra.mxu0 0
        %1428 = vmatprep.subr.bf16.mxu0 0
        %1429 = vmatpush1.bf16.msra.mxu0 0
        %1430 = vmatprep.subr.bf16.mxu0 0
        %1431 = vmatpush1.bf16.msra.mxu0 %v1411
        %1432 = vmatprep.subr.bf16.mxu0 0
        %1433 = vmatpush2.bf16.msra.mxu0 0
        %1434 = vmatprep.subr.bf16.mxu0 0
        %1435 = vmatpush2.bf16.msra.mxu0 0
        %1436 = vmatprep.subr.bf16.mxu0 0
        %1437 = vmatpush2.bf16.msra.mxu0 0
        %1438 = vmatprep.subr.bf16.mxu0 0
        %1439 = vmatpush2.bf16.msra.mxu0 0
        %1440 = vmatprep.subr.bf16.mxu0 0
        %1441 = vmatpush2.bf16.msra.mxu0 0
        %1442 = vmatprep.subr.bf16.mxu0 0
        %1443 = vmatpush2.bf16.msra.mxu0 0
        %1444 = vmatprep.subr.bf16.mxu0 0
        %1445 = vmatpush2.bf16.msra.mxu0 0
        %1446 = vmatprep.subr.bf16.mxu0 0
        %1447 = vmatpush2.bf16.msra.mxu0 0
        %1448 = vmatprep.mubr.bf16.mxu0 0
        %1449 = vmatmul.mubr.bf16.gmra.mxu0 %v1414
        %v1450 = vpop.f32.mrf.mxu0
        %v1451 = vadd.f32 %v1402, %v1450
        %v1452 = vpop.f32.mrf.mxu0
        %v1453 = vpop.f32.mrf.mxu0
        %v1454 = vpop.f32.mrf.mxu0
        %1455 = vdwg.mxu0
        %v1456 = vadd.f32 %v927, %v1451
        %v1457 = vld [vmem:[%s7] sm:$0x1]
        %v1458 = vlaneseq
        %v1459 = vshrl.u32 %v1458, 7
        %v1460 = vsub.s32 0, %v1459
        %v1461 = vrot.slane %v1457, %v1460
        %v1462 = vadd.f32 %v1456, %v1461
        %v1463 = vld [vmem:[%s8] sm:$0x1]
        %v1464 = vld [vmem:[%s9] sm:$0x1]
        %v1465 = vsel %vm930, %v1462, 0.0
        %1466 = vadd.xlane.f32.xlu0 %v1465
        %v1467 = vpop.xlane.xlu0 %1466
        %v1468 = vmul.f32 %v1467, %v934
        %v1469 = vsub.f32 %v1462, %v1468
        %v1470 = vmul.f32 %v1469, %v1469
        %v1471 = vsel %vm930, %v1470, 0.0
        %1472 = vadd.xlane.f32.xlu0 %v1471
        %v1473 = vpop.xlane.xlu0 %1472
        %v1474 = vmul.f32 %v1473, %v934
        %v1475 = vadd.f32 %v1474, 1e-05
        %v1476 = vrsqrt.pop %v1475
        %v1477 = vmul.f32 %v1469, %v1476
        %v1478 = vlaneseq
        %v1479 = vshrl.u32 %v1478, 7
        %v1480 = vsub.s32 0, %v1479
        %v1481 = vrot.slane %v1463, %v1480
        %v1482 = vmul.f32 %v1477, %v1481
        %v1483 = vlaneseq
        %v1484 = vshrl.u32 %v1483, 7
        %v1485 = vsub.s32 0, %v1484
        %v1486 = vrot.slane %v1464, %v1485
        %v1487 = vadd.f32 %v1482, %v1486
        %v1488 = vld [vmem:[%s10] sm:$0xf]
        %v1489 = vld [vmem:[%s10 + $0x4] sm:$0xf]
        %v1490 = vld [vmem:[%s10 + $0x8] sm:$0xf]
        %v1491 = vld [vmem:[%s10 + $0xc] sm:$0xf]
        %v1492 = vpack.c.bf16 %v1487, %v1487
        %v1493 = vld [vmem:[%s11] sm:$0x1]
        %v1494 = vlaneseq
        %v1495 = vshrl.u32 %v1494, 7
        %v1496 = vsub.s32 0, %v1495
        %v1497 = vrot.slane %v1493, %v1496
        %v1502 = vunpack.c.l.b16 %v1488
        %v1503 = vunpack.c.l.b16 %v1489
        %v1504 = vunpack.c.l.b16 %v1490
        %v1505 = vunpack.c.l.b16 %v1491
        %v1506 = vpack.c.b16 %v1503, %v1502
        %v1507 = vpack.c.b16 %v1505, %v1504
        %v1511 = vsel %vm660, %v1492, 0
        %1513 = vmatprep.subr.bf16.mxu0 0
        %1514 = vmatpush1.bf16.msra.mxu0 0
        %1515 = vmatprep.subr.bf16.mxu0 0
        %1516 = vmatpush1.bf16.msra.mxu0 0
        %1517 = vmatprep.subr.bf16.mxu0 0
        %1518 = vmatpush1.bf16.msra.mxu0 0
        %1519 = vmatprep.subr.bf16.mxu0 0
        %1520 = vmatpush1.bf16.msra.mxu0 0
        %1521 = vmatprep.subr.bf16.mxu0 0
        %1522 = vmatpush1.bf16.msra.mxu0 0
        %1523 = vmatprep.subr.bf16.mxu0 0
        %1524 = vmatpush1.bf16.msra.mxu0 0
        %1525 = vmatprep.subr.bf16.mxu0 0
        %1526 = vmatpush1.bf16.msra.mxu0 %v1507
        %1527 = vmatprep.subr.bf16.mxu0 0
        %1528 = vmatpush1.bf16.msra.mxu0 %v1506
        %1529 = vmatprep.subr.bf16.mxu0 0
        %1530 = vmatpush2.bf16.msra.mxu0 0
        %1531 = vmatprep.subr.bf16.mxu0 0
        %1532 = vmatpush2.bf16.msra.mxu0 0
        %1533 = vmatprep.subr.bf16.mxu0 0
        %1534 = vmatpush2.bf16.msra.mxu0 0
        %1535 = vmatprep.subr.bf16.mxu0 0
        %1536 = vmatpush2.bf16.msra.mxu0 0
        %1537 = vmatprep.subr.bf16.mxu0 0
        %1538 = vmatpush2.bf16.msra.mxu0 0
        %1539 = vmatprep.subr.bf16.mxu0 0
        %1540 = vmatpush2.bf16.msra.mxu0 0
        %1541 = vmatprep.subr.bf16.mxu0 0
        %1542 = vmatpush2.bf16.msra.mxu0 0
        %1543 = vmatprep.subr.bf16.mxu0 0
        %1544 = vmatpush2.bf16.msra.mxu0 0
        %1545 = vmatprep.mubr.bf16.mxu0 0
        %1546 = vmatmul.mubr.bf16.gmra.mxu0 %v1511
        %v1547 = vpop.f32.mrf.mxu0
        %v1548 = vadd.f32 %v1497, %v1547
        %v1549 = vpop.f32.mrf.mxu0
        %v1550 = vpop.f32.mrf.mxu0
        %v1551 = vpop.f32.mrf.mxu0
        %1552 = vdwg.mxu0
        %v1553 = vmul.f32 %v1548, %v1548
        %v1554 = vmul.f32 %v1548, %v1553
        %v1555 = vmul.f32 %v1554, 0.044715
        %v1556 = vadd.f32 %v1548, %v1555
        %v1557 = vmul.f32 %v1556, 0.7978846
        %v1558 = vtanh.pop %v1557
        %v1559 = vadd.f32 %v1558, 1.0
        %v1560 = vmul.f32 %v1559, 0.5
        %v1561 = vmul.f32 %v1548, %v1560
        %v1562 = vld [vmem:[%s12] sm:$0xf]
        %v1563 = vld [vmem:[%s12 + $0x4] sm:$0xf]
        %v1564 = vld [vmem:[%s12 + $0x8] sm:$0xf]
        %v1565 = vld [vmem:[%s12 + $0xc] sm:$0xf]
        %v1566 = vld [vmem:[%s12 + $0x10] sm:$0xf]
        %v1567 = vld [vmem:[%s12 + $0x14] sm:$0xf]
        %v1568 = vld [vmem:[%s12 + $0x18] sm:$0xf]
        %v1569 = vld [vmem:[%s12 + $0x1c] sm:$0xf]
        %v1570 = vpack.c.bf16 %v1561, %v1561
        %v1579 = vunpack.c.l.b16 %v1562
        %v1580 = vunpack.c.l.b16 %v1563
        %v1581 = vunpack.c.l.b16 %v1564
        %v1582 = vunpack.c.l.b16 %v1565
        %v1583 = vunpack.c.l.b16 %v1566
        %v1584 = vunpack.c.l.b16 %v1567
        %v1585 = vunpack.c.l.b16 %v1568
        %v1586 = vunpack.c.l.b16 %v1569
        %v1587 = vpack.c.b16 %v1580, %v1579
        %v1588 = vpack.c.b16 %v1582, %v1581
        %v1589 = vpack.c.b16 %v1584, %v1583
        %v1590 = vpack.c.b16 %v1586, %v1585
        %vm1595 = vcmask 523264
        %v1597 = vsel %vm1595, %v1570, 0
        %1599 = vmatprep.subr.bf16.mxu0 0
        %1600 = vmatpush1.bf16.msra.mxu0 0
        %1601 = vmatprep.subr.bf16.mxu0 0
        %1602 = vmatpush1.bf16.msra.mxu0 0
        %1603 = vmatprep.subr.bf16.mxu0 0
        %1604 = vmatpush1.bf16.msra.mxu0 0
        %1605 = vmatprep.subr.bf16.mxu0 0
        %1606 = vmatpush1.bf16.msra.mxu0 0
        %1607 = vmatprep.subr.bf16.mxu0 0
        %1608 = vmatpush1.bf16.msra.mxu0 %v1590
        %1609 = vmatprep.subr.bf16.mxu0 0
        %1610 = vmatpush1.bf16.msra.mxu0 %v1589
        %1611 = vmatprep.subr.bf16.mxu0 0
        %1612 = vmatpush1.bf16.msra.mxu0 %v1588
        %1613 = vmatprep.subr.bf16.mxu0 0
        %1614 = vmatpush1.bf16.msra.mxu0 %v1587
        %1615 = vmatprep.subr.bf16.mxu0 0
        %1616 = vmatpush2.bf16.msra.mxu0 0
        %1617 = vmatprep.subr.bf16.mxu0 0
        %1618 = vmatpush2.bf16.msra.mxu0 0
        %1619 = vmatprep.subr.bf16.mxu0 0
        %1620 = vmatpush2.bf16.msra.mxu0 0
        %1621 = vmatprep.subr.bf16.mxu0 0
        %1622 = vmatpush2.bf16.msra.mxu0 0
        %1623 = vmatprep.subr.bf16.mxu0 0
        %1624 = vmatpush2.bf16.msra.mxu0 0
        %1625 = vmatprep.subr.bf16.mxu0 0
        %1626 = vmatpush2.bf16.msra.mxu0 0
        %1627 = vmatprep.subr.bf16.mxu0 0
        %1628 = vmatpush2.bf16.msra.mxu0 0
        %1629 = vmatprep.subr.bf16.mxu0 0
        %1630 = vmatpush2.bf16.msra.mxu0 0
        %1631 = vmatprep.mubr.bf16.mxu0 0
        %1632 = vmatmul.mubr.bf16.gmra.mxu0 %v1597
        %v1633 = vpop.f32.mrf.mxu0
        %v1634 = vadd.f32 0.0, %v1633
        %v1635 = vpop.f32.mrf.mxu0
        %v1636 = vpop.f32.mrf.mxu0
        %v1637 = vpop.f32.mrf.mxu0
        %1638 = vdwg.mxu0
        %v1639 = vadd.f32 %v1487, %v1634
        %v1640 = vld [vmem:[%s13] sm:$0x1]
        %v1641 = vlaneseq
        %v1642 = vshrl.u32 %v1641, 7
        %v1643 = vsub.s32 0, %v1642
        %v1644 = vrot.slane %v1640, %v1643
        %v1645 = vadd.f32 %v1639, %v1644
        %v1646 = vld [vmem:[%s3 + $0x1] sm:$0x1]
        %v1647 = vld [vmem:[%s4 + $0x1] sm:$0x1]
        %v1648 = vsel %vm930, %v1645, 0.0
        %1649 = vadd.xlane.f32.xlu0 %v1648
        %v1650 = vpop.xlane.xlu0 %1649
        %v1651 = vmul.f32 %v1650, %v934
        %v1652 = vsub.f32 %v1645, %v1651
        %v1653 = vmul.f32 %v1652, %v1652
        %v1654 = vsel %vm930, %v1653, 0.0
        %1655 = vadd.xlane.f32.xlu0 %v1654
        %v1656 = vpop.xlane.xlu0 %1655
        %v1657 = vmul.f32 %v1656, %v934
        %v1658 = vadd.f32 %v1657, 1e-05
        %v1659 = vrsqrt.pop %v1658
        %v1660 = vmul.f32 %v1652, %v1659
        %v1661 = vlaneseq
        %v1662 = vshrl.u32 %v1661, 7
        %v1663 = vsub.s32 0, %v1662
        %v1664 = vrot.slane %v1646, %v1663
        %v1665 = vmul.f32 %v1660, %v1664
        %v1666 = vlaneseq
        %v1667 = vshrl.u32 %v1666, 7
        %v1668 = vsub.s32 0, %v1667
        %v1669 = vrot.slane %v1647, %v1668
        %v1670 = vadd.f32 %v1665, %v1669
        %s1671 = scalar_lea.vmem %s5, 16
        %v1672 = vld [vmem:[%s1671] sm:$0xf]
        %v1673 = vld [vmem:[%s1671 + $0x4] sm:$0xf]
        %v1674 = vld [vmem:[%s1671 + $0x8] sm:$0xf]
        %v1675 = vld [vmem:[%s1671 + $0xc] sm:$0xf]
        %v1676 = vpack.c.bf16 %v1670, %v1670
        %v1681 = vunpack.c.l.b16 %v1672
        %v1682 = vunpack.c.l.b16 %v1673
        %v1683 = vunpack.c.l.b16 %v1674
        %v1684 = vunpack.c.l.b16 %v1675
        %v1685 = vpack.c.b16 %v1682, %v1681
        %v1686 = vpack.c.b16 %v1684, %v1683
        %v1690 = vsel %vm660, %v1676, 0
        %1692 = vmatprep.subr.bf16.mxu0 0
        %1693 = vmatpush1.bf16.msra.mxu0 0
        %1694 = vmatprep.subr.bf16.mxu0 0
        %1695 = vmatpush1.bf16.msra.mxu0 0
        %1696 = vmatprep.subr.bf16.mxu0 0
        %1697 = vmatpush1.bf16.msra.mxu0 0
        %1698 = vmatprep.subr.bf16.mxu0 0
        %1699 = vmatpush1.bf16.msra.mxu0 0
        %1700 = vmatprep.subr.bf16.mxu0 0
        %1701 = vmatpush1.bf16.msra.mxu0 0
        %1702 = vmatprep.subr.bf16.mxu0 0
        %1703 = vmatpush1.bf16.msra.mxu0 0
        %1704 = vmatprep.subr.bf16.mxu0 0
        %1705 = vmatpush1.bf16.msra.mxu0 %v1686
        %1706 = vmatprep.subr.bf16.mxu0 0
        %1707 = vmatpush1.bf16.msra.mxu0 %v1685
        %1708 = vmatprep.subr.bf16.mxu0 0
        %1709 = vmatpush2.bf16.msra.mxu0 0
        %1710 = vmatprep.subr.bf16.mxu0 0
        %1711 = vmatpush2.bf16.msra.mxu0 0
        %1712 = vmatprep.subr.bf16.mxu0 0
        %1713 = vmatpush2.bf16.msra.mxu0 0
        %1714 = vmatprep.subr.bf16.mxu0 0
        %1715 = vmatpush2.bf16.msra.mxu0 0
        %1716 = vmatprep.subr.bf16.mxu0 0
        %1717 = vmatpush2.bf16.msra.mxu0 0
        %1718 = vmatprep.subr.bf16.mxu0 0
        %1719 = vmatpush2.bf16.msra.mxu0 0
        %1720 = vmatprep.subr.bf16.mxu0 0
        %1721 = vmatpush2.bf16.msra.mxu0 0
        %1722 = vmatprep.subr.bf16.mxu0 0
        %1723 = vmatpush2.bf16.msra.mxu0 0
        %1724 = vmatprep.mubr.bf16.mxu0 0
        %1725 = vmatmul.mubr.bf16.gmra.mxu0 %v1690
        %v1726 = vpop.f32.mrf.mxu0
        %v1727 = vadd.f32 0.0, %v1726
        %v1728 = vpop.f32.mrf.mxu0
        %v1729 = vpop.f32.mrf.mxu0
        %v1730 = vpop.f32.mrf.mxu0
        %1731 = vdwg.mxu0
        %s1732 = scalar_lea.vmem %s6, 16
        %v1733 = vld [vmem:[%s1732] sm:$0xf]
        %v1734 = vld [vmem:[%s1732 + $0x4] sm:$0xf]
        %v1735 = vld [vmem:[%s1732 + $0x8] sm:$0xf]
        %v1736 = vld [vmem:[%s1732 + $0xc] sm:$0xf]
        %1738 = vrot.lane.b32.xlu0 %v1727, 96
        %v1739 = vpop.permute.xlu0 %1738
        %v1740 = vsel %vm1022, %v1727, 0
        %v1742 = vsel %vm1022, %v1739, 0
        %1744 = vmatprep.subr.mxu0 0.0
        %1745 = vmatpush1.xpose.msra.mxu0 0.0
        %1746 = vmatprep.subr.mxu0 0.0
        %1747 = vmatpush1.xpose.msra.mxu0 0.0
        %1748 = vmatprep.subr.mxu0 0.0
        %1749 = vmatpush1.xpose.msra.mxu0 0.0
        %1750 = vmatprep.subr.mxu0 0.0
        %1751 = vmatpush1.xpose.msra.mxu0 0.0
        %1752 = vmatprep.subr.mxu0 0.0
        %1753 = vmatpush1.xpose.msra.mxu0 0.0
        %1754 = vmatprep.subr.mxu0 0.0
        %1755 = vmatpush1.xpose.msra.mxu0 0.0
        %1756 = vmatprep.subr.mxu0 0.0
        %1757 = vmatpush1.xpose.msra.mxu0 0.0
        %1758 = vmatprep.subr.mxu0 0.0
        %1759 = vmatpush1.xpose.msra.mxu0 0.0
        %1760 = vmatprep.subr.mxu0 0.0
        %1761 = vmatpush1.xpose.msra.mxu0 0.0
        %1762 = vmatprep.subr.mxu0 0.0
        %1763 = vmatpush1.xpose.msra.mxu0 0.0
        %1764 = vmatprep.subr.mxu0 0.0
        %1765 = vmatpush1.xpose.msra.mxu0 0.0
        %1766 = vmatprep.subr.mxu0 0.0
        %1767 = vmatpush1.xpose.msra.mxu0 0.0
        %1768 = vmatprep.subr.mxu0 0.0
        %1769 = vmatpush1.xpose.msra.mxu0 0.0
        %1770 = vmatprep.subr.mxu0 0.0
        %1771 = vmatpush1.xpose.msra.mxu0 0.0
        %1772 = vmatprep.subr.mxu0 0.0
        %1773 = vmatpush1.xpose.msra.mxu0 0.0
        %1774 = vmatprep.subr.mxu0 0.0
        %1775 = vmatpush1.xpose.msra.mxu0 %v1742
        %1776 = vmatprep.subr.mxu0 0.0
        %1777 = vmatpush2.xpose.msra.mxu0 0.0
        %1778 = vmatprep.subr.mxu0 0.0
        %1779 = vmatpush2.xpose.msra.mxu0 0.0
        %1780 = vmatprep.subr.mxu0 0.0
        %1781 = vmatpush2.xpose.msra.mxu0 0.0
        %1782 = vmatprep.subr.mxu0 0.0
        %1783 = vmatpush2.xpose.msra.mxu0 0.0
        %1784 = vmatprep.subr.mxu0 0.0
        %1785 = vmatpush2.xpose.msra.mxu0 0.0
        %1786 = vmatprep.subr.mxu0 0.0
        %1787 = vmatpush2.xpose.msra.mxu0 0.0
        %1788 = vmatprep.subr.mxu0 0.0
        %1789 = vmatpush2.xpose.msra.mxu0 0.0
        %1790 = vmatprep.subr.mxu0 0.0
        %1791 = vmatpush2.xpose.msra.mxu0 0.0
        %1792 = vmatprep.subr.mxu0 0.0
        %1793 = vmatpush2.xpose.msra.mxu0 0.0
        %1794 = vmatprep.subr.mxu0 0.0
        %1795 = vmatpush2.xpose.msra.mxu0 0.0
        %1796 = vmatprep.subr.mxu0 0.0
        %1797 = vmatpush2.xpose.msra.mxu0 0.0
        %1798 = vmatprep.subr.mxu0 0.0
        %1799 = vmatpush2.xpose.msra.mxu0 0.0
        %1800 = vmatprep.subr.mxu0 0.0
        %1801 = vmatpush2.xpose.msra.mxu0 0.0
        %1802 = vmatprep.subr.mxu0 0.0
        %1803 = vmatpush2.xpose.msra.mxu0 0.0
        %1804 = vmatprep.subr.mxu0 0.0
        %1805 = vmatpush2.xpose.msra.mxu0 0.0
        %1806 = vmatprep.subr.mxu0 0.0
        %1807 = vmatpush2.xpose.msra.mxu0 0.0
        %1808 = vmatprep.mubr.f32.mxu0 0.0
        %1809 = vmatmul.mubr.f32.gmra.mxu0 %v1740
        %v1810 = vpop.f32.mrf.mxu0
        %v1811 = vadd.f32 0.0, %v1810
        %v1812 = vpop.f32.mrf.mxu0
        %1813 = vdwg.mxu0
        %v1814 = vmul.f32 %v1811, 0.25
        %v1815 = vsel %vm1098, %v1814, -inf
        %1816 = vmax.xlane.f32.xlu0 %v1815
        %v1817 = vpop.xlane.xlu0 %1816
        %v1818 = vsub.f32 %v1814, %v1817
        %v1819 = vmul.f32 %v1818, 1.442695
        %v1820 = vpow.pop %v1819
        %v1821 = vsel %vm1098, %v1820, 0.0
        %1822 = vadd.xlane.f32.xlu0 %v1821
        %v1823 = vpop.xlane.xlu0 %1822
        %v1824 = vrcp.pop %v1823
        %v1825 = vmul.f32 %v1820, %v1824
        %1826 = vrot.lane.b32.xlu0 %v1727, 64
        %v1827 = vpop.permute.xlu0 %1826
        %v1829 = vsel %vm1112, %v1825, 0
        %v1831 = vsel %vm1116, %v1827, 0
        %1833 = vmatprep.subr.mxu0 0.0
        %1834 = vmatpush1.msra.mxu0 0.0
        %1835 = vmatprep.subr.mxu0 0.0
        %1836 = vmatpush1.msra.mxu0 0.0
        %1837 = vmatprep.subr.mxu0 0.0
        %1838 = vmatpush1.msra.mxu0 0.0
        %1839 = vmatprep.subr.mxu0 0.0
        %1840 = vmatpush1.msra.mxu0 0.0
        %1841 = vmatprep.subr.mxu0 0.0
        %1842 = vmatpush1.msra.mxu0 0.0
        %1843 = vmatprep.subr.mxu0 0.0
        %1844 = vmatpush1.msra.mxu0 0.0
        %1845 = vmatprep.subr.mxu0 0.0
        %1846 = vmatpush1.msra.mxu0 0.0
        %1847 = vmatprep.subr.mxu0 0.0
        %1848 = vmatpush1.msra.mxu0 0.0
        %1849 = vmatprep.subr.mxu0 0.0
        %1850 = vmatpush1.msra.mxu0 0.0
        %1851 = vmatprep.subr.mxu0 0.0
        %1852 = vmatpush1.msra.mxu0 0.0
        %1853 = vmatprep.subr.mxu0 0.0
        %1854 = vmatpush1.msra.mxu0 0.0
        %1855 = vmatprep.subr.mxu0 0.0
        %1856 = vmatpush1.msra.mxu0 0.0
        %1857 = vmatprep.subr.mxu0 0.0
        %1858 = vmatpush1.msra.mxu0 0.0
        %1859 = vmatprep.subr.mxu0 0.0
        %1860 = vmatpush1.msra.mxu0 0.0
        %1861 = vmatprep.subr.mxu0 0.0
        %1862 = vmatpush1.msra.mxu0 0.0
        %1863 = vmatprep.subr.mxu0 0.0
        %1864 = vmatpush1.msra.mxu0 %v1831
        %1865 = vmatprep.subr.mxu0 0.0
        %1866 = vmatpush2.msra.mxu0 0.0
        %1867 = vmatprep.subr.mxu0 0.0
        %1868 = vmatpush2.msra.mxu0 0.0
        %1869 = vmatprep.subr.mxu0 0.0
        %1870 = vmatpush2.msra.mxu0 0.0
        %1871 = vmatprep.subr.mxu0 0.0
        %1872 = vmatpush2.msra.mxu0 0.0
        %1873 = vmatprep.subr.mxu0 0.0
        %1874 = vmatpush2.msra.mxu0 0.0
        %1875 = vmatprep.subr.mxu0 0.0
        %1876 = vmatpush2.msra.mxu0 0.0
        %1877 = vmatprep.subr.mxu0 0.0
        %1878 = vmatpush2.msra.mxu0 0.0
        %1879 = vmatprep.subr.mxu0 0.0
        %1880 = vmatpush2.msra.mxu0 0.0
        %1881 = vmatprep.subr.mxu0 0.0
        %1882 = vmatpush2.msra.mxu0 0.0
        %1883 = vmatprep.subr.mxu0 0.0
        %1884 = vmatpush2.msra.mxu0 0.0
        %1885 = vmatprep.subr.mxu0 0.0
        %1886 = vmatpush2.msra.mxu0 0.0
        %1887 = vmatprep.subr.mxu0 0.0
        %1888 = vmatpush2.msra.mxu0 0.0
        %1889 = vmatprep.subr.mxu0 0.0
        %1890 = vmatpush2.msra.mxu0 0.0
        %1891 = vmatprep.subr.mxu0 0.0
        %1892 = vmatpush2.msra.mxu0 0.0
        %1893 = vmatprep.subr.mxu0 0.0
        %1894 = vmatpush2.msra.mxu0 0.0
        %1895 = vmatprep.subr.mxu0 0.0
        %1896 = vmatpush2.msra.mxu0 0.0
        %1897 = vmatprep.mubr.f32.mxu0 0.0
        %1898 = vmatmul.mubr.f32.gmra.mxu0 %v1829
        %v1899 = vpop.f32.mrf.mxu0
        %v1900 = vadd.f32 0.0, %v1899
        %v1901 = vpop.f32.mrf.mxu0
        %1902 = vdwg.mxu0
        %v1903 = vpack.c.bf16 %v1900, %v1900
        %1904 = vrot.lane.b32.xlu0 %v1727, 112
        %v1905 = vpop.permute.xlu0 %1904
        %1906 = vrot.lane.b32.xlu0 %v1727, 80
        %v1907 = vpop.permute.xlu0 %1906
        %v1908 = vsel %vm1022, %v1905, 0
        %v1910 = vsel %vm1022, %v1907, 0
        %1912 = vmatprep.subr.mxu0 0.0
        %1913 = vmatpush1.xpose.msra.mxu0 0.0
        %1914 = vmatprep.subr.mxu0 0.0
        %1915 = vmatpush1.xpose.msra.mxu0 0.0
        %1916 = vmatprep.subr.mxu0 0.0
        %1917 = vmatpush1.xpose.msra.mxu0 0.0
        %1918 = vmatprep.subr.mxu0 0.0
        %1919 = vmatpush1.xpose.msra.mxu0 0.0
        %1920 = vmatprep.subr.mxu0 0.0
        %1921 = vmatpush1.xpose.msra.mxu0 0.0
        %1922 = vmatprep.subr.mxu0 0.0
        %1923 = vmatpush1.xpose.msra.mxu0 0.0
        %1924 = vmatprep.subr.mxu0 0.0
        %1925 = vmatpush1.xpose.msra.mxu0 0.0
        %1926 = vmatprep.subr.mxu0 0.0
        %1927 = vmatpush1.xpose.msra.mxu0 0.0
        %1928 = vmatprep.subr.mxu0 0.0
        %1929 = vmatpush1.xpose.msra.mxu0 0.0
        %1930 = vmatprep.subr.mxu0 0.0
        %1931 = vmatpush1.xpose.msra.mxu0 0.0
        %1932 = vmatprep.subr.mxu0 0.0
        %1933 = vmatpush1.xpose.msra.mxu0 0.0
        %1934 = vmatprep.subr.mxu0 0.0
        %1935 = vmatpush1.xpose.msra.mxu0 0.0
        %1936 = vmatprep.subr.mxu0 0.0
        %1937 = vmatpush1.xpose.msra.mxu0 0.0
        %1938 = vmatprep.subr.mxu0 0.0
        %1939 = vmatpush1.xpose.msra.mxu0 0.0
        %1940 = vmatprep.subr.mxu0 0.0
        %1941 = vmatpush1.xpose.msra.mxu0 0.0
        %1942 = vmatprep.subr.mxu0 0.0
        %1943 = vmatpush1.xpose.msra.mxu0 %v1910
        %1944 = vmatprep.subr.mxu0 0.0
        %1945 = vmatpush2.xpose.msra.mxu0 0.0
        %1946 = vmatprep.subr.mxu0 0.0
        %1947 = vmatpush2.xpose.msra.mxu0 0.0
        %1948 = vmatprep.subr.mxu0 0.0
        %1949 = vmatpush2.xpose.msra.mxu0 0.0
        %1950 = vmatprep.subr.mxu0 0.0
        %1951 = vmatpush2.xpose.msra.mxu0 0.0
        %1952 = vmatprep.subr.mxu0 0.0
        %1953 = vmatpush2.xpose.msra.mxu0 0.0
        %1954 = vmatprep.subr.mxu0 0.0
        %1955 = vmatpush2.xpose.msra.mxu0 0.0
        %1956 = vmatprep.subr.mxu0 0.0
        %1957 = vmatpush2.xpose.msra.mxu0 0.0
        %1958 = vmatprep.subr.mxu0 0.0
        %1959 = vmatpush2.xpose.msra.mxu0 0.0
        %1960 = vmatprep.subr.mxu0 0.0
        %1961 = vmatpush2.xpose.msra.mxu0 0.0
        %1962 = vmatprep.subr.mxu0 0.0
        %1963 = vmatpush2.xpose.msra.mxu0 0.0
        %1964 = vmatprep.subr.mxu0 0.0
        %1965 = vmatpush2.xpose.msra.mxu0 0.0
        %1966 = vmatprep.subr.mxu0 0.0
        %1967 = vmatpush2.xpose.msra.mxu0 0.0
        %1968 = vmatprep.subr.mxu0 0.0
        %1969 = vmatpush2.xpose.msra.mxu0 0.0
        %1970 = vmatprep.subr.mxu0 0.0
        %1971 = vmatpush2.xpose.msra.mxu0 0.0
        %1972 = vmatprep.subr.mxu0 0.0
        %1973 = vmatpush2.xpose.msra.mxu0 0.0
        %1974 = vmatprep.subr.mxu0 0.0
        %1975 = vmatpush2.xpose.msra.mxu0 0.0
        %1976 = vmatprep.mubr.f32.mxu0 0.0
        %1977 = vmatmul.mubr.f32.gmra.mxu0 %v1908
        %v1978 = vpop.f32.mrf.mxu0
        %v1979 = vadd.f32 0.0, %v1978
        %v1980 = vpop.f32.mrf.mxu0
        %1981 = vdwg.mxu0
        %v1982 = vmul.f32 %v1979, 0.25
        %v1983 = vsel %vm1098, %v1982, -inf
        %1984 = vmax.xlane.f32.xlu0 %v1983
        %v1985 = vpop.xlane.xlu0 %1984
        %v1986 = vsub.f32 %v1982, %v1985
        %v1987 = vmul.f32 %v1986, 1.442695
        %v1988 = vpow.pop %v1987
        %v1989 = vsel %vm1098, %v1988, 0.0
        %1990 = vadd.xlane.f32.xlu0 %v1989
        %v1991 = vpop.xlane.xlu0 %1990
        %v1992 = vrcp.pop %v1991
        %v1993 = vmul.f32 %v1988, %v1992
        %1994 = vrot.lane.b32.xlu0 %v1727, 48
        %v1995 = vpop.permute.xlu0 %1994
        %v1997 = vsel %vm1112, %v1993, 0
        %v1999 = vsel %vm1116, %v1995, 0
        %2001 = vmatprep.subr.mxu0 0.0
        %2002 = vmatpush1.msra.mxu0 0.0
        %2003 = vmatprep.subr.mxu0 0.0
        %2004 = vmatpush1.msra.mxu0 0.0
        %2005 = vmatprep.subr.mxu0 0.0
        %2006 = vmatpush1.msra.mxu0 0.0
        %2007 = vmatprep.subr.mxu0 0.0
        %2008 = vmatpush1.msra.mxu0 0.0
        %2009 = vmatprep.subr.mxu0 0.0
        %2010 = vmatpush1.msra.mxu0 0.0
        %2011 = vmatprep.subr.mxu0 0.0
        %2012 = vmatpush1.msra.mxu0 0.0
        %2013 = vmatprep.subr.mxu0 0.0
        %2014 = vmatpush1.msra.mxu0 0.0
        %2015 = vmatprep.subr.mxu0 0.0
        %2016 = vmatpush1.msra.mxu0 0.0
        %2017 = vmatprep.subr.mxu0 0.0
        %2018 = vmatpush1.msra.mxu0 0.0
        %2019 = vmatprep.subr.mxu0 0.0
        %2020 = vmatpush1.msra.mxu0 0.0
        %2021 = vmatprep.subr.mxu0 0.0
        %2022 = vmatpush1.msra.mxu0 0.0
        %2023 = vmatprep.subr.mxu0 0.0
        %2024 = vmatpush1.msra.mxu0 0.0
        %2025 = vmatprep.subr.mxu0 0.0
        %2026 = vmatpush1.msra.mxu0 0.0
        %2027 = vmatprep.subr.mxu0 0.0
        %2028 = vmatpush1.msra.mxu0 0.0
        %2029 = vmatprep.subr.mxu0 0.0
        %2030 = vmatpush1.msra.mxu0 0.0
        %2031 = vmatprep.subr.mxu0 0.0
        %2032 = vmatpush1.msra.mxu0 %v1999
        %2033 = vmatprep.subr.mxu0 0.0
        %2034 = vmatpush2.msra.mxu0 0.0
        %2035 = vmatprep.subr.mxu0 0.0
        %2036 = vmatpush2.msra.mxu0 0.0
        %2037 = vmatprep.subr.mxu0 0.0
        %2038 = vmatpush2.msra.mxu0 0.0
        %2039 = vmatprep.subr.mxu0 0.0
        %2040 = vmatpush2.msra.mxu0 0.0
        %2041 = vmatprep.subr.mxu0 0.0
        %2042 = vmatpush2.msra.mxu0 0.0
        %2043 = vmatprep.subr.mxu0 0.0
        %2044 = vmatpush2.msra.mxu0 0.0
        %2045 = vmatprep.subr.mxu0 0.0
        %2046 = vmatpush2.msra.mxu0 0.0
        %2047 = vmatprep.subr.mxu0 0.0
        %2048 = vmatpush2.msra.mxu0 0.0
        %2049 = vmatprep.subr.mxu0 0.0
        %2050 = vmatpush2.msra.mxu0 0.0
        %2051 = vmatprep.subr.mxu0 0.0
        %2052 = vmatpush2.msra.mxu0 0.0
        %2053 = vmatprep.subr.mxu0 0.0
        %2054 = vmatpush2.msra.mxu0 0.0
        %2055 = vmatprep.subr.mxu0 0.0
        %2056 = vmatpush2.msra.mxu0 0.0
        %2057 = vmatprep.subr.mxu0 0.0
        %2058 = vmatpush2.msra.mxu0 0.0
        %2059 = vmatprep.subr.mxu0 0.0
        %2060 = vmatpush2.msra.mxu0 0.0
        %2061 = vmatprep.subr.mxu0 0.0
        %2062 = vmatpush2.msra.mxu0 0.0
        %2063 = vmatprep.subr.mxu0 0.0
        %2064 = vmatpush2.msra.mxu0 0.0
        %2065 = vmatprep.mubr.f32.mxu0 0.0
        %2066 = vmatmul.mubr.f32.gmra.mxu0 %v1997
        %v2067 = vpop.f32.mrf.mxu0
        %v2068 = vadd.f32 0.0, %v2067
        %v2069 = vpop.f32.mrf.mxu0
        %2070 = vdwg.mxu0
        %v2071 = vpack.c.bf16 %v2068, %v2068
        %v2074 = vunpack.c.l.b16 %v1735
        %v2075 = vunpack.c.l.b16 %v1736
        %v2076 = vpack.c.b16 %v2075, %v2074
        %v2079 = vsel %vm1022, %v2071, 0
        %2081 = vmatprep.subr.bf16.mxu0 0
        %2082 = vmatpush1.bf16.msra.mxu0 0
        %2083 = vmatprep.subr.bf16.mxu0 0
        %2084 = vmatpush1.bf16.msra.mxu0 0
        %2085 = vmatprep.subr.bf16.mxu0 0
        %2086 = vmatpush1.bf16.msra.mxu0 0
        %2087 = vmatprep.subr.bf16.mxu0 0
        %2088 = vmatpush1.bf16.msra.mxu0 0
        %2089 = vmatprep.subr.bf16.mxu0 0
        %2090 = vmatpush1.bf16.msra.mxu0 0
        %2091 = vmatprep.subr.bf16.mxu0 0
        %2092 = vmatpush1.bf16.msra.mxu0 0
        %2093 = vmatprep.subr.bf16.mxu0 0
        %2094 = vmatpush1.bf16.msra.mxu0 0
        %2095 = vmatprep.subr.bf16.mxu0 0
        %2096 = vmatpush1.bf16.msra.mxu0 %v2076
        %2097 = vmatprep.subr.bf16.mxu0 0
        %2098 = vmatpush2.bf16.msra.mxu0 0
        %2099 = vmatprep.subr.bf16.mxu0 0
        %2100 = vmatpush2.bf16.msra.mxu0 0
        %2101 = vmatprep.subr.bf16.mxu0 0
        %2102 = vmatpush2.bf16.msra.mxu0 0
        %2103 = vmatprep.subr.bf16.mxu0 0
        %2104 = vmatpush2.bf16.msra.mxu0 0
        %2105 = vmatprep.subr.bf16.mxu0 0
        %2106 = vmatpush2.bf16.msra.mxu0 0
        %2107 = vmatprep.subr.bf16.mxu0 0
        %2108 = vmatpush2.bf16.msra.mxu0 0
        %2109 = vmatprep.subr.bf16.mxu0 0
        %2110 = vmatpush2.bf16.msra.mxu0 0
        %2111 = vmatprep.subr.bf16.mxu0 0
        %2112 = vmatpush2.bf16.msra.mxu0 0
        %2113 = vmatprep.mubr.bf16.mxu0 0
        %2114 = vmatmul.mubr.bf16.gmra.mxu0 %v2079
        %v2115 = vpop.f32.mrf.mxu0
        %v2116 = vadd.f32 0.0, %v2115
        %v2117 = vpop.f32.mrf.mxu0
        %v2118 = vpop.f32.mrf.mxu0
        %v2119 = vpop.f32.mrf.mxu0
        %2120 = vdwg.mxu0
        %v2123 = vunpack.c.l.b16 %v1733
        %v2124 = vunpack.c.l.b16 %v1734
        %v2125 = vpack.c.b16 %v2124, %v2123
        %v2128 = vsel %vm1022, %v1903, 0
        %2130 = vmatprep.subr.bf16.mxu0 0
        %2131 = vmatpush1.bf16.msra.mxu0 0
        %2132 = vmatprep.subr.bf16.mxu0 0
        %2133 = vmatpush1.bf16.msra.mxu0 0
        %2134 = vmatprep.subr.bf16.mxu0 0
        %2135 = vmatpush1.bf16.msra.mxu0 0
        %2136 = vmatprep.subr.bf16.mxu0 0
        %2137 = vmatpush1.bf16.msra.mxu0 0
        %2138 = vmatprep.subr.bf16.mxu0 0
        %2139 = vmatpush1.bf16.msra.mxu0 0
        %2140 = vmatprep.subr.bf16.mxu0 0
        %2141 = vmatpush1.bf16.msra.mxu0 0
        %2142 = vmatprep.subr.bf16.mxu0 0
        %2143 = vmatpush1.bf16.msra.mxu0 0
        %2144 = vmatprep.subr.bf16.mxu0 0
        %2145 = vmatpush1.bf16.msra.mxu0 %v2125
        %2146 = vmatprep.subr.bf16.mxu0 0
        %2147 = vmatpush2.bf16.msra.mxu0 0
        %2148 = vmatprep.subr.bf16.mxu0 0
        %2149 = vmatpush2.bf16.msra.mxu0 0
        %2150 = vmatprep.subr.bf16.mxu0 0
        %2151 = vmatpush2.bf16.msra.mxu0 0
        %2152 = vmatprep.subr.bf16.mxu0 0
        %2153 = vmatpush2.bf16.msra.mxu0 0
        %2154 = vmatprep.subr.bf16.mxu0 0
        %2155 = vmatpush2.bf16.msra.mxu0 0
        %2156 = vmatprep.subr.bf16.mxu0 0
        %2157 = vmatpush2.bf16.msra.mxu0 0
        %2158 = vmatprep.subr.bf16.mxu0 0
        %2159 = vmatpush2.bf16.msra.mxu0 0
        %2160 = vmatprep.subr.bf16.mxu0 0
        %2161 = vmatpush2.bf16.msra.mxu0 0
        %2162 = vmatprep.mubr.bf16.mxu0 0
        %2163 = vmatmul.mubr.bf16.gmra.mxu0 %v2128
        %v2164 = vpop.f32.mrf.mxu0
        %v2165 = vadd.f32 %v2116, %v2164
        %v2166 = vpop.f32.mrf.mxu0
        %v2167 = vpop.f32.mrf.mxu0
        %v2168 = vpop.f32.mrf.mxu0
        %2169 = vdwg.mxu0
        %v2170 = vadd.f32 %v1645, %v2165
        %v2171 = vld [vmem:[%s7 + $0x1] sm:$0x1]
        %v2172 = vlaneseq
        %v2173 = vshrl.u32 %v2172, 7
        %v2174 = vsub.s32 0, %v2173
        %v2175 = vrot.slane %v2171, %v2174
        %v2176 = vadd.f32 %v2170, %v2175
        %v2177 = vld [vmem:[%s8 + $0x1] sm:$0x1]
        %v2178 = vld [vmem:[%s9 + $0x1] sm:$0x1]
        %v2179 = vsel %vm930, %v2176, 0.0
        %2180 = vadd.xlane.f32.xlu0 %v2179
        %v2181 = vpop.xlane.xlu0 %2180
        %v2182 = vmul.f32 %v2181, %v934
        %v2183 = vsub.f32 %v2176, %v2182
        %v2184 = vmul.f32 %v2183, %v2183
        %v2185 = vsel %vm930, %v2184, 0.0
        %2186 = vadd.xlane.f32.xlu0 %v2185
        %v2187 = vpop.xlane.xlu0 %2186
        %v2188 = vmul.f32 %v2187, %v934
        %v2189 = vadd.f32 %v2188, 1e-05
        %v2190 = vrsqrt.pop %v2189
        %v2191 = vmul.f32 %v2183, %v2190
        %v2192 = vlaneseq
        %v2193 = vshrl.u32 %v2192, 7
        %v2194 = vsub.s32 0, %v2193
        %v2195 = vrot.slane %v2177, %v2194
        %v2196 = vmul.f32 %v2191, %v2195
        %v2197 = vlaneseq
        %v2198 = vshrl.u32 %v2197, 7
        %v2199 = vsub.s32 0, %v2198
        %v2200 = vrot.slane %v2178, %v2199
        %v2201 = vadd.f32 %v2196, %v2200
        %s2202 = scalar_lea.vmem %s10, 16
        %v2203 = vld [vmem:[%s2202] sm:$0xf]
        %v2204 = vld [vmem:[%s2202 + $0x4] sm:$0xf]
        %v2205 = vld [vmem:[%s2202 + $0x8] sm:$0xf]
        %v2206 = vld [vmem:[%s2202 + $0xc] sm:$0xf]
        %v2207 = vpack.c.bf16 %v2201, %v2201
        %v2208 = vld [vmem:[%s11 + $0x1] sm:$0x1]
        %v2209 = vlaneseq
        %v2210 = vshrl.u32 %v2209, 7
        %v2211 = vsub.s32 0, %v2210
        %v2212 = vrot.slane %v2208, %v2211
        %v2217 = vunpack.c.l.b16 %v2203
        %v2218 = vunpack.c.l.b16 %v2204
        %v2219 = vunpack.c.l.b16 %v2205
        %v2220 = vunpack.c.l.b16 %v2206
        %v2221 = vpack.c.b16 %v2218, %v2217
        %v2222 = vpack.c.b16 %v2220, %v2219
        %v2226 = vsel %vm660, %v2207, 0
        %2228 = vmatprep.subr.bf16.mxu0 0
        %2229 = vmatpush1.bf16.msra.mxu0 0
        %2230 = vmatprep.subr.bf16.mxu0 0
        %2231 = vmatpush1.bf16.msra.mxu0 0
        %2232 = vmatprep.subr.bf16.mxu0 0
        %2233 = vmatpush1.bf16.msra.mxu0 0
        %2234 = vmatprep.subr.bf16.mxu0 0
        %2235 = vmatpush1.bf16.msra.mxu0 0
        %2236 = vmatprep.subr.bf16.mxu0 0
        %2237 = vmatpush1.bf16.msra.mxu0 0
        %2238 = vmatprep.subr.bf16.mxu0 0
        %2239 = vmatpush1.bf16.msra.mxu0 0
        %2240 = vmatprep.subr.bf16.mxu0 0
        %2241 = vmatpush1.bf16.msra.mxu0 %v2222
        %2242 = vmatprep.subr.bf16.mxu0 0
        %2243 = vmatpush1.bf16.msra.mxu0 %v2221
        %2244 = vmatprep.subr.bf16.mxu0 0
        %2245 = vmatpush2.bf16.msra.mxu0 0
        %2246 = vmatprep.subr.bf16.mxu0 0
        %2247 = vmatpush2.bf16.msra.mxu0 0
        %2248 = vmatprep.subr.bf16.mxu0 0
        %2249 = vmatpush2.bf16.msra.mxu0 0
        %2250 = vmatprep.subr.bf16.mxu0 0
        %2251 = vmatpush2.bf16.msra.mxu0 0
        %2252 = vmatprep.subr.bf16.mxu0 0
        %2253 = vmatpush2.bf16.msra.mxu0 0
        %2254 = vmatprep.subr.bf16.mxu0 0
        %2255 = vmatpush2.bf16.msra.mxu0 0
        %2256 = vmatprep.subr.bf16.mxu0 0
        %2257 = vmatpush2.bf16.msra.mxu0 0
        %2258 = vmatprep.subr.bf16.mxu0 0
        %2259 = vmatpush2.bf16.msra.mxu0 0
        %2260 = vmatprep.mubr.bf16.mxu0 0
        %2261 = vmatmul.mubr.bf16.gmra.mxu0 %v2226
        %v2262 = vpop.f32.mrf.mxu0
        %v2263 = vadd.f32 %v2212, %v2262
        %v2264 = vpop.f32.mrf.mxu0
        %v2265 = vpop.f32.mrf.mxu0
        %v2266 = vpop.f32.mrf.mxu0
        %2267 = vdwg.mxu0
        %v2268 = vmul.f32 %v2263, %v2263
        %v2269 = vmul.f32 %v2263, %v2268
        %v2270 = vmul.f32 %v2269, 0.044715
        %v2271 = vadd.f32 %v2263, %v2270
        %v2272 = vmul.f32 %v2271, 0.7978846
        %v2273 = vtanh.pop %v2272
        %v2274 = vadd.f32 %v2273, 1.0
        %v2275 = vmul.f32 %v2274, 0.5
        %v2276 = vmul.f32 %v2263, %v2275
        %s2277 = scalar_lea.vmem %s12, 32
        %v2278 = vld [vmem:[%s2277] sm:$0xf]
        %v2279 = vld [vmem:[%s2277 + $0x4] sm:$0xf]
        %v2280 = vld [vmem:[%s2277 + $0x8] sm:$0xf]
        %v2281 = vld [vmem:[%s2277 + $0xc] sm:$0xf]
        %v2282 = vld [vmem:[%s2277 + $0x10] sm:$0xf]
        %v2283 = vld [vmem:[%s2277 + $0x14] sm:$0xf]
        %v2284 = vld [vmem:[%s2277 + $0x18] sm:$0xf]
        %v2285 = vld [vmem:[%s2277 + $0x1c] sm:$0xf]
        %v2286 = vpack.c.bf16 %v2276, %v2276
        %v2295 = vunpack.c.l.b16 %v2278
        %v2296 = vunpack.c.l.b16 %v2279
        %v2297 = vunpack.c.l.b16 %v2280
        %v2298 = vunpack.c.l.b16 %v2281
        %v2299 = vunpack.c.l.b16 %v2282
        %v2300 = vunpack.c.l.b16 %v2283
        %v2301 = vunpack.c.l.b16 %v2284
        %v2302 = vunpack.c.l.b16 %v2285
        %v2303 = vpack.c.b16 %v2296, %v2295
        %v2304 = vpack.c.b16 %v2298, %v2297
        %v2305 = vpack.c.b16 %v2300, %v2299
        %v2306 = vpack.c.b16 %v2302, %v2301
        %v2312 = vsel %vm1595, %v2286, 0
        %2314 = vmatprep.subr.bf16.mxu0 0
        %2315 = vmatpush1.bf16.msra.mxu0 0
        %2316 = vmatprep.subr.bf16.mxu0 0
        %2317 = vmatpush1.bf16.msra.mxu0 0
        %2318 = vmatprep.subr.bf16.mxu0 0
        %2319 = vmatpush1.bf16.msra.mxu0 0
        %2320 = vmatprep.subr.bf16.mxu0 0
        %2321 = vmatpush1.bf16.msra.mxu0 0
        %2322 = vmatprep.subr.bf16.mxu0 0
        %2323 = vmatpush1.bf16.msra.mxu0 %v2306
        %2324 = vmatprep.subr.bf16.mxu0 0
        %2325 = vmatpush1.bf16.msra.mxu0 %v2305
        %2326 = vmatprep.subr.bf16.mxu0 0
        %2327 = vmatpush1.bf16.msra.mxu0 %v2304
        %2328 = vmatprep.subr.bf16.mxu0 0
        %2329 = vmatpush1.bf16.msra.mxu0 %v2303
        %2330 = vmatprep.subr.bf16.mxu0 0
        %2331 = vmatpush2.bf16.msra.mxu0 0
        %2332 = vmatprep.subr.bf16.mxu0 0
        %2333 = vmatpush2.bf16.msra.mxu0 0
        %2334 = vmatprep.subr.bf16.mxu0 0
        %2335 = vmatpush2.bf16.msra.mxu0 0
        %2336 = vmatprep.subr.bf16.mxu0 0
        %2337 = vmatpush2.bf16.msra.mxu0 0
        %2338 = vmatprep.subr.bf16.mxu0 0
        %2339 = vmatpush2.bf16.msra.mxu0 0
        %2340 = vmatprep.subr.bf16.mxu0 0
        %2341 = vmatpush2.bf16.msra.mxu0 0
        %2342 = vmatprep.subr.bf16.mxu0 0
        %2343 = vmatpush2.bf16.msra.mxu0 0
        %2344 = vmatprep.subr.bf16.mxu0 0
        %2345 = vmatpush2.bf16.msra.mxu0 0
        %2346 = vmatprep.mubr.bf16.mxu0 0
        %2347 = vmatmul.mubr.bf16.gmra.mxu0 %v2312
        %v2348 = vpop.f32.mrf.mxu0
        %v2349 = vadd.f32 0.0, %v2348
        %v2350 = vpop.f32.mrf.mxu0
        %v2351 = vpop.f32.mrf.mxu0
        %v2352 = vpop.f32.mrf.mxu0
        %2353 = vdwg.mxu0
        %v2354 = vadd.f32 %v2201, %v2349
        %v2355 = vld [vmem:[%s13 + $0x1] sm:$0x1]
        %v2356 = vlaneseq
        %v2357 = vshrl.u32 %v2356, 7
        %v2358 = vsub.s32 0, %v2357
        %v2359 = vrot.slane %v2355, %v2358
        %v2360 = vadd.f32 %v2354, %v2359
        %v2361 = vld [vmem:[%s14] sm:$0x1]
        %v2362 = vld [vmem:[%s15] sm:$0x1]
        %v2363 = vsel %vm930, %v2360, 0.0
        %2364 = vadd.xlane.f32.xlu0 %v2363
        %v2365 = vpop.xlane.xlu0 %2364
        %v2366 = vmul.f32 %v2365, %v934
        %v2367 = vsub.f32 %v2360, %v2366
        %v2368 = vmul.f32 %v2367, %v2367
        %v2369 = vsel %vm930, %v2368, 0.0
        %2370 = vadd.xlane.f32.xlu0 %v2369
        %v2371 = vpop.xlane.xlu0 %2370
        %v2372 = vmul.f32 %v2371, %v934
        %v2373 = vadd.f32 %v2372, 1e-05
        %v2374 = vrsqrt.pop %v2373
        %v2375 = vmul.f32 %v2367, %v2374
        %v2377 = vlaneseq
        %v2378 = vshrl.u32 %v2377, 7
        %v2379 = vsub.s32 0, %v2378
        %v2380 = vrot.slane %v2361, %v2379
        %v2382 = vmul.f32 %v2375, %v2380
        %v2384 = vlaneseq
        %v2385 = vshrl.u32 %v2384, 7
        %v2386 = vsub.s32 0, %v2385
        %v2387 = vrot.slane %v2362, %v2386
        %v2389 = vadd.f32 %v2382, %v2387
        %v2390 = vld [vmem:[%s16] sm:$0xff]
        %v2391 = vld [vmem:[%s16 + $0x8] sm:$0xff]
        %v2392 = vld [vmem:[%s16 + $0x10] sm:$0xff]
        %v2393 = vld [vmem:[%s16 + $0x18] sm:$0xff]
        %v2394 = vld [vmem:[#allocation2] sm:$0x1]
        %v2396 = vlaneseq
        %v2397 = vshrl.u32 %v2396, 7
        %v2398 = vsub.s32 0, %v2397
        %v2399 = vrot.slane %v2394, %v2398
        %v2402 = vsel %vm660, %v2389, 0
        %2404 = vmatprep.subr.mxu0 0.0
        %2405 = vmatpush1.msra.mxu0 0.0
        %2406 = vmatprep.subr.mxu0 0.0
        %2407 = vmatpush1.msra.mxu0 0.0
        %2408 = vmatprep.subr.mxu0 0.0
        %2409 = vmatpush1.msra.mxu0 0.0
        %2410 = vmatprep.subr.mxu0 0.0
        %2411 = vmatpush1.msra.mxu0 0.0
        %2412 = vmatprep.subr.mxu0 0.0
        %2413 = vmatpush1.msra.mxu0 0.0
        %2414 = vmatprep.subr.mxu0 0.0
        %2415 = vmatpush1.msra.mxu0 0.0
        %2416 = vmatprep.subr.mxu0 0.0
        %2417 = vmatpush1.msra.mxu0 0.0
        %2418 = vmatprep.subr.mxu0 0.0
        %2419 = vmatpush1.msra.mxu0 0.0
        %2420 = vmatprep.subr.mxu0 0.0
        %2421 = vmatpush1.msra.mxu0 0.0
        %2422 = vmatprep.subr.mxu0 0.0
        %2423 = vmatpush1.msra.mxu0 0.0
        %2424 = vmatprep.subr.mxu0 0.0
        %2425 = vmatpush1.msra.mxu0 0.0
        %2426 = vmatprep.subr.mxu0 0.0
        %2427 = vmatpush1.msra.mxu0 0.0
        %2428 = vmatprep.subr.mxu0 0.0
        %2429 = vmatpush1.msra.mxu0 %v2393
        %2430 = vmatprep.subr.mxu0 0.0
        %2431 = vmatpush1.msra.mxu0 %v2392
        %2432 = vmatprep.subr.mxu0 0.0
        %2433 = vmatpush1.msra.mxu0 %v2391
        %2434 = vmatprep.subr.mxu0 0.0
        %2435 = vmatpush1.msra.mxu0 %v2390
        %2436 = vmatprep.subr.mxu0 0.0
        %2437 = vmatpush2.msra.mxu0 0.0
        %2438 = vmatprep.subr.mxu0 0.0
        %2439 = vmatpush2.msra.mxu0 0.0
        %2440 = vmatprep.subr.mxu0 0.0
        %2441 = vmatpush2.msra.mxu0 0.0
        %2442 = vmatprep.subr.mxu0 0.0
        %2443 = vmatpush2.msra.mxu0 0.0
        %2444 = vmatprep.subr.mxu0 0.0
        %2445 = vmatpush2.msra.mxu0 0.0
        %2446 = vmatprep.subr.mxu0 0.0
        %2447 = vmatpush2.msra.mxu0 0.0
        %2448 = vmatprep.subr.mxu0 0.0
        %2449 = vmatpush2.msra.mxu0 0.0
        %2450 = vmatprep.subr.mxu0 0.0
        %2451 = vmatpush2.msra.mxu0 0.0
        %2452 = vmatprep.subr.mxu0 0.0
        %2453 = vmatpush2.msra.mxu0 0.0
        %2454 = vmatprep.subr.mxu0 0.0
        %2455 = vmatpush2.msra.mxu0 0.0
        %2456 = vmatprep.subr.mxu0 0.0
        %2457 = vmatpush2.msra.mxu0 0.0
        %2458 = vmatprep.subr.mxu0 0.0
        %2459 = vmatpush2.msra.mxu0 0.0
        %2460 = vmatprep.subr.mxu0 0.0
        %2461 = vmatpush2.msra.mxu0 0.0
        %2462 = vmatprep.subr.mxu0 0.0
        %2463 = vmatpush2.msra.mxu0 0.0
        %2464 = vmatprep.subr.mxu0 0.0
        %2465 = vmatpush2.msra.mxu0 0.0
        %2466 = vmatprep.subr.mxu0 0.0
        %2467 = vmatpush2.msra.mxu0 0.0
        %2468 = vmatprep.mubr.f32.mxu0 0.0
        %2469 = vmatmul.mubr.f32.gmra.mxu0 %v2402
        %v2470 = vpop.f32.mrf.mxu0
        %v2471 = vadd.f32 %v2399, %v2470
        %v2472 = vpop.f32.mrf.mxu0
        %2473 = vdwg.mxu0
        %vm2474 = vcmask 4096
        %v2475 = vsel %vm2474, %v2471, -inf
        %v2476 = vrot.slane %v2475, 4
        %v2477 = vmax.f32 %v2475, %v2476
        %v2478 = vrot.slane %v2477, 2
        %v2479 = vmax.f32 %v2477, %v2478
        %v2480 = vrot.slane %v2479, 1
        %v2481 = vmax.f32 %v2479, %v2480
        %v2482 = vsub.f32 %v2471, %v2481
        %v2483 = vmul.f32 %v2482, 1.442695
        %v2484 = vpow.pop %v2483
        %v2485 = vsel %vm2474, %v2484, 0.0
        %v2486 = vrot.slane %v2485, 4
        %v2487 = vadd.f32 %v2485, %v2486
        %v2488 = vrot.slane %v2487, 2
        %v2489 = vadd.f32 %v2487, %v2488
        %v2490 = vrot.slane %v2489, 1
        %v2491 = vadd.f32 %v2489, %v2490
        %v2492 = vrcp.pop %v2491
        %v2493 = vmul.f32 %v2484, %v2492
        %2495 = vset.pattern.permute.xlu0 0
        %2496 = vperm.xlu0 %2495, %v2493
        %v2497 = vpop.permute.xlu0 %2496
        %v2499 = vmul.f32 %v2497, %v2389
        %v2500 = vsel %vm930, %v2499, 0.0
        %v2501 = vrot.slane %v2500, 4
        %v2502 = vadd.f32 %v2500, %v2501
        %v2503 = vrot.slane %v2502, 2
        %v2504 = vadd.f32 %v2502, %v2503
        %v2505 = vrot.slane %v2504, 1
        %v2506 = vadd.f32 %v2504, %v2505
        %v2507 = vld [vmem:[%s18] sm:$0xf]
        %v2508 = vld [vmem:[%s18 + $0x4] sm:$0xf]
        %v2509 = vld [vmem:[%s18 + $0x8] sm:$0xf]
        %v2510 = vld [vmem:[%s18 + $0xc] sm:$0xf]
        %v2511 = vpack.c.bf16 %v2506, %v2506
        %v2512 = vld [vmem:[%s19] sm:$0x1]
        %v2517 = vunpack.c.l.b16 %v2507
        %v2518 = vunpack.c.l.b16 %v2508
        %v2519 = vunpack.c.l.b16 %v2509
        %v2520 = vunpack.c.l.b16 %v2510
        %v2521 = vpack.c.b16 %v2518, %v2517
        %v2522 = vpack.c.b16 %v2520, %v2519
        %v2526 = vsel %vm660, %v2511, 0
        %2528 = vmatprep.subr.bf16.mxu0 0
        %2529 = vmatpush1.bf16.msra.mxu0 0
        %2530 = vmatprep.subr.bf16.mxu0 0
        %2531 = vmatpush1.bf16.msra.mxu0 0
        %2532 = vmatprep.subr.bf16.mxu0 0
        %2533 = vmatpush1.bf16.msra.mxu0 0
        %2534 = vmatprep.subr.bf16.mxu0 0
        %2535 = vmatpush1.bf16.msra.mxu0 0
        %2536 = vmatprep.subr.bf16.mxu0 0
        %2537 = vmatpush1.bf16.msra.mxu0 0
        %2538 = vmatprep.subr.bf16.mxu0 0
        %2539 = vmatpush1.bf16.msra.mxu0 0
        %2540 = vmatprep.subr.bf16.mxu0 0
        %2541 = vmatpush1.bf16.msra.mxu0 %v2522
        %2542 = vmatprep.subr.bf16.mxu0 0
        %2543 = vmatpush1.bf16.msra.mxu0 %v2521
        %2544 = vmatprep.subr.bf16.mxu0 0
        %2545 = vmatpush2.bf16.msra.mxu0 0
        %2546 = vmatprep.subr.bf16.mxu0 0
        %2547 = vmatpush2.bf16.msra.mxu0 0
        %2548 = vmatprep.subr.bf16.mxu0 0
        %2549 = vmatpush2.bf16.msra.mxu0 0
        %2550 = vmatprep.subr.bf16.mxu0 0
        %2551 = vmatpush2.bf16.msra.mxu0 0
        %2552 = vmatprep.subr.bf16.mxu0 0
        %2553 = vmatpush2.bf16.msra.mxu0 0
        %2554 = vmatprep.subr.bf16.mxu0 0
        %2555 = vmatpush2.bf16.msra.mxu0 0
        %2556 = vmatprep.subr.bf16.mxu0 0
        %2557 = vmatpush2.bf16.msra.mxu0 0
        %2558 = vmatprep.subr.bf16.mxu0 0
        %2559 = vmatpush2.bf16.msra.mxu0 0
        %2560 = vmatprep.mubr.bf16.mxu0 0
        %2561 = vmatmul.mubr.bf16.gmra.mxu0 %v2526
        %v2562 = vpop.f32.mrf.mxu0
        %v2563 = vadd.f32 %v2512, %v2562
        %v2564 = vpop.f32.mrf.mxu0
        %v2565 = vpop.f32.mrf.mxu0
        %v2566 = vpop.f32.mrf.mxu0
        %2567 = vdwg.mxu0
        %2568 = vst [vmem:[%s623] sm:$0x1] %v2563
        %s2569 = sand.u32 %s469, 1
        %s2570 = scalar_lea.sflag [#allocation4], %s2569
        %s2571 = sand.u32 %s469, 1
        %s2572 = scalar_lea.vmem [#allocation3], %s2571
        // Predicated region
        $region101: #{text_cct_forward.1} parent=99 // pred_check
          %p2573 = pneg %p479
        $region102: #{text_cct_forward.1} parent=99 // pred_check_branch
          %2575 = sbr.rel (%p2573) target = $region104
        $region103: #{text_cct_forward.1} parent=99 // pred_region
          %s2577 = ssub.s32 16, 16
          %2578 = vsyncadd %s2570, %s2577
          %s2579 = smul.addr %s36, 16
          %s2580 = scalar_lea.hbm %s20, %s2579
          %s2582 = sshll.u32 %s2572, 4
          %s2583 = int_to_ptr.vmem [resolvable:$true] %s2582
          %2585 = dma.vmem_to_hbm [thread:$0]  %s2583, 16, %s2580, %s2570
        $region104: #{text_cct_forward.1} parent=99 // pred_fallthru
          _
      $region100: #{text_cct_forward.1} parent=5 // pred_fallthru
        _
      %p2586 = scmp.le.s32.totalorder 2, %s31
      // Predicated region
      $region105: #{text_cct_forward.1} parent=5 // pred_check
        %p2587 = pneg %p2586
      $region106: #{text_cct_forward.1} parent=5 // pred_check_branch
        %2589 = sbr.rel (%p2587) target = $region108
      $region107: #{text_cct_forward.1} parent=5 // pred_region
        %s2590 = ssub.s32 %s31, 2
        // Predicated region
        $region109: #{text_cct_forward.1} parent=107 // pred_check
          %p2591 = pneg %p485
        $region110: #{text_cct_forward.1} parent=107 // pred_check_branch
          %2593 = sbr.rel (%p2591) target = $region112
        $region111: #{text_cct_forward.1} parent=107 // pred_region
          %s2594 = sand.u32 %s470, 1
          %s2595 = scalar_lea.sflag [#allocation4], %s2594
          %s2596 = sand.u32 %s470, 1
          %s2597 = scalar_lea.vmem [#allocation3], %s2596
          %2598 = dma.done %s2595, 16
        $region112: #{text_cct_forward.1} parent=107 // pred_fallthru
          _
      $region108: #{text_cct_forward.1} parent=5 // pred_fallthru
        _
    $region6: #{text_cct_forward.1} parent=1 // loop_footer
      %s35 = sadd.s32 1, %s31
    $region7: #{text_cct_forward.1} parent=1 // loop_footer_branch
      %30 = sbr.rel target = $region3
    $region8: #{text_cct_forward.1} parent=1 // loop_exit
      _
    %2599 = vsyncpa [#allocation4], 1
    %s2600 = scalar_lea.sflag [#allocation4], 1
    %2601 = vsyncpa %s2600, 1

</llo_original>
